<compile_context>
chip_gen: v5e
topology: v5e:2x2
jax: 0.10.0
libtpu: 0.0.40
codegen_flags: <defaults>
</compile_context>

<pallas_src>
import functools
import math

import numpy as np
import jax
import jax.numpy as jnp
from jax.experimental import pallas as pl
from jax.experimental.pallas import tpu as pltpu


# ------------------------------ tiling helpers -------------------------------

def _pick_tile(dim, target, granule):
    """Largest tile <= target that divides `dim` and is a multiple of `granule`.
    Falls back to the full dimension (always a legal block size)."""
    if dim <= target:
        return dim
    t = (target // granule) * granule
    while t >= granule:
        if dim % t == 0:
            return t
        t -= granule
    return dim


# ------------------------------ Pallas kernels --------------------------------

def _linear_kernel(x_ref, w_ref, b_ref, o_ref, acc_ref, *, relu):
    """Tiled matmul with K-reduction grid axis, fused bias (+ optional ReLU)."""
    @pl.when(pl.program_id(2) == 0)
    def _():
        acc_ref[...] = jnp.zeros_like(acc_ref)

    acc_ref[...] += jnp.dot(
        x_ref[...].astype(jnp.bfloat16), w_ref[...],
        preferred_element_type=jnp.float32)

    @pl.when(pl.program_id(2) == pl.num_programs(2) - 1)
    def _():
        y = acc_ref[...] + b_ref[...]
        if relu:
            y = jnp.maximum(y, 0.0)
        o_ref[...] = y.astype(o_ref.dtype)


def _ln_kernel(x_ref, g_ref, b_ref, o_ref, *, eps):
    x = x_ref[...]
    mu = jnp.mean(x, axis=-1, keepdims=True)
    var = jnp.mean((x - mu) ** 2, axis=-1, keepdims=True)
    o_ref[...] = (x - mu) * jax.lax.rsqrt(var + eps) * g_ref[...] + b_ref[...]


def _add_ln_kernel(x_ref, r_ref, g_ref, b_ref, o_ref, *, eps):
    """Residual add fused with LayerNorm."""
    x = x_ref[...] + r_ref[...]
    mu = jnp.mean(x, axis=-1, keepdims=True)
    var = jnp.mean((x - mu) ** 2, axis=-1, keepdims=True)
    o_ref[...] = (x - mu) * jax.lax.rsqrt(var + eps) * g_ref[...] + b_ref[...]


def _attn_core(q, k, v, pad_keep, *, n_head, scale, causal):
    """q: (Lq, D) f32, k/v: (Lk, D) f32, pad_keep: (1, Lk) bool -> (Lq, D) f32.

    All heads are processed inside one kernel invocation; per-head slices stay
    in VMEM/vregs and the output is written as one lane-dense (Lq, D) block.
    """
    Lq, D = q.shape
    Lk = k.shape[0]
    dk = D // n_head

    keep = pad_keep                                   # (1, Lk) bool
    if causal:
        row = jax.lax.broadcasted_iota(jnp.int32, (Lq, Lk), 0)
        col = jax.lax.broadcasted_iota(jnp.int32, (Lq, Lk), 1)
        keep = keep & (col <= row)                    # (Lq, Lk)

    qb = q.astype(jnp.bfloat16)
    kb = k.astype(jnp.bfloat16)
    vb = v.astype(jnp.bfloat16)

    outs = []
    for h in range(n_head):                           # static, unrolled
        lo, hi = h * dk, (h + 1) * dk
        s = jnp.dot(qb[:, lo:hi], kb[:, lo:hi].T,
                    preferred_element_type=jnp.float32) * scale
        s = jnp.where(keep, s, -1e9)                  # masked_fill(mask==0,-1e9)
        s = s - jnp.max(s, axis=-1, keepdims=True)
        p = jnp.exp(s)
        p = p * pl.reciprocal(jnp.sum(p, axis=-1, keepdims=True), approx=True)
        outs.append(jnp.dot(p.astype(jnp.bfloat16), vb[:, lo:hi],
                            preferred_element_type=jnp.float32))
    return jnp.concatenate(outs, axis=-1)             # lane-dense (Lq, D)


def _self_attn_kernel(qkv_ref, m_ref, o_ref, *, n_head, scale, causal):
    D = o_ref.shape[-1]
    qkv = qkv_ref[0]                                  # (L, 3D)
    q = qkv[:, 0:D]
    k = qkv[:, D:2 * D]
    v = qkv[:, 2 * D:3 * D]
    pad_keep = m_ref[0] > 0                           # (1, L)
    o_ref[0] = _attn_core(q, k, v, pad_keep, n_head=n_head, scale=scale,
                          causal=causal).astype(o_ref.dtype)


def _cross_attn_kernel(q_ref, kv_ref, m_ref, o_ref, *, n_head, scale):
    D = o_ref.shape[-1]
    q = q_ref[0]                                      # (Lq, D)
    kv = kv_ref[0]                                    # (Lk, 2D)
    k = kv[:, 0:D]
    v = kv[:, D:2 * D]
    pad_keep = m_ref[0] > 0                           # (1, Lk)
    o_ref[0] = _attn_core(q, k, v, pad_keep, n_head=n_head, scale=scale,
                          causal=False).astype(o_ref.dtype)


# ----------------------------- kernel wrappers --------------------------------

def pallas_linear(x, w, b=None, relu=False):
    """x: (M, K) f32, w: (K, N) (cast to bf16), b: (N,) or None -> (M, N) f32."""
    M, K = x.shape
    N = w.shape[1]
    if b is None:
        b = jnp.zeros((N,), jnp.float32)
    b2 = b.reshape(1, N).astype(jnp.float32)
    w = w.astype(jnp.bfloat16)

    tm = _pick_tile(M, 256, 8)      # sublane granularity
    tn = _pick_tile(N, 256, 128)    # lane granularity (or full N)
    tk = _pick_tile(K, 512, 128)    # reduction tiles must divide K exactly
    grid = (M // tm, N // tn, K // tk)

    kern = functools.partial(_linear_kernel, relu=relu)
    return pl.pallas_call(
        kern,
        out_shape=jax.ShapeDtypeStruct((M, N), jnp.float32),
        grid=grid,
        in_specs=[
            pl.BlockSpec((tm, tk), lambda i, j, k: (i, k)),
            pl.BlockSpec((tk, tn), lambda i, j, k: (k, j)),
            pl.BlockSpec((1, tn), lambda i, j, k: (0, j)),
        ],
        out_specs=pl.BlockSpec((tm, tn), lambda i, j, k: (i, j)),
        scratch_shapes=[pltpu.VMEM((tm, tn), jnp.float32)],
        compiler_params=pltpu.CompilerParams(
            dimension_semantics=("parallel", "parallel", "arbitrary")),
    )(x.astype(jnp.float32), w, b2)


def pallas_layernorm(x, gamma, beta, residual=None, eps=1e-6):
    """Row-tiled LayerNorm, optionally fused with a residual add.
    x (and residual): (M, D) f32; gamma/beta: (D,)."""
    M, D = x.shape
    g2 = gamma.reshape(1, D).astype(jnp.float32)
    b2 = beta.reshape(1, D).astype(jnp.float32)

    tr = _pick_tile(M, 256, 8)
    grid = (M // tr,)
    row_spec = pl.BlockSpec((tr, D), lambda i: (i, 0))
    vec_spec = pl.BlockSpec((1, D), lambda i: (0, 0))

    if residual is None:
        kern = functools.partial(_ln_kernel, eps=eps)
        in_specs = [row_spec, vec_spec, vec_spec]
        args = (x.astype(jnp.float32), g2, b2)
    else:
        kern = functools.partial(_add_ln_kernel, eps=eps)
        in_specs = [row_spec, row_spec, vec_spec, vec_spec]
        args = (x.astype(jnp.float32), residual.astype(jnp.float32), g2, b2)

    return pl.pallas_call(
        kern,
        out_shape=jax.ShapeDtypeStruct((M, D), jnp.float32),
        grid=grid,
        in_specs=in_specs,
        out_specs=row_spec,
        compiler_params=pltpu.CompilerParams(dimension_semantics=("parallel",)),
    )(*args)


def pallas_self_attention(qkv, mask, n_head, causal):
    """qkv: (B, L, 3D) f32 (packed Q|K|V), mask: (B, 1, L) int32 pad-keep mask."""
    B, L, D3 = qkv.shape
    D = D3 // 3
    scale = 1.0 / math.sqrt(D // n_head)
    kern = functools.partial(_self_attn_kernel, n_head=n_head, scale=scale,
                             causal=causal)
    return pl.pallas_call(
        kern,
        out_shape=jax.ShapeDtypeStruct((B, L, D), jnp.float32),
        grid=(B,),
        in_specs=[
            pl.BlockSpec((1, L, D3), lambda b: (b, 0, 0)),
            pl.BlockSpec((1, 1, L), lambda b: (b, 0, 0)),
        ],
        out_specs=pl.BlockSpec((1, L, D), lambda b: (b, 0, 0)),
        compiler_params=pltpu.CompilerParams(dimension_semantics=("parallel",)),
    )(qkv, mask)


def pallas_cross_attention(q, kv, mask, n_head):
    """q: (B, Lq, D), kv: (B, Lk, 2D) (packed K|V), mask: (B, 1, Lk) int32."""
    B, Lq, D = q.shape
    Lk = kv.shape[1]
    scale = 1.0 / math.sqrt(D // n_head)
    kern = functools.partial(_cross_attn_kernel, n_head=n_head, scale=scale)
    return pl.pallas_call(
        kern,
        out_shape=jax.ShapeDtypeStruct((B, Lq, D), jnp.float32),
        grid=(B,),
        in_specs=[
            pl.BlockSpec((1, Lq, D), lambda b: (b, 0, 0)),
            pl.BlockSpec((1, Lk, 2 * D), lambda b: (b, 0, 0)),
            pl.BlockSpec((1, 1, Lk), lambda b: (b, 0, 0)),
        ],
        out_specs=pl.BlockSpec((1, Lq, D), lambda b: (b, 0, 0)),
        compiler_params=pltpu.CompilerParams(dimension_semantics=("parallel",)),
    )(q, kv, mask)


# ----------------------------- model pieces -----------------------------------

def positional_encoding_table(model_dim, n_position):
    pe = np.array(
        [[pos / 10000.0 ** (i // 2 * 2.0 / model_dim) for i in range(model_dim)]
         for pos in range(n_position)],
        dtype=np.float32,
    )
    pe[:, 0::2] = np.sin(pe[:, 0::2])
    pe[:, 1::2] = np.cos(pe[:, 1::2])
    return jnp.asarray(pe)


def self_attn_block(p, x, pad_mask, n_head, causal):
    """Post-LN self-attention sublayer with fused QKV projection."""
    B, L, D = x.shape
    qkv = pallas_linear(x.reshape(B * L, D), p["w_qkv"]).reshape(B, L, 3 * D)
    o = pallas_self_attention(qkv, pad_mask, n_head, causal)
    o = pallas_linear(o.reshape(B * L, D), p["wo"])
    out = pallas_layernorm(o, p["ln_g"], p["ln_b"], residual=x.reshape(B * L, D))
    return out.reshape(B, L, D)


def cross_attn_block(p, x, enc_out, pad_mask, n_head):
    """Post-LN cross-attention sublayer with fused KV projection."""
    B, Lq, D = x.shape
    Lk = enc_out.shape[1]
    q = pallas_linear(x.reshape(B * Lq, D), p["wq"]).reshape(B, Lq, D)
    kv = pallas_linear(enc_out.reshape(B * Lk, D), p["w_kv"]).reshape(B, Lk, 2 * D)
    o = pallas_cross_attention(q, kv, pad_mask, n_head)
    o = pallas_linear(o.reshape(B * Lq, D), p["wo"])
    out = pallas_layernorm(o, p["ln_g"], p["ln_b"], residual=x.reshape(B * Lq, D))
    return out.reshape(B, Lq, D)


def ffn_block(p, x):
    B, L, D = x.shape
    h = pallas_linear(x.reshape(B * L, D), p["w1"], p["b1"], relu=True)
    h = pallas_linear(h, p["w2"], p["b2"])
    out = pallas_layernorm(h, p["ln_g"], p["ln_b"], residual=x.reshape(B * L, D))
    return out.reshape(B, L, D)


def encoder_forward(p, src_seq, src_mask, n_head):
    B, Ls = src_seq.shape
    D = p["emb"].shape[1]
    x = p["emb"][src_seq] + p["pe"][None, :Ls, :]      # gather + PE (glue)
    # dropout -> identity (eval)
    x = pallas_layernorm(x.reshape(B * Ls, D), p["ln_g"], p["ln_b"]).reshape(B, Ls, D)
    for layer in p["layers"]:
        x = self_attn_block(layer["self_attn"], x, src_mask, n_head, causal=False)
        x = ffn_block(layer["ffn"], x)
    return x


def decoder_forward(p, trg_seq, enc_out, trg_pad_mask, enc_dec_mask, n_head):
    B, Lt = trg_seq.shape
    D = p["emb"].shape[1]
    x = p["emb"][trg_seq] + p["pe"][None, :Lt, :]
    x = pallas_layernorm(x.reshape(B * Lt, D), p["ln_g"], p["ln_b"]).reshape(B, Lt, D)
    for layer in p["layers"]:
        # causal triangle is generated inside the kernel; only the key pad mask
        # is DMA'd (matches sequence_mask & pad_mask of the reference).
        x = self_attn_block(layer["self_attn"], x, trg_pad_mask, n_head, causal=True)
        x = cross_attn_block(layer["cross_attn"], x, enc_out, enc_dec_mask, n_head)
        x = ffn_block(layer["ffn"], x)
    return x


def transformer_forward(params, src_seq, trg_seq, *, n_head, pad_idx=0):
    B, Ls = src_seq.shape
    _, Lt = trg_seq.shape

    # get_pad_mask: (B, 1, L), int32 keep-mask (1 keep / 0 drop)
    src_mask = (src_seq != pad_idx).astype(jnp.int32)[:, None, :]
    trg_pad_mask = (trg_seq != pad_idx).astype(jnp.int32)[:, None, :]

    enc_out = encoder_forward(params["encoder"], src_seq, src_mask, n_head)
    dec_out = decoder_forward(params["decoder"], trg_seq, enc_out,
                              trg_pad_mask, src_mask, n_head)

    D = dec_out.shape[-1]
    logits = pallas_linear(dec_out.reshape(B * Lt, D), params["proj_w"])
    return logits.reshape(B, Lt, -1)


# ----------------------------- parameter init ---------------------------------

def _normal_bf16(key, shape, scale=0.02):
    return (scale * jax.random.normal(key, shape, dtype=jnp.float32)).astype(jnp.bfloat16)


def init_self_attn_params(key, model_dim):
    k = jax.random.split(key, 2)
    return {
        "w_qkv": _normal_bf16(k[0], (model_dim, 3 * model_dim)),
        "wo": _normal_bf16(k[1], (model_dim, model_dim)),
        "ln_g": jnp.ones((model_dim,), jnp.float32),
        "ln_b": jnp.zeros((model_dim,), jnp.float32),
    }


def init_cross_attn_params(key, model_dim):
    k = jax.random.split(key, 3)
    return {
        "wq": _normal_bf16(k[0], (model_dim, model_dim)),
        "w_kv": _normal_bf16(k[1], (model_dim, 2 * model_dim)),
        "wo": _normal_bf16(k[2], (model_dim, model_dim)),
        "ln_g": jnp.ones((model_dim,), jnp.float32),
        "ln_b": jnp.zeros((model_dim,), jnp.float32),
    }


def init_ffn_params(key, model_dim, hidden):
    k = jax.random.split(key, 2)
    return {
        "w1": _normal_bf16(k[0], (model_dim, hidden)),
        "b1": jnp.zeros((hidden,), jnp.float32),
        "w2": _normal_bf16(k[1], (hidden, model_dim)),
        "b2": jnp.zeros((model_dim,), jnp.float32),
        "ln_g": jnp.ones((model_dim,), jnp.float32),
        "ln_b": jnp.zeros((model_dim,), jnp.float32),
    }


def init_params(key, *, src_len, trg_len, n_src_vocab, n_trg_vocab,
                model_dim, n_layers, n_head, hidden_size):
    del n_head  # not stored in params (kept static outside jit)
    n_keys = 5 * n_layers + 3
    ki = iter(jax.random.split(key, n_keys))

    enc_layers = []
    for _ in range(n_layers):
        enc_layers.append({
            "self_attn": init_self_attn_params(next(ki), model_dim),
            "ffn": init_ffn_params(next(ki), model_dim, hidden_size),
        })
    dec_layers = []
    for _ in range(n_layers):
        dec_layers.append({
            "self_attn": init_self_attn_params(next(ki), model_dim),
            "cross_attn": init_cross_attn_params(next(ki), model_dim),
            "ffn": init_ffn_params(next(ki), model_dim, hidden_size),
        })

    encoder = {
        "emb": 1.0 * jax.random.normal(next(ki), (n_src_vocab, model_dim), dtype=jnp.float32),
        "pe": positional_encoding_table(model_dim, src_len),
        "ln_g": jnp.ones((model_dim,), jnp.float32),
        "ln_b": jnp.zeros((model_dim,), jnp.float32),
        "layers": enc_layers,
    }
    decoder = {
        "emb": 1.0 * jax.random.normal(next(ki), (n_trg_vocab, model_dim), dtype=jnp.float32),
        "pe": positional_encoding_table(model_dim, trg_len),
        "ln_g": jnp.ones((model_dim,), jnp.float32),
        "ln_b": jnp.zeros((model_dim,), jnp.float32),
        "layers": dec_layers,
    }
    return {
        "encoder": encoder,
        "decoder": decoder,
        "proj_w": _normal_bf16(next(ki), (model_dim, n_trg_vocab)),
    }


# --------------------------------- main ----------------------------------------

if __name__ == "__main__":
    # small but representative shapes
    B = 2
    SRC_LEN = 8
    TRG_LEN = 8
    N_SRC_VOCAB = 32
    N_TRG_VOCAB = 32
    MODEL_DIM = 32
    N_LAYERS = 2
    N_HEAD = 4
    HIDDEN = 64
    PAD_IDX = 0

    key = jax.random.PRNGKey(0)
    k_param, k_src, k_trg = jax.random.split(key, 3)

    params = init_params(
        k_param,
        src_len=SRC_LEN, trg_len=TRG_LEN,
        n_src_vocab=N_SRC_VOCAB, n_trg_vocab=N_TRG_VOCAB,
        model_dim=MODEL_DIM, n_layers=N_LAYERS, n_head=N_HEAD,
        hidden_size=HIDDEN,
    )

    src_seq = jax.random.randint(k_src, (B, SRC_LEN), 0, N_SRC_VOCAB, dtype=jnp.int32)
    trg_seq = jax.random.randint(k_trg, (B, TRG_LEN), 0, N_TRG_VOCAB, dtype=jnp.int32)

    fwd = jax.jit(lambda p, s, t: transformer_forward(p, s, t,
                                                      n_head=N_HEAD,
                                                      pad_idx=PAD_IDX))
    out = fwd(params, src_seq, trg_seq)
    out = jax.block_until_ready(out)

    assert out.shape == (B, TRG_LEN, N_TRG_VOCAB), out.shape
    assert bool(jnp.all(jnp.isfinite(out)))
    print("KERNEL_OK")
</pallas_src>

<mosaic_0001>
module attributes {stable_mosaic.version = 11 : i64} {
  func.func @_linear_kernel(%arg0: i32, %arg1: i32, %arg2: i32, %arg3: memref<16x32xf32, #tpu.memory_space<vmem>>, %arg4: memref<32x96xbf16, #tpu.memory_space<vmem>>, %arg5: memref<1x96xf32, #tpu.memory_space<vmem>>, %arg6: memref<16x96xf32, #tpu.memory_space<vmem>>, %arg7: memref<16x96xf32, #tpu.memory_space<vmem>>) attributes {dimension_semantics = [#tpu.dimension_semantics<parallel>, #tpu.dimension_semantics<parallel>, #tpu.dimension_semantics<arbitrary>], iteration_bounds = array<i64: 1, 1, 1>, scalar_prefetch = 0 : i64, scratch_operands = 1 : i64, tpu.core_type = #tpu.core_type<tc>, window_params = [{transform_indices = @transform_0, window_bounds = array<i64: 16, 32>}, {transform_indices = @transform_1, window_bounds = array<i64: 32, 96>}, {transform_indices = @transform_2, window_bounds = array<i64: 1, 96>}, {transform_indices = @transform_3, window_bounds = array<i64: 16, 96>}]} {
    %c0_i32 = arith.constant 0 : i32
    %0 = arith.cmpi eq, %arg2, %c0_i32 : i32
    %1 = arith.extui %0 : i1 to i32
    %c0_i32_0 = arith.constant 0 : i32
    %2 = arith.cmpi ne, %1, %c0_i32_0 : i32
    scf.if %2 {
      %cst_10 = arith.constant 0.000000e+00 : f32
      %13 = vector.broadcast %cst_10 : f32 to vector<16x96xf32>
      %c0_11 = arith.constant 0 : index
      %c0_12 = arith.constant 0 : index
      %14 = vector.load %arg7[%c0_11, %c0_12] : memref<16x96xf32, #tpu.memory_space<vmem>>, vector<16x96xf32>
      tpu.vector_store %arg7[%c0_11, %c0_12], %13 {strides = array<i32>} : memref<16x96xf32, #tpu.memory_space<vmem>>, vector<16x96xf32>,
    } else {
    }
    %c0 = arith.constant 0 : index
    %c0_1 = arith.constant 0 : index
    %3 = vector.load %arg7[%c0, %c0_1] : memref<16x96xf32, #tpu.memory_space<vmem>>, vector<16x96xf32>
    %c0_2 = arith.constant 0 : index
    %c0_3 = arith.constant 0 : index
    %4 = vector.load %arg3[%c0_2, %c0_3] : memref<16x32xf32, #tpu.memory_space<vmem>>, vector<16x32xf32>
    %5 = arith.truncf %4 : vector<16x32xf32> to vector<16x32xbf16>
    %c0_4 = arith.constant 0 : index
    %c0_5 = arith.constant 0 : index
    %6 = vector.load %arg4[%c0_4, %c0_5] : memref<32x96xbf16, #tpu.memory_space<vmem>>, vector<32x96xbf16>
    %cst = arith.constant dense<0.000000e+00> : vector<16x96xf32>
    %7 = tpu.matmul %5, %6, %cst {dimension_numbers = #tpu.dot_dimension_numbers<[1], [0], [0], [1], [0, 0, 1, 1], [], []>} : vector<16x32xbf16>, vector<32x96xbf16>, vector<16x96xf32> -> vector<16x96xf32>
    %8 = arith.addf %3, %7 : vector<16x96xf32>
    %c0_6 = arith.constant 0 : index
    %c0_7 = arith.constant 0 : index
    %9 = vector.load %arg7[%c0_6, %c0_7] : memref<16x96xf32, #tpu.memory_space<vmem>>, vector<16x96xf32>
    tpu.vector_store %arg7[%c0_6, %c0_7], %8 {strides = array<i32>} : memref<16x96xf32, #tpu.memory_space<vmem>>, vector<16x96xf32>,
    %c0_i32_8 = arith.constant 0 : i32
    %10 = arith.cmpi eq, %arg2, %c0_i32_8 : i32
    %11 = arith.extui %10 : i1 to i32
    %c0_i32_9 = arith.constant 0 : i32
    %12 = arith.cmpi ne, %11, %c0_i32_9 : i32
    scf.if %12 {
      %c0_10 = arith.constant 0 : index
      %c0_11 = arith.constant 0 : index
      %13 = vector.load %arg7[%c0_10, %c0_11] : memref<16x96xf32, #tpu.memory_space<vmem>>, vector<16x96xf32>
      %c0_12 = arith.constant 0 : index
      %c0_13 = arith.constant 0 : index
      %14 = vector.load %arg5[%c0_12, %c0_13] : memref<1x96xf32, #tpu.memory_space<vmem>>, vector<1x96xf32>
      %15 = vector.broadcast %14 : vector<1x96xf32> to vector<16x96xf32>
      %16 = arith.addf %13, %15 : vector<16x96xf32>
      %c0_14 = arith.constant 0 : index
      %c0_15 = arith.constant 0 : index
      %17 = vector.load %arg6[%c0_14, %c0_15] : memref<16x96xf32, #tpu.memory_space<vmem>>, vector<16x96xf32>
      tpu.vector_store %arg6[%c0_14, %c0_15], %16 {strides = array<i32>} : memref<16x96xf32, #tpu.memory_space<vmem>>, vector<16x96xf32>,
    } else {
    }
    return
  }
  func.func @transform_0(%arg0: i32, %arg1: i32, %arg2: i32) -> (i32, i32) {
    %c0_i32 = arith.constant 0 : i32
    return %arg0, %arg2 : i32, i32
  }
  func.func @transform_1(%arg0: i32, %arg1: i32, %arg2: i32) -> (i32, i32) {
    %c0_i32 = arith.constant 0 : i32
    return %arg2, %arg1 : i32, i32
  }
  func.func @transform_2(%arg0: i32, %arg1: i32, %arg2: i32) -> (i32, i32) {
    %c0_i32 = arith.constant 0 : i32
    %c0_i32_0 = arith.constant 0 : i32
    return %c0_i32, %arg1 : i32, i32
  }
  func.func @transform_3(%arg0: i32, %arg1: i32, %arg2: i32) -> (i32, i32) {
    %c0_i32 = arith.constant 0 : i32
    return %arg0, %arg1 : i32, i32
  }
}

module attributes {stable_mosaic.version = 11 : i64} {
  func.func @_ln_kernel(%arg0: i32, %arg1: memref<16x32xf32, #tpu.memory_space<vmem>>, %arg2: memref<1x32xf32, #tpu.memory_space<vmem>>, %arg3: memref<1x32xf32, #tpu.memory_space<vmem>>, %arg4: memref<16x32xf32, #tpu.memory_space<vmem>>) attributes {dimension_semantics = [#tpu.dimension_semantics<parallel>], iteration_bounds = array<i64: 1>, scalar_prefetch = 0 : i64, scratch_operands = 0 : i64, tpu.core_type = #tpu.core_type<tc>, window_params = [{transform_indices = @transform_0, window_bounds = array<i64: 16, 32>}, {pipeline_mode = #tpu.pipeline_mode<synchronous>, transform_indices = @transform_1, window_bounds = array<i64: 1, 32>}, {pipeline_mode = #tpu.pipeline_mode<synchronous>, transform_indices = @transform_2, window_bounds = array<i64: 1, 32>}, {transform_indices = @transform_3, window_bounds = array<i64: 16, 32>}]} {
    %c0 = arith.constant 0 : index
    %c0_0 = arith.constant 0 : index
    %0 = vector.load %arg1[%c0, %c0_0] : memref<16x32xf32, #tpu.memory_space<vmem>>, vector<16x32xf32>
    %cst = arith.constant dense<0.000000e+00> : vector<16xf32>
    %1 = vector.multi_reduction <add>, %0, %cst [1] : vector<16x32xf32> to vector<16xf32>
    %2 = vector.shape_cast %1 : vector<16xf32> to vector<16x1xf32>
    %cst_1 = arith.constant 3.200000e+01 : f32
    %3 = vector.broadcast %cst_1 : f32 to vector<16x1xf32>
    %4 = arith.divf %2, %3 : vector<16x1xf32>
    %5 = vector.broadcast %4 : vector<16x1xf32> to vector<16x32xf32>
    %6 = arith.subf %0, %5 : vector<16x32xf32>
    %7 = arith.mulf %6, %6 : vector<16x32xf32>
    %cst_2 = arith.constant dense<0.000000e+00> : vector<16xf32>
    %8 = vector.multi_reduction <add>, %7, %cst_2 [1] : vector<16x32xf32> to vector<16xf32>
    %9 = vector.shape_cast %8 : vector<16xf32> to vector<16x1xf32>
    %cst_3 = arith.constant 3.200000e+01 : f32
    %10 = vector.broadcast %cst_3 : f32 to vector<16x1xf32>
    %11 = arith.divf %9, %10 : vector<16x1xf32>
    %12 = vector.broadcast %4 : vector<16x1xf32> to vector<16x32xf32>
    %13 = arith.subf %0, %12 : vector<16x32xf32>
    %cst_4 = arith.constant 9.99999997E-7 : f32
    %14 = vector.broadcast %cst_4 : f32 to vector<16x1xf32>
    %15 = arith.addf %11, %14 : vector<16x1xf32>
    %16 = math.rsqrt %15 : vector<16x1xf32>
    %17 = vector.broadcast %16 : vector<16x1xf32> to vector<16x32xf32>
    %18 = arith.mulf %13, %17 : vector<16x32xf32>
    %c0_5 = arith.constant 0 : index
    %c0_6 = arith.constant 0 : index
    %19 = vector.load %arg2[%c0_5, %c0_6] : memref<1x32xf32, #tpu.memory_space<vmem>>, vector<1x32xf32>
    %20 = vector.broadcast %19 : vector<1x32xf32> to vector<16x32xf32>
    %21 = arith.mulf %18, %20 : vector<16x32xf32>
    %c0_7 = arith.constant 0 : index
    %c0_8 = arith.constant 0 : index
    %22 = vector.load %arg3[%c0_7, %c0_8] : memref<1x32xf32, #tpu.memory_space<vmem>>, vector<1x32xf32>
    %23 = vector.broadcast %22 : vector<1x32xf32> to vector<16x32xf32>
    %24 = arith.addf %21, %23 : vector<16x32xf32>
    %c0_9 = arith.constant 0 : index
    %c0_10 = arith.constant 0 : index
    %25 = vector.load %arg4[%c0_9, %c0_10] : memref<16x32xf32, #tpu.memory_space<vmem>>, vector<16x32xf32>
    tpu.vector_store %arg4[%c0_9, %c0_10], %24 {strides = array<i32>} : memref<16x32xf32, #tpu.memory_space<vmem>>, vector<16x32xf32>,
    return
  }
  func.func @transform_0(%arg0: i32) -> (i32, i32) {
    %c0_i32 = arith.constant 0 : i32
    %c0_i32_0 = arith.constant 0 : i32
    return %arg0, %c0_i32 : i32, i32
  }
  func.func @transform_1(%arg0: i32) -> (i32, i32) {
    %c0_i32 = arith.constant 0 : i32
    %c0_i32_0 = arith.constant 0 : i32
    %c0_i32_1 = arith.constant 0 : i32
    return %c0_i32, %c0_i32_0 : i32, i32
  }
  func.func @transform_2(%arg0: i32) -> (i32, i32) {
    %c0_i32 = arith.constant 0 : i32
    %c0_i32_0 = arith.constant 0 : i32
    %c0_i32_1 = arith.constant 0 : i32
    return %c0_i32, %c0_i32_0 : i32, i32
  }
  func.func @transform_3(%arg0: i32) -> (i32, i32) {
    %c0_i32 = arith.constant 0 : i32
    %c0_i32_0 = arith.constant 0 : i32
    return %arg0, %c0_i32 : i32, i32
  }
}

module attributes {stable_mosaic.version = 11 : i64} {
  func.func @_self_attn_kernel(%arg0: i32, %arg1: memref<1x8x96xf32, #tpu.memory_space<vmem>>, %arg2: memref<1x1x8xi32, #tpu.memory_space<vmem>>, %arg3: memref<1x8x32xf32, #tpu.memory_space<vmem>>) attributes {dimension_semantics = [#tpu.dimension_semantics<parallel>], iteration_bounds = array<i64: 2>, scalar_prefetch = 0 : i64, scratch_operands = 0 : i64, tpu.core_type = #tpu.core_type<tc>, window_params = [{transform_indices = @transform_0, window_bounds = array<i64: 1, 8, 96>}, {transform_indices = @transform_1, window_bounds = array<i64: 1, 1, 8>}, {transform_indices = @transform_2, window_bounds = array<i64: 1, 8, 32>}]} {
    %c0 = arith.constant 0 : index
    %c0_0 = arith.constant 0 : index
    %c0_1 = arith.constant 0 : index
    %0 = vector.load %arg1[%c0, %c0_0, %c0_1] : memref<1x8x96xf32, #tpu.memory_space<vmem>>, vector<1x8x96xf32>
    %1 = vector.shape_cast %0 : vector<1x8x96xf32> to vector<8x96xf32>
    %2 = vector.extract_strided_slice %1 {offsets = [0, 0], sizes = [8, 32], strides = [1, 1]} : vector<8x96xf32> to vector<8x32xf32>
    %3 = vector.extract_strided_slice %1 {offsets = [0, 32], sizes = [8, 32], strides = [1, 1]} : vector<8x96xf32> to vector<8x32xf32>
    %4 = vector.extract_strided_slice %1 {offsets = [0, 64], sizes = [8, 32], strides = [1, 1]} : vector<8x96xf32> to vector<8x32xf32>
    %c0_2 = arith.constant 0 : index
    %c0_3 = arith.constant 0 : index
    %c0_4 = arith.constant 0 : index
    %5 = vector.load %arg2[%c0_2, %c0_3, %c0_4] : memref<1x1x8xi32, #tpu.memory_space<vmem>>, vector<1x1x8xi32>
    %6 = vector.shape_cast %5 : vector<1x1x8xi32> to vector<1x8xi32>
    %c0_i32 = arith.constant 0 : i32
    %7 = vector.broadcast %c0_i32 : i32 to vector<1x8xi32>
    %8 = arith.cmpi sgt, %6, %7 : vector<1x8xi32>
    %9 = arith.truncf %2 : vector<8x32xf32> to vector<8x32xbf16>
    %10 = arith.truncf %3 : vector<8x32xf32> to vector<8x32xbf16>
    %11 = arith.truncf %4 : vector<8x32xf32> to vector<8x32xbf16>
    %12 = vector.extract_strided_slice %9 {offsets = [0, 0], sizes = [8, 8], strides = [1, 1]} : vector<8x32xbf16> to vector<8x8xbf16>
    %13 = vector.extract_strided_slice %10 {offsets = [0, 0], sizes = [8, 8], strides = [1, 1]} : vector<8x32xbf16> to vector<8x8xbf16>
    %14 = tpu.transpose %13, [1, 0] : vector<8x8xbf16> -> vector<8x8xbf16>
    %cst = arith.constant dense<0.000000e+00> : vector<8x8xf32>
    %15 = tpu.matmul %12, %14, %cst {dimension_numbers = #tpu.dot_dimension_numbers<[1], [0], [0], [1], [0, 0, 1, 1], [], []>} : vector<8x8xbf16>, vector<8x8xbf16>, vector<8x8xf32> -> vector<8x8xf32>
    %cst_5 = arith.constant 0.353553385 : f32
    %16 = vector.broadcast %cst_5 : f32 to vector<8x8xf32>
    %17 = arith.mulf %15, %16 : vector<8x8xf32>
    %cst_6 = arith.constant -1.000000e+09 : f32
    %18 = vector.shape_cast %8 : vector<1x8xi1> to vector<1x8xi1>
    %19 = vector.broadcast %18 : vector<1x8xi1> to vector<8x8xi1>
    %20 = vector.broadcast %cst_6 : f32 to vector<8x8xf32>
    %21 = arith.select %19, %17, %20 : vector<8x8xi1>, vector<8x8xf32>
    %cst_7 = arith.constant dense<0xFF800000> : vector<8xf32>
    %22 = vector.multi_reduction <maximumf>, %21, %cst_7 [1] : vector<8x8xf32> to vector<8xf32>
    %23 = vector.shape_cast %22 : vector<8xf32> to vector<8x1xf32>
    %24 = vector.broadcast %23 : vector<8x1xf32> to vector<8x8xf32>
    %25 = arith.subf %21, %24 : vector<8x8xf32>
    %26 = math.exp %25 : vector<8x8xf32>
    %cst_8 = arith.constant dense<0.000000e+00> : vector<8xf32>
    %27 = vector.multi_reduction <add>, %26, %cst_8 [1] : vector<8x8xf32> to vector<8xf32>
    %28 = vector.shape_cast %27 : vector<8xf32> to vector<8x1xf32>
    %29 = tpu.reciprocal %28 {approx = true} : vector<8x1xf32> -> vector<8x1xf32>
    %30 = vector.broadcast %29 : vector<8x1xf32> to vector<8x8xf32>
    %31 = arith.mulf %26, %30 : vector<8x8xf32>
    %32 = arith.truncf %31 : vector<8x8xf32> to vector<8x8xbf16>
    %33 = vector.extract_strided_slice %11 {offsets = [0, 0], sizes = [8, 8], strides = [1, 1]} : vector<8x32xbf16> to vector<8x8xbf16>
    %cst_9 = arith.constant dense<0.000000e+00> : vector<8x8xf32>
    %34 = tpu.matmul %32, %33, %cst_9 {dimension_numbers = #tpu.dot_dimension_numbers<[1], [0], [0], [1], [0, 0, 1, 1], [], []>} : vector<8x8xbf16>, vector<8x8xbf16>, vector<8x8xf32> -> vector<8x8xf32>
    %35 = vector.extract_strided_slice %9 {offsets = [0, 8], sizes = [8, 8], strides = [1, 1]} : vector<8x32xbf16> to vector<8x8xbf16>
    %36 = vector.extract_strided_slice %10 {offsets = [0, 8], sizes = [8, 8], strides = [1, 1]} : vector<8x32xbf16> to vector<8x8xbf16>
    %37 = tpu.transpose %36, [1, 0] : vector<8x8xbf16> -> vector<8x8xbf16>
    %cst_10 = arith.constant dense<0.000000e+00> : vector<8x8xf32>
    %38 = tpu.matmul %35, %37, %cst_10 {dimension_numbers = #tpu.dot_dimension_numbers<[1], [0], [0], [1], [0, 0, 1, 1], [], []>} : vector<8x8xbf16>, vector<8x8xbf16>, vector<8x8xf32> -> vector<8x8xf32>
    %cst_11 = arith.constant 0.353553385 : f32
    %39 = vector.broadcast %cst_11 : f32 to vector<8x8xf32>
    %40 = arith.mulf %38, %39 : vector<8x8xf32>
    %cst_12 = arith.constant -1.000000e+09 : f32
    %41 = vector.shape_cast %8 : vector<1x8xi1> to vector<1x8xi1>
    %42 = vector.broadcast %41 : vector<1x8xi1> to vector<8x8xi1>
    %43 = vector.broadcast %cst_12 : f32 to vector<8x8xf32>
    %44 = arith.select %42, %40, %43 : vector<8x8xi1>, vector<8x8xf32>
    %cst_13 = arith.constant dense<0xFF800000> : vector<8xf32>
    %45 = vector.multi_reduction <maximumf>, %44, %cst_13 [1] : vector<8x8xf32> to vector<8xf32>
    %46 = vector.shape_cast %45 : vector<8xf32> to vector<8x1xf32>
    %47 = vector.broadcast %46 : vector<8x1xf32> to vector<8x8xf32>
    %48 = arith.subf %44, %47 : vector<8x8xf32>
    %49 = math.exp %48 : vector<8x8xf32>
    %cst_14 = arith.constant dense<0.000000e+00> : vector<8xf32>
    %50 = vector.multi_reduction <add>, %49, %cst_14 [1] : vector<8x8xf32> to vector<8xf32>
    %51 = vector.shape_cast %50 : vector<8xf32> to vector<8x1xf32>
    %52 = tpu.reciprocal %51 {approx = true} : vector<8x1xf32> -> vector<8x1xf32>
    %53 = vector.broadcast %52 : vector<8x1xf32> to vector<8x8xf32>
    %54 = arith.mulf %49, %53 : vector<8x8xf32>
    %55 = arith.truncf %54 : vector<8x8xf32> to vector<8x8xbf16>
    %56 = vector.extract_strided_slice %11 {offsets = [0, 8], sizes = [8, 8], strides = [1, 1]} : vector<8x32xbf16> to vector<8x8xbf16>
    %cst_15 = arith.constant dense<0.000000e+00> : vector<8x8xf32>
    %57 = tpu.matmul %55, %56, %cst_15 {dimension_numbers = #tpu.dot_dimension_numbers<[1], [0], [0], [1], [0, 0, 1, 1], [], []>} : vector<8x8xbf16>, vector<8x8xbf16>, vector<8x8xf32> -> vector<8x8xf32>
    %58 = vector.extract_strided_slice %9 {offsets = [0, 16], sizes = [8, 8], strides = [1, 1]} : vector<8x32xbf16> to vector<8x8xbf16>
    %59 = vector.extract_strided_slice %10 {offsets = [0, 16], sizes = [8, 8], strides = [1, 1]} : vector<8x32xbf16> to vector<8x8xbf16>
    %60 = tpu.transpose %59, [1, 0] : vector<8x8xbf16> -> vector<8x8xbf16>
    %cst_16 = arith.constant dense<0.000000e+00> : vector<8x8xf32>
    %61 = tpu.matmul %58, %60, %cst_16 {dimension_numbers = #tpu.dot_dimension_numbers<[1], [0], [0], [1], [0, 0, 1, 1], [], []>} : vector<8x8xbf16>, vector<8x8xbf16>, vector<8x8xf32> -> vector<8x8xf32>
    %cst_17 = arith.constant 0.353553385 : f32
    %62 = vector.broadcast %cst_17 : f32 to vector<8x8xf32>
    %63 = arith.mulf %61, %62 : vector<8x8xf32>
    %cst_18 = arith.constant -1.000000e+09 : f32
    %64 = vector.shape_cast %8 : vector<1x8xi1> to vector<1x8xi1>
    %65 = vector.broadcast %64 : vector<1x8xi1> to vector<8x8xi1>
    %66 = vector.broadcast %cst_18 : f32 to vector<8x8xf32>
    %67 = arith.select %65, %63, %66 : vector<8x8xi1>, vector<8x8xf32>
    %cst_19 = arith.constant dense<0xFF800000> : vector<8xf32>
    %68 = vector.multi_reduction <maximumf>, %67, %cst_19 [1] : vector<8x8xf32> to vector<8xf32>
    %69 = vector.shape_cast %68 : vector<8xf32> to vector<8x1xf32>
    %70 = vector.broadcast %69 : vector<8x1xf32> to vector<8x8xf32>
    %71 = arith.subf %67, %70 : vector<8x8xf32>
    %72 = math.exp %71 : vector<8x8xf32>
    %cst_20 = arith.constant dense<0.000000e+00> : vector<8xf32>
    %73 = vector.multi_reduction <add>, %72, %cst_20 [1] : vector<8x8xf32> to vector<8xf32>
    %74 = vector.shape_cast %73 : vector<8xf32> to vector<8x1xf32>
    %75 = tpu.reciprocal %74 {approx = true} : vector<8x1xf32> -> vector<8x1xf32>
    %76 = vector.broadcast %75 : vector<8x1xf32> to vector<8x8xf32>
    %77 = arith.mulf %72, %76 : vector<8x8xf32>
    %78 = arith.truncf %77 : vector<8x8xf32> to vector<8x8xbf16>
    %79 = vector.extract_strided_slice %11 {offsets = [0, 16], sizes = [8, 8], strides = [1, 1]} : vector<8x32xbf16> to vector<8x8xbf16>
    %cst_21 = arith.constant dense<0.000000e+00> : vector<8x8xf32>
    %80 = tpu.matmul %78, %79, %cst_21 {dimension_numbers = #tpu.dot_dimension_numbers<[1], [0], [0], [1], [0, 0, 1, 1], [], []>} : vector<8x8xbf16>, vector<8x8xbf16>, vector<8x8xf32> -> vector<8x8xf32>
    %81 = vector.extract_strided_slice %9 {offsets = [0, 24], sizes = [8, 8], strides = [1, 1]} : vector<8x32xbf16> to vector<8x8xbf16>
    %82 = vector.extract_strided_slice %10 {offsets = [0, 24], sizes = [8, 8], strides = [1, 1]} : vector<8x32xbf16> to vector<8x8xbf16>
    %83 = tpu.transpose %82, [1, 0] : vector<8x8xbf16> -> vector<8x8xbf16>
    %cst_22 = arith.constant dense<0.000000e+00> : vector<8x8xf32>
    %84 = tpu.matmul %81, %83, %cst_22 {dimension_numbers = #tpu.dot_dimension_numbers<[1], [0], [0], [1], [0, 0, 1, 1], [], []>} : vector<8x8xbf16>, vector<8x8xbf16>, vector<8x8xf32> -> vector<8x8xf32>
    %cst_23 = arith.constant 0.353553385 : f32
    %85 = vector.broadcast %cst_23 : f32 to vector<8x8xf32>
    %86 = arith.mulf %84, %85 : vector<8x8xf32>
    %cst_24 = arith.constant -1.000000e+09 : f32
    %87 = vector.shape_cast %8 : vector<1x8xi1> to vector<1x8xi1>
    %88 = vector.broadcast %87 : vector<1x8xi1> to vector<8x8xi1>
    %89 = vector.broadcast %cst_24 : f32 to vector<8x8xf32>
    %90 = arith.select %88, %86, %89 : vector<8x8xi1>, vector<8x8xf32>
    %cst_25 = arith.constant dense<0xFF800000> : vector<8xf32>
    %91 = vector.multi_reduction <maximumf>, %90, %cst_25 [1] : vector<8x8xf32> to vector<8xf32>
    %92 = vector.shape_cast %91 : vector<8xf32> to vector<8x1xf32>
    %93 = vector.broadcast %92 : vector<8x1xf32> to vector<8x8xf32>
    %94 = arith.subf %90, %93 : vector<8x8xf32>
    %95 = math.exp %94 : vector<8x8xf32>
    %cst_26 = arith.constant dense<0.000000e+00> : vector<8xf32>
    %96 = vector.multi_reduction <add>, %95, %cst_26 [1] : vector<8x8xf32> to vector<8xf32>
    %97 = vector.shape_cast %96 : vector<8xf32> to vector<8x1xf32>
    %98 = tpu.reciprocal %97 {approx = true} : vector<8x1xf32> -> vector<8x1xf32>
    %99 = vector.broadcast %98 : vector<8x1xf32> to vector<8x8xf32>
    %100 = arith.mulf %95, %99 : vector<8x8xf32>
    %101 = arith.truncf %100 : vector<8x8xf32> to vector<8x8xbf16>
    %102 = vector.extract_strided_slice %11 {offsets = [0, 24], sizes = [8, 8], strides = [1, 1]} : vector<8x32xbf16> to vector<8x8xbf16>
    %cst_27 = arith.constant dense<0.000000e+00> : vector<8x8xf32>
    %103 = tpu.matmul %101, %102, %cst_27 {dimension_numbers = #tpu.dot_dimension_numbers<[1], [0], [0], [1], [0, 0, 1, 1], [], []>} : vector<8x8xbf16>, vector<8x8xbf16>, vector<8x8xf32> -> vector<8x8xf32>
    %104 = tpu.concatenate %34, %57, %80, %103 in 1 : vector<8x8xf32>, vector<8x8xf32>, vector<8x8xf32>, vector<8x8xf32> -> vector<8x32xf32>
    %c0_28 = arith.constant 0 : index
    %c0_29 = arith.constant 0 : index
    %c0_30 = arith.constant 0 : index
    %105 = vector.load %arg3[%c0_28, %c0_29, %c0_30] : memref<1x8x32xf32, #tpu.memory_space<vmem>>, vector<1x8x32xf32>
    %106 = vector.shape_cast %105 : vector<1x8x32xf32> to vector<8x32xf32>
    %107 = vector.shape_cast %104 : vector<8x32xf32> to vector<1x8x32xf32>
    tpu.vector_store %arg3[%c0_28, %c0_29, %c0_30], %107 {strides = array<i32>} : memref<1x8x32xf32, #tpu.memory_space<vmem>>, vector<1x8x32xf32>,
    return
  }
  func.func @transform_0(%arg0: i32) -> (i32, i32, i32) {
    %c0_i32 = arith.constant 0 : i32
    %c0_i32_0 = arith.constant 0 : i32
    %c0_i32_1 = arith.constant 0 : i32
    return %arg0, %c0_i32, %c0_i32_0 : i32, i32, i32
  }
  func.func @transform_1(%arg0: i32) -> (i32, i32, i32) {
    %c0_i32 = arith.constant 0 : i32
    %c0_i32_0 = arith.constant 0 : i32
    %c0_i32_1 = arith.constant 0 : i32
    return %arg0, %c0_i32, %c0_i32_0 : i32, i32, i32
  }
  func.func @transform_2(%arg0: i32) -> (i32, i32, i32) {
    %c0_i32 = arith.constant 0 : i32
    %c0_i32_0 = arith.constant 0 : i32
    %c0_i32_1 = arith.constant 0 : i32
    return %arg0, %c0_i32, %c0_i32_0 : i32, i32, i32
  }
}

module attributes {stable_mosaic.version = 11 : i64} {
  func.func @_linear_kernel(%arg0: i32, %arg1: i32, %arg2: i32, %arg3: memref<16x32xf32, #tpu.memory_space<vmem>>, %arg4: memref<32x32xbf16, #tpu.memory_space<vmem>>, %arg5: memref<1x32xf32, #tpu.memory_space<vmem>>, %arg6: memref<16x32xf32, #tpu.memory_space<vmem>>, %arg7: memref<16x32xf32, #tpu.memory_space<vmem>>) attributes {dimension_semantics = [#tpu.dimension_semantics<parallel>, #tpu.dimension_semantics<parallel>, #tpu.dimension_semantics<arbitrary>], iteration_bounds = array<i64: 1, 1, 1>, scalar_prefetch = 0 : i64, scratch_operands = 1 : i64, tpu.core_type = #tpu.core_type<tc>, window_params = [{transform_indices = @transform_0, window_bounds = array<i64: 16, 32>}, {transform_indices = @transform_1, window_bounds = array<i64: 32, 32>}, {transform_indices = @transform_2, window_bounds = array<i64: 1, 32>}, {transform_indices = @transform_3, window_bounds = array<i64: 16, 32>}]} {
    %c0_i32 = arith.constant 0 : i32
    %0 = arith.cmpi eq, %arg2, %c0_i32 : i32
    %1 = arith.extui %0 : i1 to i32
    %c0_i32_0 = arith.constant 0 : i32
    %2 = arith.cmpi ne, %1, %c0_i32_0 : i32
    scf.if %2 {
      %cst_10 = arith.constant 0.000000e+00 : f32
      %13 = vector.broadcast %cst_10 : f32 to vector<16x32xf32>
      %c0_11 = arith.constant 0 : index
      %c0_12 = arith.constant 0 : index
      %14 = vector.load %arg7[%c0_11, %c0_12] : memref<16x32xf32, #tpu.memory_space<vmem>>, vector<16x32xf32>
      tpu.vector_store %arg7[%c0_11, %c0_12], %13 {strides = array<i32>} : memref<16x32xf32, #tpu.memory_space<vmem>>, vector<16x32xf32>,
    } else {
    }
    %c0 = arith.constant 0 : index
    %c0_1 = arith.constant 0 : index
    %3 = vector.load %arg7[%c0, %c0_1] : memref<16x32xf32, #tpu.memory_space<vmem>>, vector<16x32xf32>
    %c0_2 = arith.constant 0 : index
    %c0_3 = arith.constant 0 : index
    %4 = vector.load %arg3[%c0_2, %c0_3] : memref<16x32xf32, #tpu.memory_space<vmem>>, vector<16x32xf32>
    %5 = arith.truncf %4 : vector<16x32xf32> to vector<16x32xbf16>
    %c0_4 = arith.constant 0 : index
    %c0_5 = arith.constant 0 : index
    %6 = vector.load %arg4[%c0_4, %c0_5] : memref<32x32xbf16, #tpu.memory_space<vmem>>, vector<32x32xbf16>
    %cst = arith.constant dense<0.000000e+00> : vector<16x32xf32>
    %7 = tpu.matmul %5, %6, %cst {dimension_numbers = #tpu.dot_dimension_numbers<[1], [0], [0], [1], [0, 0, 1, 1], [], []>} : vector<16x32xbf16>, vector<32x32xbf16>, vector<16x32xf32> -> vector<16x32xf32>
    %8 = arith.addf %3, %7 : vector<16x32xf32>
    %c0_6 = arith.constant 0 : index
    %c0_7 = arith.constant 0 : index
    %9 = vector.load %arg7[%c0_6, %c0_7] : memref<16x32xf32, #tpu.memory_space<vmem>>, vector<16x32xf32>
    tpu.vector_store %arg7[%c0_6, %c0_7], %8 {strides = array<i32>} : memref<16x32xf32, #tpu.memory_space<vmem>>, vector<16x32xf32>,
    %c0_i32_8 = arith.constant 0 : i32
    %10 = arith.cmpi eq, %arg2, %c0_i32_8 : i32
    %11 = arith.extui %10 : i1 to i32
    %c0_i32_9 = arith.constant 0 : i32
    %12 = arith.cmpi ne, %11, %c0_i32_9 : i32
    scf.if %12 {
      %c0_10 = arith.constant 0 : index
      %c0_11 = arith.constant 0 : index
      %13 = vector.load %arg7[%c0_10, %c0_11] : memref<16x32xf32, #tpu.memory_space<vmem>>, vector<16x32xf32>
      %c0_12 = arith.constant 0 : index
      %c0_13 = arith.constant 0 : index
      %14 = vector.load %arg5[%c0_12, %c0_13] : memref<1x32xf32, #tpu.memory_space<vmem>>, vector<1x32xf32>
      %15 = vector.broadcast %14 : vector<1x32xf32> to vector<16x32xf32>
      %16 = arith.addf %13, %15 : vector<16x32xf32>
      %c0_14 = arith.constant 0 : index
      %c0_15 = arith.constant 0 : index
      %17 = vector.load %arg6[%c0_14, %c0_15] : memref<16x32xf32, #tpu.memory_space<vmem>>, vector<16x32xf32>
      tpu.vector_store %arg6[%c0_14, %c0_15], %16 {strides = array<i32>} : memref<16x32xf32, #tpu.memory_space<vmem>>, vector<16x32xf32>,
    } else {
    }
    return
  }
  func.func @transform_0(%arg0: i32, %arg1: i32, %arg2: i32) -> (i32, i32) {
    %c0_i32 = arith.constant 0 : i32
    return %arg0, %arg2 : i32, i32
  }
  func.func @transform_1(%arg0: i32, %arg1: i32, %arg2: i32) -> (i32, i32) {
    %c0_i32 = arith.constant 0 : i32
    return %arg2, %arg1 : i32, i32
  }
  func.func @transform_2(%arg0: i32, %arg1: i32, %arg2: i32) -> (i32, i32) {
    %c0_i32 = arith.constant 0 : i32
    %c0_i32_0 = arith.constant 0 : i32
    return %c0_i32, %arg1 : i32, i32
  }
  func.func @transform_3(%arg0: i32, %arg1: i32, %arg2: i32) -> (i32, i32) {
    %c0_i32 = arith.constant 0 : i32
    return %arg0, %arg1 : i32, i32
  }
}

module attributes {stable_mosaic.version = 11 : i64} {
  func.func @_add_ln_kernel(%arg0: i32, %arg1: memref<16x32xf32, #tpu.memory_space<vmem>>, %arg2: memref<16x32xf32, #tpu.memory_space<vmem>>, %arg3: memref<1x32xf32, #tpu.memory_space<vmem>>, %arg4: memref<1x32xf32, #tpu.memory_space<vmem>>, %arg5: memref<16x32xf32, #tpu.memory_space<vmem>>) attributes {dimension_semantics = [#tpu.dimension_semantics<parallel>], iteration_bounds = array<i64: 1>, scalar_prefetch = 0 : i64, scratch_operands = 0 : i64, tpu.core_type = #tpu.core_type<tc>, window_params = [{transform_indices = @transform_0, window_bounds = array<i64: 16, 32>}, {transform_indices = @transform_1, window_bounds = array<i64: 16, 32>}, {pipeline_mode = #tpu.pipeline_mode<synchronous>, transform_indices = @transform_2, window_bounds = array<i64: 1, 32>}, {pipeline_mode = #tpu.pipeline_mode<synchronous>, transform_indices = @transform_3, window_bounds = array<i64: 1, 32>}, {transform_indices = @transform_4, window_bounds = array<i64: 16, 32>}]} {
    %c0 = arith.constant 0 : index
    %c0_0 = arith.constant 0 : index
    %0 = vector.load %arg1[%c0, %c0_0] : memref<16x32xf32, #tpu.memory_space<vmem>>, vector<16x32xf32>
    %c0_1 = arith.constant 0 : index
    %c0_2 = arith.constant 0 : index
    %1 = vector.load %arg2[%c0_1, %c0_2] : memref<16x32xf32, #tpu.memory_space<vmem>>, vector<16x32xf32>
    %2 = arith.addf %0, %1 : vector<16x32xf32>
    %cst = arith.constant dense<0.000000e+00> : vector<16xf32>
    %3 = vector.multi_reduction <add>, %2, %cst [1] : vector<16x32xf32> to vector<16xf32>
    %4 = vector.shape_cast %3 : vector<16xf32> to vector<16x1xf32>
    %cst_3 = arith.constant 3.200000e+01 : f32
    %5 = vector.broadcast %cst_3 : f32 to vector<16x1xf32>
    %6 = arith.divf %4, %5 : vector<16x1xf32>
    %7 = vector.broadcast %6 : vector<16x1xf32> to vector<16x32xf32>
    %8 = arith.subf %2, %7 : vector<16x32xf32>
    %9 = arith.mulf %8, %8 : vector<16x32xf32>
    %cst_4 = arith.constant dense<0.000000e+00> : vector<16xf32>
    %10 = vector.multi_reduction <add>, %9, %cst_4 [1] : vector<16x32xf32> to vector<16xf32>
    %11 = vector.shape_cast %10 : vector<16xf32> to vector<16x1xf32>
    %cst_5 = arith.constant 3.200000e+01 : f32
    %12 = vector.broadcast %cst_5 : f32 to vector<16x1xf32>
    %13 = arith.divf %11, %12 : vector<16x1xf32>
    %14 = vector.broadcast %6 : vector<16x1xf32> to vector<16x32xf32>
    %15 = arith.subf %2, %14 : vector<16x32xf32>
    %cst_6 = arith.constant 9.99999997E-7 : f32
    %16 = vector.broadcast %cst_6 : f32 to vector<16x1xf32>
    %17 = arith.addf %13, %16 : vector<16x1xf32>
    %18 = math.rsqrt %17 : vector<16x1xf32>
    %19 = vector.broadcast %18 : vector<16x1xf32> to vector<16x32xf32>
    %20 = arith.mulf %15, %19 : vector<16x32xf32>
    %c0_7 = arith.constant 0 : index
    %c0_8 = arith.constant 0 : index
    %21 = vector.load %arg3[%c0_7, %c0_8] : memref<1x32xf32, #tpu.memory_space<vmem>>, vector<1x32xf32>
    %22 = vector.broadcast %21 : vector<1x32xf32> to vector<16x32xf32>
    %23 = arith.mulf %20, %22 : vector<16x32xf32>
    %c0_9 = arith.constant 0 : index
    %c0_10 = arith.constant 0 : index
    %24 = vector.load %arg4[%c0_9, %c0_10] : memref<1x32xf32, #tpu.memory_space<vmem>>, vector<1x32xf32>
    %25 = vector.broadcast %24 : vector<1x32xf32> to vector<16x32xf32>
    %26 = arith.addf %23, %25 : vector<16x32xf32>
    %c0_11 = arith.constant 0 : index
    %c0_12 = arith.constant 0 : index
    %27 = vector.load %arg5[%c0_11, %c0_12] : memref<16x32xf32, #tpu.memory_space<vmem>>, vector<16x32xf32>
    tpu.vector_store %arg5[%c0_11, %c0_12], %26 {strides = array<i32>} : memref<16x32xf32, #tpu.memory_space<vmem>>, vector<16x32xf32>,
    return
  }
  func.func @transform_0(%arg0: i32) -> (i32, i32) {
    %c0_i32 = arith.constant 0 : i32
    %c0_i32_0 = arith.constant 0 : i32
    return %arg0, %c0_i32 : i32, i32
  }
  func.func @transform_1(%arg0: i32) -> (i32, i32) {
    %c0_i32 = arith.constant 0 : i32
    %c0_i32_0 = arith.constant 0 : i32
    return %arg0, %c0_i32 : i32, i32
  }
  func.func @transform_2(%arg0: i32) -> (i32, i32) {
    %c0_i32 = arith.constant 0 : i32
    %c0_i32_0 = arith.constant 0 : i32
    %c0_i32_1 = arith.constant 0 : i32
    return %c0_i32, %c0_i32_0 : i32, i32
  }
  func.func @transform_3(%arg0: i32) -> (i32, i32) {
    %c0_i32 = arith.constant 0 : i32
    %c0_i32_0 = arith.constant 0 : i32
    %c0_i32_1 = arith.constant 0 : i32
    return %c0_i32, %c0_i32_0 : i32, i32
  }
  func.func @transform_4(%arg0: i32) -> (i32, i32) {
    %c0_i32 = arith.constant 0 : i32
    %c0_i32_0 = arith.constant 0 : i32
    return %arg0, %c0_i32 : i32, i32
  }
}

module attributes {stable_mosaic.version = 11 : i64} {
  func.func @_linear_kernel(%arg0: i32, %arg1: i32, %arg2: i32, %arg3: memref<16x32xf32, #tpu.memory_space<vmem>>, %arg4: memref<32x64xbf16, #tpu.memory_space<vmem>>, %arg5: memref<1x64xf32, #tpu.memory_space<vmem>>, %arg6: memref<16x64xf32, #tpu.memory_space<vmem>>, %arg7: memref<16x64xf32, #tpu.memory_space<vmem>>) attributes {dimension_semantics = [#tpu.dimension_semantics<parallel>, #tpu.dimension_semantics<parallel>, #tpu.dimension_semantics<arbitrary>], iteration_bounds = array<i64: 1, 1, 1>, scalar_prefetch = 0 : i64, scratch_operands = 1 : i64, tpu.core_type = #tpu.core_type<tc>, window_params = [{transform_indices = @transform_0, window_bounds = array<i64: 16, 32>}, {transform_indices = @transform_1, window_bounds = array<i64: 32, 64>}, {transform_indices = @transform_2, window_bounds = array<i64: 1, 64>}, {transform_indices = @transform_3, window_bounds = array<i64: 16, 64>}]} {
    %c0_i32 = arith.constant 0 : i32
    %0 = arith.cmpi eq, %arg2, %c0_i32 : i32
    %1 = arith.extui %0 : i1 to i32
    %c0_i32_0 = arith.constant 0 : i32
    %2 = arith.cmpi ne, %1, %c0_i32_0 : i32
    scf.if %2 {
      %cst_10 = arith.constant 0.000000e+00 : f32
      %13 = vector.broadcast %cst_10 : f32 to vector<16x64xf32>
      %c0_11 = arith.constant 0 : index
      %c0_12 = arith.constant 0 : index
      %14 = vector.load %arg7[%c0_11, %c0_12] : memref<16x64xf32, #tpu.memory_space<vmem>>, vector<16x64xf32>
      tpu.vector_store %arg7[%c0_11, %c0_12], %13 {strides = array<i32>} : memref<16x64xf32, #tpu.memory_space<vmem>>, vector<16x64xf32>,
    } else {
    }
    %c0 = arith.constant 0 : index
    %c0_1 = arith.constant 0 : index
    %3 = vector.load %arg7[%c0, %c0_1] : memref<16x64xf32, #tpu.memory_space<vmem>>, vector<16x64xf32>
    %c0_2 = arith.constant 0 : index
    %c0_3 = arith.constant 0 : index
    %4 = vector.load %arg3[%c0_2, %c0_3] : memref<16x32xf32, #tpu.memory_space<vmem>>, vector<16x32xf32>
    %5 = arith.truncf %4 : vector<16x32xf32> to vector<16x32xbf16>
    %c0_4 = arith.constant 0 : index
    %c0_5 = arith.constant 0 : index
    %6 = vector.load %arg4[%c0_4, %c0_5] : memref<32x64xbf16, #tpu.memory_space<vmem>>, vector<32x64xbf16>
    %cst = arith.constant dense<0.000000e+00> : vector<16x64xf32>
    %7 = tpu.matmul %5, %6, %cst {dimension_numbers = #tpu.dot_dimension_numbers<[1], [0], [0], [1], [0, 0, 1, 1], [], []>} : vector<16x32xbf16>, vector<32x64xbf16>, vector<16x64xf32> -> vector<16x64xf32>
    %8 = arith.addf %3, %7 : vector<16x64xf32>
    %c0_6 = arith.constant 0 : index
    %c0_7 = arith.constant 0 : index
    %9 = vector.load %arg7[%c0_6, %c0_7] : memref<16x64xf32, #tpu.memory_space<vmem>>, vector<16x64xf32>
    tpu.vector_store %arg7[%c0_6, %c0_7], %8 {strides = array<i32>} : memref<16x64xf32, #tpu.memory_space<vmem>>, vector<16x64xf32>,
    %c0_i32_8 = arith.constant 0 : i32
    %10 = arith.cmpi eq, %arg2, %c0_i32_8 : i32
    %11 = arith.extui %10 : i1 to i32
    %c0_i32_9 = arith.constant 0 : i32
    %12 = arith.cmpi ne, %11, %c0_i32_9 : i32
    scf.if %12 {
      %c0_10 = arith.constant 0 : index
      %c0_11 = arith.constant 0 : index
      %13 = vector.load %arg7[%c0_10, %c0_11] : memref<16x64xf32, #tpu.memory_space<vmem>>, vector<16x64xf32>
      %c0_12 = arith.constant 0 : index
      %c0_13 = arith.constant 0 : index
      %14 = vector.load %arg5[%c0_12, %c0_13] : memref<1x64xf32, #tpu.memory_space<vmem>>, vector<1x64xf32>
      %15 = vector.broadcast %14 : vector<1x64xf32> to vector<16x64xf32>
      %16 = arith.addf %13, %15 : vector<16x64xf32>
      %cst_14 = arith.constant 0.000000e+00 : f32
      %17 = vector.broadcast %cst_14 : f32 to vector<16x64xf32>
      %18 = arith.maximumf %16, %17 : vector<16x64xf32>
      %c0_15 = arith.constant 0 : index
      %c0_16 = arith.constant 0 : index
      %19 = vector.load %arg6[%c0_15, %c0_16] : memref<16x64xf32, #tpu.memory_space<vmem>>, vector<16x64xf32>
      tpu.vector_store %arg6[%c0_15, %c0_16], %18 {strides = array<i32>} : memref<16x64xf32, #tpu.memory_space<vmem>>, vector<16x64xf32>,
    } else {
    }
    return
  }
  func.func @transform_0(%arg0: i32, %arg1: i32, %arg2: i32) -> (i32, i32) {
    %c0_i32 = arith.constant 0 : i32
    return %arg0, %arg2 : i32, i32
  }
  func.func @transform_1(%arg0: i32, %arg1: i32, %arg2: i32) -> (i32, i32) {
    %c0_i32 = arith.constant 0 : i32
    return %arg2, %arg1 : i32, i32
  }
  func.func @transform_2(%arg0: i32, %arg1: i32, %arg2: i32) -> (i32, i32) {
    %c0_i32 = arith.constant 0 : i32
    %c0_i32_0 = arith.constant 0 : i32
    return %c0_i32, %arg1 : i32, i32
  }
  func.func @transform_3(%arg0: i32, %arg1: i32, %arg2: i32) -> (i32, i32) {
    %c0_i32 = arith.constant 0 : i32
    return %arg0, %arg1 : i32, i32
  }
}

module attributes {stable_mosaic.version = 11 : i64} {
  func.func @_linear_kernel(%arg0: i32, %arg1: i32, %arg2: i32, %arg3: memref<16x64xf32, #tpu.memory_space<vmem>>, %arg4: memref<64x32xbf16, #tpu.memory_space<vmem>>, %arg5: memref<1x32xf32, #tpu.memory_space<vmem>>, %arg6: memref<16x32xf32, #tpu.memory_space<vmem>>, %arg7: memref<16x32xf32, #tpu.memory_space<vmem>>) attributes {dimension_semantics = [#tpu.dimension_semantics<parallel>, #tpu.dimension_semantics<parallel>, #tpu.dimension_semantics<arbitrary>], iteration_bounds = array<i64: 1, 1, 1>, scalar_prefetch = 0 : i64, scratch_operands = 1 : i64, tpu.core_type = #tpu.core_type<tc>, window_params = [{transform_indices = @transform_0, window_bounds = array<i64: 16, 64>}, {transform_indices = @transform_1, window_bounds = array<i64: 64, 32>}, {transform_indices = @transform_2, window_bounds = array<i64: 1, 32>}, {transform_indices = @transform_3, window_bounds = array<i64: 16, 32>}]} {
    %c0_i32 = arith.constant 0 : i32
    %0 = arith.cmpi eq, %arg2, %c0_i32 : i32
    %1 = arith.extui %0 : i1 to i32
    %c0_i32_0 = arith.constant 0 : i32
    %2 = arith.cmpi ne, %1, %c0_i32_0 : i32
    scf.if %2 {
      %cst_10 = arith.constant 0.000000e+00 : f32
      %13 = vector.broadcast %cst_10 : f32 to vector<16x32xf32>
      %c0_11 = arith.constant 0 : index
      %c0_12 = arith.constant 0 : index
      %14 = vector.load %arg7[%c0_11, %c0_12] : memref<16x32xf32, #tpu.memory_space<vmem>>, vector<16x32xf32>
      tpu.vector_store %arg7[%c0_11, %c0_12], %13 {strides = array<i32>} : memref<16x32xf32, #tpu.memory_space<vmem>>, vector<16x32xf32>,
    } else {
    }
    %c0 = arith.constant 0 : index
    %c0_1 = arith.constant 0 : index
    %3 = vector.load %arg7[%c0, %c0_1] : memref<16x32xf32, #tpu.memory_space<vmem>>, vector<16x32xf32>
    %c0_2 = arith.constant 0 : index
    %c0_3 = arith.constant 0 : index
    %4 = vector.load %arg3[%c0_2, %c0_3] : memref<16x64xf32, #tpu.memory_space<vmem>>, vector<16x64xf32>
    %5 = arith.truncf %4 : vector<16x64xf32> to vector<16x64xbf16>
    %c0_4 = arith.constant 0 : index
    %c0_5 = arith.constant 0 : index
    %6 = vector.load %arg4[%c0_4, %c0_5] : memref<64x32xbf16, #tpu.memory_space<vmem>>, vector<64x32xbf16>
    %cst = arith.constant dense<0.000000e+00> : vector<16x32xf32>
    %7 = tpu.matmul %5, %6, %cst {dimension_numbers = #tpu.dot_dimension_numbers<[1], [0], [0], [1], [0, 0, 1, 1], [], []>} : vector<16x64xbf16>, vector<64x32xbf16>, vector<16x32xf32> -> vector<16x32xf32>
    %8 = arith.addf %3, %7 : vector<16x32xf32>
    %c0_6 = arith.constant 0 : index
    %c0_7 = arith.constant 0 : index
    %9 = vector.load %arg7[%c0_6, %c0_7] : memref<16x32xf32, #tpu.memory_space<vmem>>, vector<16x32xf32>
    tpu.vector_store %arg7[%c0_6, %c0_7], %8 {strides = array<i32>} : memref<16x32xf32, #tpu.memory_space<vmem>>, vector<16x32xf32>,
    %c0_i32_8 = arith.constant 0 : i32
    %10 = arith.cmpi eq, %arg2, %c0_i32_8 : i32
    %11 = arith.extui %10 : i1 to i32
    %c0_i32_9 = arith.constant 0 : i32
    %12 = arith.cmpi ne, %11, %c0_i32_9 : i32
    scf.if %12 {
      %c0_10 = arith.constant 0 : index
      %c0_11 = arith.constant 0 : index
      %13 = vector.load %arg7[%c0_10, %c0_11] : memref<16x32xf32, #tpu.memory_space<vmem>>, vector<16x32xf32>
      %c0_12 = arith.constant 0 : index
      %c0_13 = arith.constant 0 : index
      %14 = vector.load %arg5[%c0_12, %c0_13] : memref<1x32xf32, #tpu.memory_space<vmem>>, vector<1x32xf32>
      %15 = vector.broadcast %14 : vector<1x32xf32> to vector<16x32xf32>
      %16 = arith.addf %13, %15 : vector<16x32xf32>
      %c0_14 = arith.constant 0 : index
      %c0_15 = arith.constant 0 : index
      %17 = vector.load %arg6[%c0_14, %c0_15] : memref<16x32xf32, #tpu.memory_space<vmem>>, vector<16x32xf32>
      tpu.vector_store %arg6[%c0_14, %c0_15], %16 {strides = array<i32>} : memref<16x32xf32, #tpu.memory_space<vmem>>, vector<16x32xf32>,
    } else {
    }
    return
  }
  func.func @transform_0(%arg0: i32, %arg1: i32, %arg2: i32) -> (i32, i32) {
    %c0_i32 = arith.constant 0 : i32
    return %arg0, %arg2 : i32, i32
  }
  func.func @transform_1(%arg0: i32, %arg1: i32, %arg2: i32) -> (i32, i32) {
    %c0_i32 = arith.constant 0 : i32
    return %arg2, %arg1 : i32, i32
  }
  func.func @transform_2(%arg0: i32, %arg1: i32, %arg2: i32) -> (i32, i32) {
    %c0_i32 = arith.constant 0 : i32
    %c0_i32_0 = arith.constant 0 : i32
    return %c0_i32, %arg1 : i32, i32
  }
  func.func @transform_3(%arg0: i32, %arg1: i32, %arg2: i32) -> (i32, i32) {
    %c0_i32 = arith.constant 0 : i32
    return %arg0, %arg1 : i32, i32
  }
}

module attributes {stable_mosaic.version = 11 : i64} {
  func.func @_linear_kernel(%arg0: i32, %arg1: i32, %arg2: i32, %arg3: memref<16x32xf32, #tpu.memory_space<vmem>>, %arg4: memref<32x64xbf16, #tpu.memory_space<vmem>>, %arg5: memref<1x64xf32, #tpu.memory_space<vmem>>, %arg6: memref<16x64xf32, #tpu.memory_space<vmem>>, %arg7: memref<16x64xf32, #tpu.memory_space<vmem>>) attributes {dimension_semantics = [#tpu.dimension_semantics<parallel>, #tpu.dimension_semantics<parallel>, #tpu.dimension_semantics<arbitrary>], iteration_bounds = array<i64: 1, 1, 1>, scalar_prefetch = 0 : i64, scratch_operands = 1 : i64, tpu.core_type = #tpu.core_type<tc>, window_params = [{transform_indices = @transform_0, window_bounds = array<i64: 16, 32>}, {transform_indices = @transform_1, window_bounds = array<i64: 32, 64>}, {transform_indices = @transform_2, window_bounds = array<i64: 1, 64>}, {transform_indices = @transform_3, window_bounds = array<i64: 16, 64>}]} {
    %c0_i32 = arith.constant 0 : i32
    %0 = arith.cmpi eq, %arg2, %c0_i32 : i32
    %1 = arith.extui %0 : i1 to i32
    %c0_i32_0 = arith.constant 0 : i32
    %2 = arith.cmpi ne, %1, %c0_i32_0 : i32
    scf.if %2 {
      %cst_10 = arith.constant 0.000000e+00 : f32
      %13 = vector.broadcast %cst_10 : f32 to vector<16x64xf32>
      %c0_11 = arith.constant 0 : index
      %c0_12 = arith.constant 0 : index
      %14 = vector.load %arg7[%c0_11, %c0_12] : memref<16x64xf32, #tpu.memory_space<vmem>>, vector<16x64xf32>
      tpu.vector_store %arg7[%c0_11, %c0_12], %13 {strides = array<i32>} : memref<16x64xf32, #tpu.memory_space<vmem>>, vector<16x64xf32>,
    } else {
    }
    %c0 = arith.constant 0 : index
    %c0_1 = arith.constant 0 : index
    %3 = vector.load %arg7[%c0, %c0_1] : memref<16x64xf32, #tpu.memory_space<vmem>>, vector<16x64xf32>
    %c0_2 = arith.constant 0 : index
    %c0_3 = arith.constant 0 : index
    %4 = vector.load %arg3[%c0_2, %c0_3] : memref<16x32xf32, #tpu.memory_space<vmem>>, vector<16x32xf32>
    %5 = arith.truncf %4 : vector<16x32xf32> to vector<16x32xbf16>
    %c0_4 = arith.constant 0 : index
    %c0_5 = arith.constant 0 : index
    %6 = vector.load %arg4[%c0_4, %c0_5] : memref<32x64xbf16, #tpu.memory_space<vmem>>, vector<32x64xbf16>
    %cst = arith.constant dense<0.000000e+00> : vector<16x64xf32>
    %7 = tpu.matmul %5, %6, %cst {dimension_numbers = #tpu.dot_dimension_numbers<[1], [0], [0], [1], [0, 0, 1, 1], [], []>} : vector<16x32xbf16>, vector<32x64xbf16>, vector<16x64xf32> -> vector<16x64xf32>
    %8 = arith.addf %3, %7 : vector<16x64xf32>
    %c0_6 = arith.constant 0 : index
    %c0_7 = arith.constant 0 : index
    %9 = vector.load %arg7[%c0_6, %c0_7] : memref<16x64xf32, #tpu.memory_space<vmem>>, vector<16x64xf32>
    tpu.vector_store %arg7[%c0_6, %c0_7], %8 {strides = array<i32>} : memref<16x64xf32, #tpu.memory_space<vmem>>, vector<16x64xf32>,
    %c0_i32_8 = arith.constant 0 : i32
    %10 = arith.cmpi eq, %arg2, %c0_i32_8 : i32
    %11 = arith.extui %10 : i1 to i32
    %c0_i32_9 = arith.constant 0 : i32
    %12 = arith.cmpi ne, %11, %c0_i32_9 : i32
    scf.if %12 {
      %c0_10 = arith.constant 0 : index
      %c0_11 = arith.constant 0 : index
      %13 = vector.load %arg7[%c0_10, %c0_11] : memref<16x64xf32, #tpu.memory_space<vmem>>, vector<16x64xf32>
      %c0_12 = arith.constant 0 : index
      %c0_13 = arith.constant 0 : index
      %14 = vector.load %arg5[%c0_12, %c0_13] : memref<1x64xf32, #tpu.memory_space<vmem>>, vector<1x64xf32>
      %15 = vector.broadcast %14 : vector<1x64xf32> to vector<16x64xf32>
      %16 = arith.addf %13, %15 : vector<16x64xf32>
      %c0_14 = arith.constant 0 : index
      %c0_15 = arith.constant 0 : index
      %17 = vector.load %arg6[%c0_14, %c0_15] : memref<16x64xf32, #tpu.memory_space<vmem>>, vector<16x64xf32>
      tpu.vector_store %arg6[%c0_14, %c0_15], %16 {strides = array<i32>} : memref<16x64xf32, #tpu.memory_space<vmem>>, vector<16x64xf32>,
    } else {
    }
    return
  }
  func.func @transform_0(%arg0: i32, %arg1: i32, %arg2: i32) -> (i32, i32) {
    %c0_i32 = arith.constant 0 : i32
    return %arg0, %arg2 : i32, i32
  }
  func.func @transform_1(%arg0: i32, %arg1: i32, %arg2: i32) -> (i32, i32) {
    %c0_i32 = arith.constant 0 : i32
    return %arg2, %arg1 : i32, i32
  }
  func.func @transform_2(%arg0: i32, %arg1: i32, %arg2: i32) -> (i32, i32) {
    %c0_i32 = arith.constant 0 : i32
    %c0_i32_0 = arith.constant 0 : i32
    return %c0_i32, %arg1 : i32, i32
  }
  func.func @transform_3(%arg0: i32, %arg1: i32, %arg2: i32) -> (i32, i32) {
    %c0_i32 = arith.constant 0 : i32
    return %arg0, %arg1 : i32, i32
  }
}

module attributes {stable_mosaic.version = 11 : i64} {
  func.func @_self_attn_kernel(%arg0: i32, %arg1: memref<1x8x96xf32, #tpu.memory_space<vmem>>, %arg2: memref<1x1x8xi32, #tpu.memory_space<vmem>>, %arg3: memref<1x8x32xf32, #tpu.memory_space<vmem>>) attributes {dimension_semantics = [#tpu.dimension_semantics<parallel>], iteration_bounds = array<i64: 2>, scalar_prefetch = 0 : i64, scratch_operands = 0 : i64, tpu.core_type = #tpu.core_type<tc>, window_params = [{transform_indices = @transform_0, window_bounds = array<i64: 1, 8, 96>}, {transform_indices = @transform_1, window_bounds = array<i64: 1, 1, 8>}, {transform_indices = @transform_2, window_bounds = array<i64: 1, 8, 32>}]} {
    %c0 = arith.constant 0 : index
    %c0_0 = arith.constant 0 : index
    %c0_1 = arith.constant 0 : index
    %0 = vector.load %arg1[%c0, %c0_0, %c0_1] : memref<1x8x96xf32, #tpu.memory_space<vmem>>, vector<1x8x96xf32>
    %1 = vector.shape_cast %0 : vector<1x8x96xf32> to vector<8x96xf32>
    %2 = vector.extract_strided_slice %1 {offsets = [0, 0], sizes = [8, 32], strides = [1, 1]} : vector<8x96xf32> to vector<8x32xf32>
    %3 = vector.extract_strided_slice %1 {offsets = [0, 32], sizes = [8, 32], strides = [1, 1]} : vector<8x96xf32> to vector<8x32xf32>
    %4 = vector.extract_strided_slice %1 {offsets = [0, 64], sizes = [8, 32], strides = [1, 1]} : vector<8x96xf32> to vector<8x32xf32>
    %c0_2 = arith.constant 0 : index
    %c0_3 = arith.constant 0 : index
    %c0_4 = arith.constant 0 : index
    %5 = vector.load %arg2[%c0_2, %c0_3, %c0_4] : memref<1x1x8xi32, #tpu.memory_space<vmem>>, vector<1x1x8xi32>
    %6 = vector.shape_cast %5 : vector<1x1x8xi32> to vector<1x8xi32>
    %c0_i32 = arith.constant 0 : i32
    %7 = vector.broadcast %c0_i32 : i32 to vector<1x8xi32>
    %8 = arith.cmpi sgt, %6, %7 : vector<1x8xi32>
    %9 = tpu.iota {dimensions = array<i32: 0>} : vector<8x8xi32>
    %10 = tpu.iota {dimensions = array<i32: 1>} : vector<8x8xi32>
    %11 = arith.cmpi sle, %10, %9 : vector<8x8xi32>
    %12 = vector.broadcast %8 : vector<1x8xi1> to vector<8x8xi1>
    %13 = arith.andi %12, %11 : vector<8x8xi1>
    %14 = arith.truncf %2 : vector<8x32xf32> to vector<8x32xbf16>
    %15 = arith.truncf %3 : vector<8x32xf32> to vector<8x32xbf16>
    %16 = arith.truncf %4 : vector<8x32xf32> to vector<8x32xbf16>
    %17 = vector.extract_strided_slice %14 {offsets = [0, 0], sizes = [8, 8], strides = [1, 1]} : vector<8x32xbf16> to vector<8x8xbf16>
    %18 = vector.extract_strided_slice %15 {offsets = [0, 0], sizes = [8, 8], strides = [1, 1]} : vector<8x32xbf16> to vector<8x8xbf16>
    %19 = tpu.transpose %18, [1, 0] : vector<8x8xbf16> -> vector<8x8xbf16>
    %cst = arith.constant dense<0.000000e+00> : vector<8x8xf32>
    %20 = tpu.matmul %17, %19, %cst {dimension_numbers = #tpu.dot_dimension_numbers<[1], [0], [0], [1], [0, 0, 1, 1], [], []>} : vector<8x8xbf16>, vector<8x8xbf16>, vector<8x8xf32> -> vector<8x8xf32>
    %cst_5 = arith.constant 0.353553385 : f32
    %21 = vector.broadcast %cst_5 : f32 to vector<8x8xf32>
    %22 = arith.mulf %20, %21 : vector<8x8xf32>
    %cst_6 = arith.constant -1.000000e+09 : f32
    %23 = vector.broadcast %cst_6 : f32 to vector<8x8xf32>
    %24 = arith.select %13, %22, %23 : vector<8x8xi1>, vector<8x8xf32>
    %cst_7 = arith.constant dense<0xFF800000> : vector<8xf32>
    %25 = vector.multi_reduction <maximumf>, %24, %cst_7 [1] : vector<8x8xf32> to vector<8xf32>
    %26 = vector.shape_cast %25 : vector<8xf32> to vector<8x1xf32>
    %27 = vector.broadcast %26 : vector<8x1xf32> to vector<8x8xf32>
    %28 = arith.subf %24, %27 : vector<8x8xf32>
    %29 = math.exp %28 : vector<8x8xf32>
    %cst_8 = arith.constant dense<0.000000e+00> : vector<8xf32>
    %30 = vector.multi_reduction <add>, %29, %cst_8 [1] : vector<8x8xf32> to vector<8xf32>
    %31 = vector.shape_cast %30 : vector<8xf32> to vector<8x1xf32>
    %32 = tpu.reciprocal %31 {approx = true} : vector<8x1xf32> -> vector<8x1xf32>
    %33 = vector.broadcast %32 : vector<8x1xf32> to vector<8x8xf32>
    %34 = arith.mulf %29, %33 : vector<8x8xf32>
    %35 = arith.truncf %34 : vector<8x8xf32> to vector<8x8xbf16>
    %36 = vector.extract_strided_slice %16 {offsets = [0, 0], sizes = [8, 8], strides = [1, 1]} : vector<8x32xbf16> to vector<8x8xbf16>
    %cst_9 = arith.constant dense<0.000000e+00> : vector<8x8xf32>
    %37 = tpu.matmul %35, %36, %cst_9 {dimension_numbers = #tpu.dot_dimension_numbers<[1], [0], [0], [1], [0, 0, 1, 1], [], []>} : vector<8x8xbf16>, vector<8x8xbf16>, vector<8x8xf32> -> vector<8x8xf32>
    %38 = vector.extract_strided_slice %14 {offsets = [0, 8], sizes = [8, 8], strides = [1, 1]} : vector<8x32xbf16> to vector<8x8xbf16>
    %39 = vector.extract_strided_slice %15 {offsets = [0, 8], sizes = [8, 8], strides = [1, 1]} : vector<8x32xbf16> to vector<8x8xbf16>
    %40 = tpu.transpose %39, [1, 0] : vector<8x8xbf16> -> vector<8x8xbf16>
    %cst_10 = arith.constant dense<0.000000e+00> : vector<8x8xf32>
    %41 = tpu.matmul %38, %40, %cst_10 {dimension_numbers = #tpu.dot_dimension_numbers<[1], [0], [0], [1], [0, 0, 1, 1], [], []>} : vector<8x8xbf16>, vector<8x8xbf16>, vector<8x8xf32> -> vector<8x8xf32>
    %cst_11 = arith.constant 0.353553385 : f32
    %42 = vector.broadcast %cst_11 : f32 to vector<8x8xf32>
    %43 = arith.mulf %41, %42 : vector<8x8xf32>
    %cst_12 = arith.constant -1.000000e+09 : f32
    %44 = vector.broadcast %cst_12 : f32 to vector<8x8xf32>
    %45 = arith.select %13, %43, %44 : vector<8x8xi1>, vector<8x8xf32>
    %cst_13 = arith.constant dense<0xFF800000> : vector<8xf32>
    %46 = vector.multi_reduction <maximumf>, %45, %cst_13 [1] : vector<8x8xf32> to vector<8xf32>
    %47 = vector.shape_cast %46 : vector<8xf32> to vector<8x1xf32>
    %48 = vector.broadcast %47 : vector<8x1xf32> to vector<8x8xf32>
    %49 = arith.subf %45, %48 : vector<8x8xf32>
    %50 = math.exp %49 : vector<8x8xf32>
    %cst_14 = arith.constant dense<0.000000e+00> : vector<8xf32>
    %51 = vector.multi_reduction <add>, %50, %cst_14 [1] : vector<8x8xf32> to vector<8xf32>
    %52 = vector.shape_cast %51 : vector<8xf32> to vector<8x1xf32>
    %53 = tpu.reciprocal %52 {approx = true} : vector<8x1xf32> -> vector<8x1xf32>
    %54 = vector.broadcast %53 : vector<8x1xf32> to vector<8x8xf32>
    %55 = arith.mulf %50, %54 : vector<8x8xf32>
    %56 = arith.truncf %55 : vector<8x8xf32> to vector<8x8xbf16>
    %57 = vector.extract_strided_slice %16 {offsets = [0, 8], sizes = [8, 8], strides = [1, 1]} : vector<8x32xbf16> to vector<8x8xbf16>
    %cst_15 = arith.constant dense<0.000000e+00> : vector<8x8xf32>
    %58 = tpu.matmul %56, %57, %cst_15 {dimension_numbers = #tpu.dot_dimension_numbers<[1], [0], [0], [1], [0, 0, 1, 1], [], []>} : vector<8x8xbf16>, vector<8x8xbf16>, vector<8x8xf32> -> vector<8x8xf32>
    %59 = vector.extract_strided_slice %14 {offsets = [0, 16], sizes = [8, 8], strides = [1, 1]} : vector<8x32xbf16> to vector<8x8xbf16>
    %60 = vector.extract_strided_slice %15 {offsets = [0, 16], sizes = [8, 8], strides = [1, 1]} : vector<8x32xbf16> to vector<8x8xbf16>
    %61 = tpu.transpose %60, [1, 0] : vector<8x8xbf16> -> vector<8x8xbf16>
    %cst_16 = arith.constant dense<0.000000e+00> : vector<8x8xf32>
    %62 = tpu.matmul %59, %61, %cst_16 {dimension_numbers = #tpu.dot_dimension_numbers<[1], [0], [0], [1], [0, 0, 1, 1], [], []>} : vector<8x8xbf16>, vector<8x8xbf16>, vector<8x8xf32> -> vector<8x8xf32>
    %cst_17 = arith.constant 0.353553385 : f32
    %63 = vector.broadcast %cst_17 : f32 to vector<8x8xf32>
    %64 = arith.mulf %62, %63 : vector<8x8xf32>
    %cst_18 = arith.constant -1.000000e+09 : f32
    %65 = vector.broadcast %cst_18 : f32 to vector<8x8xf32>
    %66 = arith.select %13, %64, %65 : vector<8x8xi1>, vector<8x8xf32>
    %cst_19 = arith.constant dense<0xFF800000> : vector<8xf32>
    %67 = vector.multi_reduction <maximumf>, %66, %cst_19 [1] : vector<8x8xf32> to vector<8xf32>
    %68 = vector.shape_cast %67 : vector<8xf32> to vector<8x1xf32>
    %69 = vector.broadcast %68 : vector<8x1xf32> to vector<8x8xf32>
    %70 = arith.subf %66, %69 : vector<8x8xf32>
    %71 = math.exp %70 : vector<8x8xf32>
    %cst_20 = arith.constant dense<0.000000e+00> : vector<8xf32>
    %72 = vector.multi_reduction <add>, %71, %cst_20 [1] : vector<8x8xf32> to vector<8xf32>
    %73 = vector.shape_cast %72 : vector<8xf32> to vector<8x1xf32>
    %74 = tpu.reciprocal %73 {approx = true} : vector<8x1xf32> -> vector<8x1xf32>
    %75 = vector.broadcast %74 : vector<8x1xf32> to vector<8x8xf32>
    %76 = arith.mulf %71, %75 : vector<8x8xf32>
    %77 = arith.truncf %76 : vector<8x8xf32> to vector<8x8xbf16>
    %78 = vector.extract_strided_slice %16 {offsets = [0, 16], sizes = [8, 8], strides = [1, 1]} : vector<8x32xbf16> to vector<8x8xbf16>
    %cst_21 = arith.constant dense<0.000000e+00> : vector<8x8xf32>
    %79 = tpu.matmul %77, %78, %cst_21 {dimension_numbers = #tpu.dot_dimension_numbers<[1], [0], [0], [1], [0, 0, 1, 1], [], []>} : vector<8x8xbf16>, vector<8x8xbf16>, vector<8x8xf32> -> vector<8x8xf32>
    %80 = vector.extract_strided_slice %14 {offsets = [0, 24], sizes = [8, 8], strides = [1, 1]} : vector<8x32xbf16> to vector<8x8xbf16>
    %81 = vector.extract_strided_slice %15 {offsets = [0, 24], sizes = [8, 8], strides = [1, 1]} : vector<8x32xbf16> to vector<8x8xbf16>
    %82 = tpu.transpose %81, [1, 0] : vector<8x8xbf16> -> vector<8x8xbf16>
    %cst_22 = arith.constant dense<0.000000e+00> : vector<8x8xf32>
    %83 = tpu.matmul %80, %82, %cst_22 {dimension_numbers = #tpu.dot_dimension_numbers<[1], [0], [0], [1], [0, 0, 1, 1], [], []>} : vector<8x8xbf16>, vector<8x8xbf16>, vector<8x8xf32> -> vector<8x8xf32>
    %cst_23 = arith.constant 0.353553385 : f32
    %84 = vector.broadcast %cst_23 : f32 to vector<8x8xf32>
    %85 = arith.mulf %83, %84 : vector<8x8xf32>
    %cst_24 = arith.constant -1.000000e+09 : f32
    %86 = vector.broadcast %cst_24 : f32 to vector<8x8xf32>
    %87 = arith.select %13, %85, %86 : vector<8x8xi1>, vector<8x8xf32>
    %cst_25 = arith.constant dense<0xFF800000> : vector<8xf32>
    %88 = vector.multi_reduction <maximumf>, %87, %cst_25 [1] : vector<8x8xf32> to vector<8xf32>
    %89 = vector.shape_cast %88 : vector<8xf32> to vector<8x1xf32>
    %90 = vector.broadcast %89 : vector<8x1xf32> to vector<8x8xf32>
    %91 = arith.subf %87, %90 : vector<8x8xf32>
    %92 = math.exp %91 : vector<8x8xf32>
    %cst_26 = arith.constant dense<0.000000e+00> : vector<8xf32>
    %93 = vector.multi_reduction <add>, %92, %cst_26 [1] : vector<8x8xf32> to vector<8xf32>
    %94 = vector.shape_cast %93 : vector<8xf32> to vector<8x1xf32>
    %95 = tpu.reciprocal %94 {approx = true} : vector<8x1xf32> -> vector<8x1xf32>
    %96 = vector.broadcast %95 : vector<8x1xf32> to vector<8x8xf32>
    %97 = arith.mulf %92, %96 : vector<8x8xf32>
    %98 = arith.truncf %97 : vector<8x8xf32> to vector<8x8xbf16>
    %99 = vector.extract_strided_slice %16 {offsets = [0, 24], sizes = [8, 8], strides = [1, 1]} : vector<8x32xbf16> to vector<8x8xbf16>
    %cst_27 = arith.constant dense<0.000000e+00> : vector<8x8xf32>
    %100 = tpu.matmul %98, %99, %cst_27 {dimension_numbers = #tpu.dot_dimension_numbers<[1], [0], [0], [1], [0, 0, 1, 1], [], []>} : vector<8x8xbf16>, vector<8x8xbf16>, vector<8x8xf32> -> vector<8x8xf32>
    %101 = tpu.concatenate %37, %58, %79, %100 in 1 : vector<8x8xf32>, vector<8x8xf32>, vector<8x8xf32>, vector<8x8xf32> -> vector<8x32xf32>
    %c0_28 = arith.constant 0 : index
    %c0_29 = arith.constant 0 : index
    %c0_30 = arith.constant 0 : index
    %102 = vector.load %arg3[%c0_28, %c0_29, %c0_30] : memref<1x8x32xf32, #tpu.memory_space<vmem>>, vector<1x8x32xf32>
    %103 = vector.shape_cast %102 : vector<1x8x32xf32> to vector<8x32xf32>
    %104 = vector.shape_cast %101 : vector<8x32xf32> to vector<1x8x32xf32>
    tpu.vector_store %arg3[%c0_28, %c0_29, %c0_30], %104 {strides = array<i32>} : memref<1x8x32xf32, #tpu.memory_space<vmem>>, vector<1x8x32xf32>,
    return
  }
  func.func @transform_0(%arg0: i32) -> (i32, i32, i32) {
    %c0_i32 = arith.constant 0 : i32
    %c0_i32_0 = arith.constant 0 : i32
    %c0_i32_1 = arith.constant 0 : i32
    return %arg0, %c0_i32, %c0_i32_0 : i32, i32, i32
  }
  func.func @transform_1(%arg0: i32) -> (i32, i32, i32) {
    %c0_i32 = arith.constant 0 : i32
    %c0_i32_0 = arith.constant 0 : i32
    %c0_i32_1 = arith.constant 0 : i32
    return %arg0, %c0_i32, %c0_i32_0 : i32, i32, i32
  }
  func.func @transform_2(%arg0: i32) -> (i32, i32, i32) {
    %c0_i32 = arith.constant 0 : i32
    %c0_i32_0 = arith.constant 0 : i32
    %c0_i32_1 = arith.constant 0 : i32
    return %arg0, %c0_i32, %c0_i32_0 : i32, i32, i32
  }
}

module attributes {stable_mosaic.version = 11 : i64} {
  func.func @_cross_attn_kernel(%arg0: i32, %arg1: memref<1x8x32xf32, #tpu.memory_space<vmem>>, %arg2: memref<1x8x64xf32, #tpu.memory_space<vmem>>, %arg3: memref<1x1x8xi32, #tpu.memory_space<vmem>>, %arg4: memref<1x8x32xf32, #tpu.memory_space<vmem>>) attributes {dimension_semantics = [#tpu.dimension_semantics<parallel>], iteration_bounds = array<i64: 2>, scalar_prefetch = 0 : i64, scratch_operands = 0 : i64, tpu.core_type = #tpu.core_type<tc>, window_params = [{transform_indices = @transform_0, window_bounds = array<i64: 1, 8, 32>}, {transform_indices = @transform_1, window_bounds = array<i64: 1, 8, 64>}, {transform_indices = @transform_2, window_bounds = array<i64: 1, 1, 8>}, {transform_indices = @transform_3, window_bounds = array<i64: 1, 8, 32>}]} {
    %c0 = arith.constant 0 : index
    %c0_0 = arith.constant 0 : index
    %c0_1 = arith.constant 0 : index
    %0 = vector.load %arg1[%c0, %c0_0, %c0_1] : memref<1x8x32xf32, #tpu.memory_space<vmem>>, vector<1x8x32xf32>
    %1 = vector.shape_cast %0 : vector<1x8x32xf32> to vector<8x32xf32>
    %c0_2 = arith.constant 0 : index
    %c0_3 = arith.constant 0 : index
    %c0_4 = arith.constant 0 : index
    %2 = vector.load %arg2[%c0_2, %c0_3, %c0_4] : memref<1x8x64xf32, #tpu.memory_space<vmem>>, vector<1x8x64xf32>
    %3 = vector.shape_cast %2 : vector<1x8x64xf32> to vector<8x64xf32>
    %4 = vector.extract_strided_slice %3 {offsets = [0, 0], sizes = [8, 32], strides = [1, 1]} : vector<8x64xf32> to vector<8x32xf32>
    %5 = vector.extract_strided_slice %3 {offsets = [0, 32], sizes = [8, 32], strides = [1, 1]} : vector<8x64xf32> to vector<8x32xf32>
    %c0_5 = arith.constant 0 : index
    %c0_6 = arith.constant 0 : index
    %c0_7 = arith.constant 0 : index
    %6 = vector.load %arg3[%c0_5, %c0_6, %c0_7] : memref<1x1x8xi32, #tpu.memory_space<vmem>>, vector<1x1x8xi32>
    %7 = vector.shape_cast %6 : vector<1x1x8xi32> to vector<1x8xi32>
    %c0_i32 = arith.constant 0 : i32
    %8 = vector.broadcast %c0_i32 : i32 to vector<1x8xi32>
    %9 = arith.cmpi sgt, %7, %8 : vector<1x8xi32>
    %10 = arith.truncf %1 : vector<8x32xf32> to vector<8x32xbf16>
    %11 = arith.truncf %4 : vector<8x32xf32> to vector<8x32xbf16>
    %12 = arith.truncf %5 : vector<8x32xf32> to vector<8x32xbf16>
    %13 = vector.extract_strided_slice %10 {offsets = [0, 0], sizes = [8, 8], strides = [1, 1]} : vector<8x32xbf16> to vector<8x8xbf16>
    %14 = vector.extract_strided_slice %11 {offsets = [0, 0], sizes = [8, 8], strides = [1, 1]} : vector<8x32xbf16> to vector<8x8xbf16>
    %15 = tpu.transpose %14, [1, 0] : vector<8x8xbf16> -> vector<8x8xbf16>
    %cst = arith.constant dense<0.000000e+00> : vector<8x8xf32>
    %16 = tpu.matmul %13, %15, %cst {dimension_numbers = #tpu.dot_dimension_numbers<[1], [0], [0], [1], [0, 0, 1, 1], [], []>} : vector<8x8xbf16>, vector<8x8xbf16>, vector<8x8xf32> -> vector<8x8xf32>
    %cst_8 = arith.constant 0.353553385 : f32
    %17 = vector.broadcast %cst_8 : f32 to vector<8x8xf32>
    %18 = arith.mulf %16, %17 : vector<8x8xf32>
    %cst_9 = arith.constant -1.000000e+09 : f32
    %19 = vector.shape_cast %9 : vector<1x8xi1> to vector<1x8xi1>
    %20 = vector.broadcast %19 : vector<1x8xi1> to vector<8x8xi1>
    %21 = vector.broadcast %cst_9 : f32 to vector<8x8xf32>
    %22 = arith.select %20, %18, %21 : vector<8x8xi1>, vector<8x8xf32>
    %cst_10 = arith.constant dense<0xFF800000> : vector<8xf32>
    %23 = vector.multi_reduction <maximumf>, %22, %cst_10 [1] : vector<8x8xf32> to vector<8xf32>
    %24 = vector.shape_cast %23 : vector<8xf32> to vector<8x1xf32>
    %25 = vector.broadcast %24 : vector<8x1xf32> to vector<8x8xf32>
    %26 = arith.subf %22, %25 : vector<8x8xf32>
    %27 = math.exp %26 : vector<8x8xf32>
    %cst_11 = arith.constant dense<0.000000e+00> : vector<8xf32>
    %28 = vector.multi_reduction <add>, %27, %cst_11 [1] : vector<8x8xf32> to vector<8xf32>
    %29 = vector.shape_cast %28 : vector<8xf32> to vector<8x1xf32>
    %30 = tpu.reciprocal %29 {approx = true} : vector<8x1xf32> -> vector<8x1xf32>
    %31 = vector.broadcast %30 : vector<8x1xf32> to vector<8x8xf32>
    %32 = arith.mulf %27, %31 : vector<8x8xf32>
    %33 = arith.truncf %32 : vector<8x8xf32> to vector<8x8xbf16>
    %34 = vector.extract_strided_slice %12 {offsets = [0, 0], sizes = [8, 8], strides = [1, 1]} : vector<8x32xbf16> to vector<8x8xbf16>
    %cst_12 = arith.constant dense<0.000000e+00> : vector<8x8xf32>
    %35 = tpu.matmul %33, %34, %cst_12 {dimension_numbers = #tpu.dot_dimension_numbers<[1], [0], [0], [1], [0, 0, 1, 1], [], []>} : vector<8x8xbf16>, vector<8x8xbf16>, vector<8x8xf32> -> vector<8x8xf32>
    %36 = vector.extract_strided_slice %10 {offsets = [0, 8], sizes = [8, 8], strides = [1, 1]} : vector<8x32xbf16> to vector<8x8xbf16>
    %37 = vector.extract_strided_slice %11 {offsets = [0, 8], sizes = [8, 8], strides = [1, 1]} : vector<8x32xbf16> to vector<8x8xbf16>
    %38 = tpu.transpose %37, [1, 0] : vector<8x8xbf16> -> vector<8x8xbf16>
    %cst_13 = arith.constant dense<0.000000e+00> : vector<8x8xf32>
    %39 = tpu.matmul %36, %38, %cst_13 {dimension_numbers = #tpu.dot_dimension_numbers<[1], [0], [0], [1], [0, 0, 1, 1], [], []>} : vector<8x8xbf16>, vector<8x8xbf16>, vector<8x8xf32> -> vector<8x8xf32>
    %cst_14 = arith.constant 0.353553385 : f32
    %40 = vector.broadcast %cst_14 : f32 to vector<8x8xf32>
    %41 = arith.mulf %39, %40 : vector<8x8xf32>
    %cst_15 = arith.constant -1.000000e+09 : f32
    %42 = vector.shape_cast %9 : vector<1x8xi1> to vector<1x8xi1>
    %43 = vector.broadcast %42 : vector<1x8xi1> to vector<8x8xi1>
    %44 = vector.broadcast %cst_15 : f32 to vector<8x8xf32>
    %45 = arith.select %43, %41, %44 : vector<8x8xi1>, vector<8x8xf32>
    %cst_16 = arith.constant dense<0xFF800000> : vector<8xf32>
    %46 = vector.multi_reduction <maximumf>, %45, %cst_16 [1] : vector<8x8xf32> to vector<8xf32>
    %47 = vector.shape_cast %46 : vector<8xf32> to vector<8x1xf32>
    %48 = vector.broadcast %47 : vector<8x1xf32> to vector<8x8xf32>
    %49 = arith.subf %45, %48 : vector<8x8xf32>
    %50 = math.exp %49 : vector<8x8xf32>
    %cst_17 = arith.constant dense<0.000000e+00> : vector<8xf32>
    %51 = vector.multi_reduction <add>, %50, %cst_17 [1] : vector<8x8xf32> to vector<8xf32>
    %52 = vector.shape_cast %51 : vector<8xf32> to vector<8x1xf32>
    %53 = tpu.reciprocal %52 {approx = true} : vector<8x1xf32> -> vector<8x1xf32>
    %54 = vector.broadcast %53 : vector<8x1xf32> to vector<8x8xf32>
    %55 = arith.mulf %50, %54 : vector<8x8xf32>
    %56 = arith.truncf %55 : vector<8x8xf32> to vector<8x8xbf16>
    %57 = vector.extract_strided_slice %12 {offsets = [0, 8], sizes = [8, 8], strides = [1, 1]} : vector<8x32xbf16> to vector<8x8xbf16>
    %cst_18 = arith.constant dense<0.000000e+00> : vector<8x8xf32>
    %58 = tpu.matmul %56, %57, %cst_18 {dimension_numbers = #tpu.dot_dimension_numbers<[1], [0], [0], [1], [0, 0, 1, 1], [], []>} : vector<8x8xbf16>, vector<8x8xbf16>, vector<8x8xf32> -> vector<8x8xf32>
    %59 = vector.extract_strided_slice %10 {offsets = [0, 16], sizes = [8, 8], strides = [1, 1]} : vector<8x32xbf16> to vector<8x8xbf16>
    %60 = vector.extract_strided_slice %11 {offsets = [0, 16], sizes = [8, 8], strides = [1, 1]} : vector<8x32xbf16> to vector<8x8xbf16>
    %61 = tpu.transpose %60, [1, 0] : vector<8x8xbf16> -> vector<8x8xbf16>
    %cst_19 = arith.constant dense<0.000000e+00> : vector<8x8xf32>
    %62 = tpu.matmul %59, %61, %cst_19 {dimension_numbers = #tpu.dot_dimension_numbers<[1], [0], [0], [1], [0, 0, 1, 1], [], []>} : vector<8x8xbf16>, vector<8x8xbf16>, vector<8x8xf32> -> vector<8x8xf32>
    %cst_20 = arith.constant 0.353553385 : f32
    %63 = vector.broadcast %cst_20 : f32 to vector<8x8xf32>
    %64 = arith.mulf %62, %63 : vector<8x8xf32>
    %cst_21 = arith.constant -1.000000e+09 : f32
    %65 = vector.shape_cast %9 : vector<1x8xi1> to vector<1x8xi1>
    %66 = vector.broadcast %65 : vector<1x8xi1> to vector<8x8xi1>
    %67 = vector.broadcast %cst_21 : f32 to vector<8x8xf32>
    %68 = arith.select %66, %64, %67 : vector<8x8xi1>, vector<8x8xf32>
    %cst_22 = arith.constant dense<0xFF800000> : vector<8xf32>
    %69 = vector.multi_reduction <maximumf>, %68, %cst_22 [1] : vector<8x8xf32> to vector<8xf32>
    %70 = vector.shape_cast %69 : vector<8xf32> to vector<8x1xf32>
    %71 = vector.broadcast %70 : vector<8x1xf32> to vector<8x8xf32>
    %72 = arith.subf %68, %71 : vector<8x8xf32>
    %73 = math.exp %72 : vector<8x8xf32>
    %cst_23 = arith.constant dense<0.000000e+00> : vector<8xf32>
    %74 = vector.multi_reduction <add>, %73, %cst_23 [1] : vector<8x8xf32> to vector<8xf32>
    %75 = vector.shape_cast %74 : vector<8xf32> to vector<8x1xf32>
    %76 = tpu.reciprocal %75 {approx = true} : vector<8x1xf32> -> vector<8x1xf32>
    %77 = vector.broadcast %76 : vector<8x1xf32> to vector<8x8xf32>
    %78 = arith.mulf %73, %77 : vector<8x8xf32>
    %79 = arith.truncf %78 : vector<8x8xf32> to vector<8x8xbf16>
    %80 = vector.extract_strided_slice %12 {offsets = [0, 16], sizes = [8, 8], strides = [1, 1]} : vector<8x32xbf16> to vector<8x8xbf16>
    %cst_24 = arith.constant dense<0.000000e+00> : vector<8x8xf32>
    %81 = tpu.matmul %79, %80, %cst_24 {dimension_numbers = #tpu.dot_dimension_numbers<[1], [0], [0], [1], [0, 0, 1, 1], [], []>} : vector<8x8xbf16>, vector<8x8xbf16>, vector<8x8xf32> -> vector<8x8xf32>
    %82 = vector.extract_strided_slice %10 {offsets = [0, 24], sizes = [8, 8], strides = [1, 1]} : vector<8x32xbf16> to vector<8x8xbf16>
    %83 = vector.extract_strided_slice %11 {offsets = [0, 24], sizes = [8, 8], strides = [1, 1]} : vector<8x32xbf16> to vector<8x8xbf16>
    %84 = tpu.transpose %83, [1, 0] : vector<8x8xbf16> -> vector<8x8xbf16>
    %cst_25 = arith.constant dense<0.000000e+00> : vector<8x8xf32>
    %85 = tpu.matmul %82, %84, %cst_25 {dimension_numbers = #tpu.dot_dimension_numbers<[1], [0], [0], [1], [0, 0, 1, 1], [], []>} : vector<8x8xbf16>, vector<8x8xbf16>, vector<8x8xf32> -> vector<8x8xf32>
    %cst_26 = arith.constant 0.353553385 : f32
    %86 = vector.broadcast %cst_26 : f32 to vector<8x8xf32>
    %87 = arith.mulf %85, %86 : vector<8x8xf32>
    %cst_27 = arith.constant -1.000000e+09 : f32
    %88 = vector.shape_cast %9 : vector<1x8xi1> to vector<1x8xi1>
    %89 = vector.broadcast %88 : vector<1x8xi1> to vector<8x8xi1>
    %90 = vector.broadcast %cst_27 : f32 to vector<8x8xf32>
    %91 = arith.select %89, %87, %90 : vector<8x8xi1>, vector<8x8xf32>
    %cst_28 = arith.constant dense<0xFF800000> : vector<8xf32>
    %92 = vector.multi_reduction <maximumf>, %91, %cst_28 [1] : vector<8x8xf32> to vector<8xf32>
    %93 = vector.shape_cast %92 : vector<8xf32> to vector<8x1xf32>
    %94 = vector.broadcast %93 : vector<8x1xf32> to vector<8x8xf32>
    %95 = arith.subf %91, %94 : vector<8x8xf32>
    %96 = math.exp %95 : vector<8x8xf32>
    %cst_29 = arith.constant dense<0.000000e+00> : vector<8xf32>
    %97 = vector.multi_reduction <add>, %96, %cst_29 [1] : vector<8x8xf32> to vector<8xf32>
    %98 = vector.shape_cast %97 : vector<8xf32> to vector<8x1xf32>
    %99 = tpu.reciprocal %98 {approx = true} : vector<8x1xf32> -> vector<8x1xf32>
    %100 = vector.broadcast %99 : vector<8x1xf32> to vector<8x8xf32>
    %101 = arith.mulf %96, %100 : vector<8x8xf32>
    %102 = arith.truncf %101 : vector<8x8xf32> to vector<8x8xbf16>
    %103 = vector.extract_strided_slice %12 {offsets = [0, 24], sizes = [8, 8], strides = [1, 1]} : vector<8x32xbf16> to vector<8x8xbf16>
    %cst_30 = arith.constant dense<0.000000e+00> : vector<8x8xf32>
    %104 = tpu.matmul %102, %103, %cst_30 {dimension_numbers = #tpu.dot_dimension_numbers<[1], [0], [0], [1], [0, 0, 1, 1], [], []>} : vector<8x8xbf16>, vector<8x8xbf16>, vector<8x8xf32> -> vector<8x8xf32>
    %105 = tpu.concatenate %35, %58, %81, %104 in 1 : vector<8x8xf32>, vector<8x8xf32>, vector<8x8xf32>, vector<8x8xf32> -> vector<8x32xf32>
    %c0_31 = arith.constant 0 : index
    %c0_32 = arith.constant 0 : index
    %c0_33 = arith.constant 0 : index
    %106 = vector.load %arg4[%c0_31, %c0_32, %c0_33] : memref<1x8x32xf32, #tpu.memory_space<vmem>>, vector<1x8x32xf32>
    %107 = vector.shape_cast %106 : vector<1x8x32xf32> to vector<8x32xf32>
    %108 = vector.shape_cast %105 : vector<8x32xf32> to vector<1x8x32xf32>
    tpu.vector_store %arg4[%c0_31, %c0_32, %c0_33], %108 {strides = array<i32>} : memref<1x8x32xf32, #tpu.memory_space<vmem>>, vector<1x8x32xf32>,
    return
  }
  func.func @transform_0(%arg0: i32) -> (i32, i32, i32) {
    %c0_i32 = arith.constant 0 : i32
    %c0_i32_0 = arith.constant 0 : i32
    %c0_i32_1 = arith.constant 0 : i32
    return %arg0, %c0_i32, %c0_i32_0 : i32, i32, i32
  }
  func.func @transform_1(%arg0: i32) -> (i32, i32, i32) {
    %c0_i32 = arith.constant 0 : i32
    %c0_i32_0 = arith.constant 0 : i32
    %c0_i32_1 = arith.constant 0 : i32
    return %arg0, %c0_i32, %c0_i32_0 : i32, i32, i32
  }
  func.func @transform_2(%arg0: i32) -> (i32, i32, i32) {
    %c0_i32 = arith.constant 0 : i32
    %c0_i32_0 = arith.constant 0 : i32
    %c0_i32_1 = arith.constant 0 : i32
    return %arg0, %c0_i32, %c0_i32_0 : i32, i32, i32
  }
  func.func @transform_3(%arg0: i32) -> (i32, i32, i32) {
    %c0_i32 = arith.constant 0 : i32
    %c0_i32_0 = arith.constant 0 : i32
    %c0_i32_1 = arith.constant 0 : i32
    return %arg0, %c0_i32, %c0_i32_0 : i32, i32, i32
  }
}

module attributes {stable_mosaic.version = 11 : i64} {
  func.func @_linear_kernel(%arg0: i32, %arg1: i32, %arg2: i32, %arg3: memref<16x32xf32, #tpu.memory_space<vmem>>, %arg4: memref<32x32xbf16, #tpu.memory_space<vmem>>, %arg5: memref<1x32xf32, #tpu.memory_space<vmem>>, %arg6: memref<16x32xf32, #tpu.memory_space<vmem>>, %arg7: memref<16x32xf32, #tpu.memory_space<vmem>>) attributes {dimension_semantics = [#tpu.dimension_semantics<parallel>, #tpu.dimension_semantics<parallel>, #tpu.dimension_semantics<arbitrary>], iteration_bounds = array<i64: 1, 1, 1>, scalar_prefetch = 0 : i64, scratch_operands = 1 : i64, tpu.core_type = #tpu.core_type<tc>, window_params = [{transform_indices = @transform_0, window_bounds = array<i64: 16, 32>}, {transform_indices = @transform_1, window_bounds = array<i64: 32, 32>}, {transform_indices = @transform_2, window_bounds = array<i64: 1, 32>}, {transform_indices = @transform_3, window_bounds = array<i64: 16, 32>}]} {
    %c0_i32 = arith.constant 0 : i32
    %0 = arith.cmpi eq, %arg2, %c0_i32 : i32
    %1 = arith.extui %0 : i1 to i32
    %c0_i32_0 = arith.constant 0 : i32
    %2 = arith.cmpi ne, %1, %c0_i32_0 : i32
    scf.if %2 {
      %cst_10 = arith.constant 0.000000e+00 : f32
      %13 = vector.broadcast %cst_10 : f32 to vector<16x32xf32>
      %c0_11 = arith.constant 0 : index
      %c0_12 = arith.constant 0 : index
      %14 = vector.load %arg7[%c0_11, %c0_12] : memref<16x32xf32, #tpu.memory_space<vmem>>, vector<16x32xf32>
      tpu.vector_store %arg7[%c0_11, %c0_12], %13 {strides = array<i32>} : memref<16x32xf32, #tpu.memory_space<vmem>>, vector<16x32xf32>,
    } else {
    }
    %c0 = arith.constant 0 : index
    %c0_1 = arith.constant 0 : index
    %3 = vector.load %arg7[%c0, %c0_1] : memref<16x32xf32, #tpu.memory_space<vmem>>, vector<16x32xf32>
    %c0_2 = arith.constant 0 : index
    %c0_3 = arith.constant 0 : index
    %4 = vector.load %arg3[%c0_2, %c0_3] : memref<16x32xf32, #tpu.memory_space<vmem>>, vector<16x32xf32>
    %5 = arith.truncf %4 : vector<16x32xf32> to vector<16x32xbf16>
    %c0_4 = arith.constant 0 : index
    %c0_5 = arith.constant 0 : index
    %6 = vector.load %arg4[%c0_4, %c0_5] : memref<32x32xbf16, #tpu.memory_space<vmem>>, vector<32x32xbf16>
    %cst = arith.constant dense<0.000000e+00> : vector<16x32xf32>
    %7 = tpu.matmul %5, %6, %cst {dimension_numbers = #tpu.dot_dimension_numbers<[1], [0], [0], [1], [0, 0, 1, 1], [], []>} : vector<16x32xbf16>, vector<32x32xbf16>, vector<16x32xf32> -> vector<16x32xf32>
    %8 = arith.addf %3, %7 : vector<16x32xf32>
    %c0_6 = arith.constant 0 : index
    %c0_7 = arith.constant 0 : index
    %9 = vector.load %arg7[%c0_6, %c0_7] : memref<16x32xf32, #tpu.memory_space<vmem>>, vector<16x32xf32>
    tpu.vector_store %arg7[%c0_6, %c0_7], %8 {strides = array<i32>} : memref<16x32xf32, #tpu.memory_space<vmem>>, vector<16x32xf32>,
    %c0_i32_8 = arith.constant 0 : i32
    %10 = arith.cmpi eq, %arg2, %c0_i32_8 : i32
    %11 = arith.extui %10 : i1 to i32
    %c0_i32_9 = arith.constant 0 : i32
    %12 = arith.cmpi ne, %11, %c0_i32_9 : i32
    scf.if %12 {
      %c0_10 = arith.constant 0 : index
      %c0_11 = arith.constant 0 : index
      %13 = vector.load %arg7[%c0_10, %c0_11] : memref<16x32xf32, #tpu.memory_space<vmem>>, vector<16x32xf32>
      %c0_12 = arith.constant 0 : index
      %c0_13 = arith.constant 0 : index
      %14 = vector.load %arg5[%c0_12, %c0_13] : memref<1x32xf32, #tpu.memory_space<vmem>>, vector<1x32xf32>
      %15 = vector.broadcast %14 : vector<1x32xf32> to vector<16x32xf32>
      %16 = arith.addf %13, %15 : vector<16x32xf32>
      %c0_14 = arith.constant 0 : index
      %c0_15 = arith.constant 0 : index
      %17 = vector.load %arg6[%c0_14, %c0_15] : memref<16x32xf32, #tpu.memory_space<vmem>>, vector<16x32xf32>
      tpu.vector_store %arg6[%c0_14, %c0_15], %16 {strides = array<i32>} : memref<16x32xf32, #tpu.memory_space<vmem>>, vector<16x32xf32>,
    } else {
    }
    return
  }
  func.func @transform_0(%arg0: i32, %arg1: i32, %arg2: i32) -> (i32, i32) {
    %c0_i32 = arith.constant 0 : i32
    return %arg0, %arg2 : i32, i32
  }
  func.func @transform_1(%arg0: i32, %arg1: i32, %arg2: i32) -> (i32, i32) {
    %c0_i32 = arith.constant 0 : i32
    return %arg2, %arg1 : i32, i32
  }
  func.func @transform_2(%arg0: i32, %arg1: i32, %arg2: i32) -> (i32, i32) {
    %c0_i32 = arith.constant 0 : i32
    %c0_i32_0 = arith.constant 0 : i32
    return %c0_i32, %arg1 : i32, i32
  }
  func.func @transform_3(%arg0: i32, %arg1: i32, %arg2: i32) -> (i32, i32) {
    %c0_i32 = arith.constant 0 : i32
    return %arg0, %arg1 : i32, i32
  }
}

</mosaic_0001>

<llo_original>
// kernel: _lambda_.44
$region0: #{_lambda_.44}
  #allocation0 [shape = 'u32[]', space=smem, size = 0x4, offset = 0x4, fixed_abs, tag = 'smem constant byte address 0x4 - core index']
  #allocation1 [shape = 'u32[72,128]{1,0:T(1,128)}', space=vmem, size = 0x9000, scoped, tag = 'internal scratch']
  #allocation2 [shape = 'f32[16,32]{1,0:T(8,128)}', space=vmem, size = 0x2000, scoped, tag = 'scratch operand']
  %s0 = inlined_call_operand.vmem [shape: f32[16,32], index: 0, kind: input, shape index: {}]
  %s1 = inlined_call_operand.vmem [shape: bf16[32,32], index: 1, kind: input, shape index: {}]
  %s2 = inlined_call_operand.vmem [shape: f32[1,32], index: 2, kind: input, shape index: {}]
  %s3 = inlined_call_operand.vmem [shape: f32[16,32], index: 3, kind: output, shape index: {}]
  %s4 = sld [smem:[#allocation0]]
  $region30: #{_lambda_.44} parent=0
    _
  %s6 = ssub.s32 1, %s4
  %s7 = scalar_select 0, %s6, %s4
  // Predicated region
  $region2: #{_lambda_.44} parent=0 // pred_check
    _
  $region3: #{_lambda_.44} parent=0 // pred_check_branch
    %9 = sbr.rel (0) target = $region5
  $region4: #{_lambda_.44} parent=0 // pred_region
    _
  $region5: #{_lambda_.44} parent=0 // pred_fallthru
    _
  // Predicated region
  $region6: #{_lambda_.44} parent=0 // pred_check
    _
  $region7: #{_lambda_.44} parent=0 // pred_check_branch
    %11 = sbr.rel (0) target = $region9
  $region8: #{_lambda_.44} parent=0 // pred_region
    _
  $region9: #{_lambda_.44} parent=0 // pred_fallthru
    _
  // Predicated region
  $region10: #{_lambda_.44} parent=0 // pred_check
    _
  $region11: #{_lambda_.44} parent=0 // pred_check_branch
    %13 = sbr.rel (0) target = $region13
  $region12: #{_lambda_.44} parent=0 // pred_region
    _
  $region13: #{_lambda_.44} parent=0 // pred_fallthru
    _
  %p15 = scmp.eq.s32.totalorder 0, 0
  // Predicated region
  $region14: #{_lambda_.44} parent=0 // pred_check
    %p16 = pneg %p15
  $region15: #{_lambda_.44} parent=0 // pred_check_branch
    %18 = sbr.rel (%p16) target = $region17
  $region16: #{_lambda_.44} parent=0 // pred_region
    %vm19 = vcmask 261120
    %20 = vst.msk [vmem:[#allocation2] sm:$0xff] %vm19, 0.0
    %21 = vst.msk [vmem:[#allocation2 + $0x8] sm:$0xff] %vm19, 0.0
  $region17: #{_lambda_.44} parent=0 // pred_fallthru
    _
  %v22 = vld [vmem:[#allocation2] sm:$0xff]
  %v23 = vld [vmem:[#allocation2 + $0x8] sm:$0xff]
  %v24 = vld [vmem:[%s0] sm:$0xff]
  %v25 = vld [vmem:[%s0 + $0x8] sm:$0xff]
  %v26 = vpack.c.bf16 %v25, %v24
  %v27 = vld [vmem:[%s1] sm:$0xf]
  %v28 = vld [vmem:[%s1 + $0x4] sm:$0xf]
  %v29 = vld [vmem:[%s1 + $0x8] sm:$0xf]
  %v30 = vld [vmem:[%s1 + $0xc] sm:$0xf]
  %v35 = vunpack.c.l.b16 %v27
  %v36 = vunpack.c.l.b16 %v28
  %v37 = vunpack.c.l.b16 %v29
  %v38 = vunpack.c.l.b16 %v30
  %v39 = vpack.c.b16 %v36, %v35
  %v40 = vpack.c.b16 %v38, %v37
  %vm43 = vcmask 261120
  %v45 = vsel %vm43, %v26, 0
  %47 = vmatpush.bf16.msra.mxu0 0
  %48 = vmatpush.bf16.msra.mxu0 0
  %49 = vmatpush.bf16.msra.mxu0 0
  %50 = vmatpush.bf16.msra.mxu0 0
  %51 = vmatpush.bf16.msra.mxu0 0
  %52 = vmatpush.bf16.msra.mxu0 0
  %53 = vmatpush.bf16.msra.mxu0 %v40
  %54 = vmatpush.bf16.msra.mxu0 %v39
  %55 = vmatmul.bf16.gmra.mxu0 %v45
  %v56 = vpop.f32.mrf.mxu0
  %v57 = vadd.f32 0.0, %v56
  %v58 = vpop.f32.mrf.mxu0
  %v59 = vadd.f32 0.0, %v58
  %60 = vdwg.mxu0
  %v61 = vadd.f32 %v22, %v57
  %v62 = vadd.f32 %v23, %v59
  %63 = vst.msk [vmem:[#allocation2] sm:$0xff] %vm43, %v61
  %64 = vst.msk [vmem:[#allocation2 + $0x8] sm:$0xff] %vm43, %v62
  // Predicated region
  $region18: #{_lambda_.44} parent=0 // pred_check
    %p65 = pneg %p15
  $region19: #{_lambda_.44} parent=0 // pred_check_branch
    %67 = sbr.rel (%p65) target = $region21
  $region20: #{_lambda_.44} parent=0 // pred_region
    %v68 = vld [vmem:[#allocation2] sm:$0xff]
    %v69 = vld [vmem:[#allocation2 + $0x8] sm:$0xff]
    %v70 = vld [vmem:[%s2] sm:$0x1]
    %v72 = vperm.slane %v70, 0
    %v74 = vadd.f32 %v68, %v72
    %v75 = vadd.f32 %v69, %v72
    %76 = vst.msk [vmem:[%s3] sm:$0xff] %vm43, %v74
    %77 = vst.msk [vmem:[%s3 + $0x8] sm:$0xff] %vm43, %v75
  $region21: #{_lambda_.44} parent=0 // pred_fallthru
    _
  // Predicated region
  $region22: #{_lambda_.44} parent=0 // pred_check
    _
  $region23: #{_lambda_.44} parent=0 // pred_check_branch
    %79 = sbr.rel (0) target = $region25
  $region24: #{_lambda_.44} parent=0 // pred_region
    _
  $region25: #{_lambda_.44} parent=0 // pred_fallthru
    _
  // Predicated region
  $region26: #{_lambda_.44} parent=0 // pred_check
    _
  $region27: #{_lambda_.44} parent=0 // pred_check_branch
    %81 = sbr.rel (0) target = $region29
  $region28: #{_lambda_.44} parent=0 // pred_region
    _
  $region29: #{_lambda_.44} parent=0 // pred_fallthru
    _

// kernel: _lambda_.41
$region0: #{_lambda_.41}
  #allocation0 [shape = 'u32[]', space=smem, size = 0x4, offset = 0x4, fixed_abs, tag = 'smem constant byte address 0x4 - core index']
  #allocation1 [shape = 'u32[72,128]{1,0:T(1,128)}', space=vmem, size = 0x9000, scoped, tag = 'internal scratch']
  %s0 = inlined_call_operand.vmem [shape: f32[16,32], index: 0, kind: input, shape index: {}]
  %s1 = inlined_call_operand.vmem [shape: f32[1,32], index: 1, kind: input, shape index: {}]
  %s2 = inlined_call_operand.vmem [shape: f32[1,32], index: 2, kind: input, shape index: {}]
  %s3 = inlined_call_operand.vmem [shape: f32[16,32], index: 3, kind: output, shape index: {}]
  %s4 = sld [smem:[#allocation0]]
  $region22: #{_lambda_.41} parent=0
    _
  %s6 = ssub.s32 1, %s4
  %s7 = scalar_select 0, %s6, %s4
  // Predicated region
  $region2: #{_lambda_.41} parent=0 // pred_check
    _
  $region3: #{_lambda_.41} parent=0 // pred_check_branch
    %9 = sbr.rel (0) target = $region5
  $region4: #{_lambda_.41} parent=0 // pred_region
    _
  $region5: #{_lambda_.41} parent=0 // pred_fallthru
    _
  // Predicated region
  $region6: #{_lambda_.41} parent=0 // pred_check
    _
  $region7: #{_lambda_.41} parent=0 // pred_check_branch
    %11 = sbr.rel (0) target = $region9
  $region8: #{_lambda_.41} parent=0 // pred_region
    _
  $region9: #{_lambda_.41} parent=0 // pred_fallthru
    _
  // Predicated region
  $region10: #{_lambda_.41} parent=0 // pred_check
    _
  $region11: #{_lambda_.41} parent=0 // pred_check_branch
    %13 = sbr.rel (0) target = $region13
  $region12: #{_lambda_.41} parent=0 // pred_region
    _
  $region13: #{_lambda_.41} parent=0 // pred_fallthru
    _
  %v14 = vld [vmem:[%s0] sm:$0xff]
  %v15 = vld [vmem:[%s0 + $0x8] sm:$0xff]
  %vm16 = vcmask 261120
  %v17 = vsel %vm16, %v14, 0.0
  %18 = vadd.xlane.f32.xlu0 %v17
  %v19 = vpop.xlane.xlu0 %18
  %v20 = vsel %vm16, %v15, 0.0
  %21 = vadd.xlane.f32.xlu0 %v20
  %v22 = vpop.xlane.xlu0 %21
  %v23 = vrcp.pop 32.0
  %v24 = vmul.f32 32.0, %v23
  %v25 = vsub.f32 1.0, %v24
  %v26 = vmul.f32 %v23, %v25
  %v27 = vadd.f32 %v23, %v26
  %vm28 = vweird.f32 %v23
  %v29 = vsel %vm28, %v23, %v27
  %v30 = vmul.f32 %v19, %v29
  %v31 = vmul.f32 %v22, %v29
  %v32 = vsub.f32 %v14, %v30
  %v33 = vsub.f32 %v15, %v31
  %v34 = vmul.f32 %v32, %v32
  %v35 = vmul.f32 %v33, %v33
  %v36 = vsel %vm16, %v34, 0.0
  %37 = vadd.xlane.f32.xlu0 %v36
  %v38 = vpop.xlane.xlu0 %37
  %v39 = vsel %vm16, %v35, 0.0
  %40 = vadd.xlane.f32.xlu0 %v39
  %v41 = vpop.xlane.xlu0 %40
  %v42 = vmul.f32 %v38, %v29
  %v43 = vmul.f32 %v41, %v29
  %v44 = vadd.f32 %v42, 1e-06
  %v45 = vadd.f32 %v43, 1e-06
  %v46 = vrsqrt.pop %v44
  %v47 = vmul.f32 %v46, %v44
  %v48 = vmul.f32 %v47, %v46
  %v49 = vmul.f32 0.5, %v48
  %v50 = vsub.f32 1.5, %v49
  %v51 = vmul.f32 %v46, %v50
  %vm52 = vweird.f32 %v44
  %vm53 = vweird.f32 %v46
  %vm54 = vmor %vm52, %vm53
  %v55 = vsel %vm54, %v46, %v51
  %v56 = vrsqrt.pop %v45
  %v57 = vmul.f32 %v56, %v45
  %v58 = vmul.f32 %v57, %v56
  %v59 = vmul.f32 0.5, %v58
  %v60 = vsub.f32 1.5, %v59
  %v61 = vmul.f32 %v56, %v60
  %vm62 = vweird.f32 %v45
  %vm63 = vweird.f32 %v56
  %vm64 = vmor %vm62, %vm63
  %v65 = vsel %vm64, %v56, %v61
  %v66 = vmul.f32 %v32, %v55
  %v67 = vmul.f32 %v33, %v65
  %v68 = vld [vmem:[%s1] sm:$0x1]
  %v70 = vperm.slane %v68, 0
  %v72 = vmul.f32 %v66, %v70
  %v73 = vmul.f32 %v67, %v70
  %v74 = vld [vmem:[%s2] sm:$0x1]
  %v76 = vperm.slane %v74, 0
  %v78 = vadd.f32 %v72, %v76
  %v79 = vadd.f32 %v73, %v76
  %80 = vst.msk [vmem:[%s3] sm:$0xff] %vm16, %v78
  %81 = vst.msk [vmem:[%s3 + $0x8] sm:$0xff] %vm16, %v79
  // Predicated region
  $region14: #{_lambda_.41} parent=0 // pred_check
    _
  $region15: #{_lambda_.41} parent=0 // pred_check_branch
    %83 = sbr.rel (0) target = $region17
  $region16: #{_lambda_.41} parent=0 // pred_region
    _
  $region17: #{_lambda_.41} parent=0 // pred_fallthru
    _
  // Predicated region
  $region18: #{_lambda_.41} parent=0 // pred_check
    _
  $region19: #{_lambda_.41} parent=0 // pred_check_branch
    %85 = sbr.rel (0) target = $region21
  $region20: #{_lambda_.41} parent=0 // pred_region
    _
  $region21: #{_lambda_.41} parent=0 // pred_fallthru
    _

// kernel: _lambda_.42
$region0: #{_lambda_.42}
  #allocation0 [shape = 'u32[]', space=smem, size = 0x4, offset = 0x4, fixed_abs, tag = 'smem constant byte address 0x4 - core index']
  #allocation1 [shape = 'u32[72,128]{1,0:T(1,128)}', space=vmem, size = 0x9000, scoped, tag = 'internal scratch']
  #allocation2 [shape = 'f32[16,96]{1,0:T(8,128)}', space=vmem, size = 0x2000, scoped, tag = 'scratch operand']
  %s0 = inlined_call_operand.vmem [shape: f32[16,32], index: 0, kind: input, shape index: {}]
  %s1 = inlined_call_operand.vmem [shape: bf16[32,96], index: 1, kind: input, shape index: {}]
  %s2 = inlined_call_operand.vmem [shape: f32[1,96], index: 2, kind: input, shape index: {}]
  %s3 = inlined_call_operand.vmem [shape: f32[16,96], index: 3, kind: output, shape index: {}]
  %s4 = sld [smem:[#allocation0]]
  $region30: #{_lambda_.42} parent=0
    _
  %s6 = ssub.s32 1, %s4
  %s7 = scalar_select 0, %s6, %s4
  // Predicated region
  $region2: #{_lambda_.42} parent=0 // pred_check
    _
  $region3: #{_lambda_.42} parent=0 // pred_check_branch
    %9 = sbr.rel (0) target = $region5
  $region4: #{_lambda_.42} parent=0 // pred_region
    _
  $region5: #{_lambda_.42} parent=0 // pred_fallthru
    _
  // Predicated region
  $region6: #{_lambda_.42} parent=0 // pred_check
    _
  $region7: #{_lambda_.42} parent=0 // pred_check_branch
    %11 = sbr.rel (0) target = $region9
  $region8: #{_lambda_.42} parent=0 // pred_region
    _
  $region9: #{_lambda_.42} parent=0 // pred_fallthru
    _
  // Predicated region
  $region10: #{_lambda_.42} parent=0 // pred_check
    _
  $region11: #{_lambda_.42} parent=0 // pred_check_branch
    %13 = sbr.rel (0) target = $region13
  $region12: #{_lambda_.42} parent=0 // pred_region
    _
  $region13: #{_lambda_.42} parent=0 // pred_fallthru
    _
  %p15 = scmp.eq.s32.totalorder 0, 0
  // Predicated region
  $region14: #{_lambda_.42} parent=0 // pred_check
    %p16 = pneg %p15
  $region15: #{_lambda_.42} parent=0 // pred_check_branch
    %18 = sbr.rel (%p16) target = $region17
  $region16: #{_lambda_.42} parent=0 // pred_region
    %vm19 = vcmask 785408
    %20 = vst.msk [vmem:[#allocation2] sm:$0xff] %vm19, 0.0
    %21 = vst.msk [vmem:[#allocation2 + $0x8] sm:$0xff] %vm19, 0.0
  $region17: #{_lambda_.42} parent=0 // pred_fallthru
    _
  %v22 = vld [vmem:[#allocation2] sm:$0xff]
  %v23 = vld [vmem:[#allocation2 + $0x8] sm:$0xff]
  %v24 = vld [vmem:[%s0] sm:$0xff]
  %v25 = vld [vmem:[%s0 + $0x8] sm:$0xff]
  %v26 = vpack.c.bf16 %v25, %v24
  %v27 = vld [vmem:[%s1] sm:$0xf]
  %v28 = vld [vmem:[%s1 + $0x4] sm:$0xf]
  %v29 = vld [vmem:[%s1 + $0x8] sm:$0xf]
  %v30 = vld [vmem:[%s1 + $0xc] sm:$0xf]
  %v35 = vunpack.c.l.b16 %v27
  %v36 = vunpack.c.l.b16 %v28
  %v37 = vunpack.c.l.b16 %v29
  %v38 = vunpack.c.l.b16 %v30
  %v39 = vpack.c.b16 %v36, %v35
  %v40 = vpack.c.b16 %v38, %v37
  %vm43 = vcmask 261120
  %v45 = vsel %vm43, %v26, 0
  %47 = vmatpush.bf16.msra.mxu0 0
  %48 = vmatpush.bf16.msra.mxu0 0
  %49 = vmatpush.bf16.msra.mxu0 0
  %50 = vmatpush.bf16.msra.mxu0 0
  %51 = vmatpush.bf16.msra.mxu0 0
  %52 = vmatpush.bf16.msra.mxu0 0
  %53 = vmatpush.bf16.msra.mxu0 %v40
  %54 = vmatpush.bf16.msra.mxu0 %v39
  %55 = vmatmul.bf16.gmra.mxu0 %v45
  %v56 = vpop.f32.mrf.mxu0
  %v57 = vadd.f32 0.0, %v56
  %v58 = vpop.f32.mrf.mxu0
  %v59 = vadd.f32 0.0, %v58
  %60 = vdwg.mxu0
  %v61 = vadd.f32 %v22, %v57
  %v62 = vadd.f32 %v23, %v59
  %vm63 = vcmask 785408
  %64 = vst.msk [vmem:[#allocation2] sm:$0xff] %vm63, %v61
  %65 = vst.msk [vmem:[#allocation2 + $0x8] sm:$0xff] %vm63, %v62
  // Predicated region
  $region18: #{_lambda_.42} parent=0 // pred_check
    %p66 = pneg %p15
  $region19: #{_lambda_.42} parent=0 // pred_check_branch
    %68 = sbr.rel (%p66) target = $region21
  $region20: #{_lambda_.42} parent=0 // pred_region
    %v69 = vld [vmem:[#allocation2] sm:$0xff]
    %v70 = vld [vmem:[#allocation2 + $0x8] sm:$0xff]
    %v71 = vld [vmem:[%s2] sm:$0x1]
    %v73 = vperm.slane %v71, 0
    %v75 = vadd.f32 %v69, %v73
    %v76 = vadd.f32 %v70, %v73
    %77 = vst.msk [vmem:[%s3] sm:$0xff] %vm63, %v75
    %78 = vst.msk [vmem:[%s3 + $0x8] sm:$0xff] %vm63, %v76
  $region21: #{_lambda_.42} parent=0 // pred_fallthru
    _
  // Predicated region
  $region22: #{_lambda_.42} parent=0 // pred_check
    _
  $region23: #{_lambda_.42} parent=0 // pred_check_branch
    %80 = sbr.rel (0) target = $region25
  $region24: #{_lambda_.42} parent=0 // pred_region
    _
  $region25: #{_lambda_.42} parent=0 // pred_fallthru
    _
  // Predicated region
  $region26: #{_lambda_.42} parent=0 // pred_check
    _
  $region27: #{_lambda_.42} parent=0 // pred_check_branch
    %82 = sbr.rel (0) target = $region29
  $region28: #{_lambda_.42} parent=0 // pred_region
    _
  $region29: #{_lambda_.42} parent=0 // pred_fallthru
    _

// kernel: _lambda_.43
$region0: #{_lambda_.43}
  #allocation0 [shape = 'u32[]', space=smem, size = 0x4, offset = 0x4, fixed_abs, tag = 'smem constant byte address 0x4 - core index']
  #allocation1 [shape = 'u32[72,128]{1,0:T(1,128)}', space=vmem, size = 0x9000, scoped, tag = 'internal scratch']
  %s0 = inlined_call_operand.vmem [shape: f32[2,8,96], index: 0, kind: input, shape index: {}]
  %s1 = inlined_call_operand.vmem [shape: s32[2,1,8], index: 1, kind: input, shape index: {}]
  %s2 = inlined_call_operand.vmem [shape: f32[2,8,32], index: 2, kind: output, shape index: {}]
  %s3 = sld [smem:[#allocation0]]
  $region41: #{_lambda_.43} parent=0
    _
  %s5 = ssub.s32 1, %s3
  %s6 = scalar_select 0, %s5, %s3
  loop: start=0, step=1, limit=4
  $region2: #{_lambda_.43} parent=0 // loop_pre_header
    _
  $region3: #{_lambda_.43} parent=0 // loop_header
    %s8 = sphi 0, %s12
    %p9 = scmp.ge.s32.totalorder %s8, 4
    %s18 = sphi 0, %s20
    %s21 = sphi 0, %s18
    %s22 = sphi 0, %s21
    %s38 = sphi 0, %s22
    %s44 = sphi 0, %s46
    %s47 = sphi 0, %s44
    %s48 = sphi 0, %s47
    %s64 = sphi 0, %s48
    %s70 = sphi 0, %s72
    %s73 = sphi 0, %s70
    %s74 = sphi 0, %s73
    %s90 = sphi 0, %s74
  $region4: #{_lambda_.43} parent=0 // loop_header_branch
    %11 = sbr.rel (%p9) target = $region8
  $region5: #{_lambda_.43} parent=0 // loop_body
    %s13 = ssub.s32 %s8, 1
    %s14 = ssub.s32 %s8, 2
    %s15 = sadd.s32 %s8, 1
    %s16 = ssub.s32 %s8, %s15
    %p17 = scmp.eq.s32.totalorder %s16, 0
    %s19 = sadd.s32 %s18, 1
    %s20 = scalar_select %p17, %s18, %s19
    %p23 = pneg %p17
    %p24 = scmp.eq.s32.totalorder %s8, 1
    %p25 = por %p23, %p24
    %p26 = scmp.ne.s32.totalorder %s18, %s21
    %p27 = scmp.eq.s32.totalorder %s8, 0
    %p28 = por %p26, %p27
    %p29 = scmp.ne.s32.totalorder %s18, %s21
    %p30 = scmp.eq.s32.totalorder %s13, 1
    %p31 = por %p29, %p30
    %p32 = scmp.ne.s32.totalorder %s21, %s22
    %p33 = scmp.eq.s32.totalorder %s13, 0
    %p34 = por %p32, %p33
    %p35 = scmp.ne.s32.totalorder %s21, %s22
    %p36 = scmp.eq.s32.totalorder %s14, 1
    %p37 = por %p35, %p36
    %p39 = scmp.ne.s32.totalorder %s22, %s38
    %p40 = scmp.eq.s32.totalorder %s14, 0
    %p41 = por %p39, %p40
    %s42 = ssub.s32 %s8, %s15
    %p43 = scmp.eq.s32.totalorder %s42, 0
    %s45 = sadd.s32 %s44, 1
    %s46 = scalar_select %p43, %s44, %s45
    %p49 = pneg %p43
    %p50 = scmp.eq.s32.totalorder %s8, 1
    %p51 = por %p49, %p50
    %p52 = scmp.ne.s32.totalorder %s44, %s47
    %p53 = scmp.eq.s32.totalorder %s8, 0
    %p54 = por %p52, %p53
    %p55 = scmp.ne.s32.totalorder %s44, %s47
    %p56 = scmp.eq.s32.totalorder %s13, 1
    %p57 = por %p55, %p56
    %p58 = scmp.ne.s32.totalorder %s47, %s48
    %p59 = scmp.eq.s32.totalorder %s13, 0
    %p60 = por %p58, %p59
    %p61 = scmp.ne.s32.totalorder %s47, %s48
    %p62 = scmp.eq.s32.totalorder %s14, 1
    %p63 = por %p61, %p62
    %p65 = scmp.ne.s32.totalorder %s48, %s64
    %p66 = scmp.eq.s32.totalorder %s14, 0
    %p67 = por %p65, %p66
    %s68 = ssub.s32 %s8, %s15
    %p69 = scmp.eq.s32.totalorder %s68, 0
    %s71 = sadd.s32 %s70, 1
    %s72 = scalar_select %p69, %s70, %s71
    %p75 = pneg %p69
    %p76 = scmp.eq.s32.totalorder %s8, 1
    %p77 = por %p75, %p76
    %p78 = scmp.ne.s32.totalorder %s70, %s73
    %p79 = scmp.eq.s32.totalorder %s8, 0
    %p80 = por %p78, %p79
    %p81 = scmp.ne.s32.totalorder %s70, %s73
    %p82 = scmp.eq.s32.totalorder %s13, 1
    %p83 = por %p81, %p82
    %p84 = scmp.ne.s32.totalorder %s73, %s74
    %p85 = scmp.eq.s32.totalorder %s13, 0
    %p86 = por %p84, %p85
    %p87 = scmp.ne.s32.totalorder %s73, %s74
    %p88 = scmp.eq.s32.totalorder %s14, 1
    %p89 = por %p87, %p88
    %p91 = scmp.ne.s32.totalorder %s74, %s90
    %p92 = scmp.eq.s32.totalorder %s14, 0
    %p93 = por %p91, %p92
    %p94 = scmp.le.s32.totalorder 1, %s8
    %p95 = scmp.lt.s32.totalorder %s8, 3
    %p96 = pnand %p94, %p95
    %p97 = pneg %p96
    // Predicated region
    $region9: #{_lambda_.43} parent=5 // pred_check
      _
    $region10: #{_lambda_.43} parent=5 // pred_check_branch
      %99 = sbr.rel (%p96) target = $region12
    $region11: #{_lambda_.43} parent=5 // pred_region
      %s100 = ssub.s32 %s8, 1
    $region12: #{_lambda_.43} parent=5 // pred_fallthru
      _
    %p101 = scmp.lt.s32.totalorder %s8, 2
    // Predicated region
    $region13: #{_lambda_.43} parent=5 // pred_check
      %p102 = pneg %p101
    $region14: #{_lambda_.43} parent=5 // pred_check_branch
      %104 = sbr.rel (%p102) target = $region16
    $region15: #{_lambda_.43} parent=5 // pred_region
      // Predicated region
      $region17: #{_lambda_.43} parent=15 // pred_check
        %p105 = pneg %p28
      $region18: #{_lambda_.43} parent=15 // pred_check_branch
        %107 = sbr.rel (%p105) target = $region20
      $region19: #{_lambda_.43} parent=15 // pred_region
        %p108 = scmp.lt.s32.totalorder %s8, 1
        %s109 = scalar_select %p108, %s8, 1
        %s110 = smul.addr %s109, 8
        %s111 = scalar_lea.vmem %s0, %s110
      $region20: #{_lambda_.43} parent=15 // pred_fallthru
        _
      // Predicated region
      $region21: #{_lambda_.43} parent=15 // pred_check
        %p112 = pneg %p54
      $region22: #{_lambda_.43} parent=15 // pred_check_branch
        %114 = sbr.rel (%p112) target = $region24
      $region23: #{_lambda_.43} parent=15 // pred_region
        %p115 = scmp.lt.s32.totalorder %s8, 1
        %s116 = scalar_select %p115, %s8, 1
        %s117 = scalar_lea.vmem %s1, %s116
      $region24: #{_lambda_.43} parent=15 // pred_fallthru
        _
    $region16: #{_lambda_.43} parent=5 // pred_fallthru
      _
    %p118 = scmp.le.s32.totalorder 1, %s8
    %p119 = scmp.lt.s32.totalorder %s8, 3
    %p120 = pnand %p118, %p119
    %p121 = pneg %p120
    // Predicated region
    $region25: #{_lambda_.43} parent=5 // pred_check
      _
    $region26: #{_lambda_.43} parent=5 // pred_check_branch
      %123 = sbr.rel (%p120) target = $region28
    $region27: #{_lambda_.43} parent=5 // pred_region
      %s124 = ssub.s32 %s8, 1
      %p125 = scmp.lt.s32.totalorder %s13, 1
      %s126 = scalar_select %p125, %s13, 1
      %s127 = smul.addr %s126, 8
      %s128 = scalar_lea.vmem %s0, %s127
      %p129 = pneg %p34
      %p130 = pneg %p31
      %p131 = scmp.lt.s32.totalorder %s13, 1
      %s132 = scalar_select %p131, %s13, 1
      %s133 = scalar_lea.vmem %s1, %s132
      %p134 = pneg %p60
      %p135 = pneg %p57
      %p136 = pneg %p86
      %p137 = pneg %p83
      %p138 = scmp.lt.s32.totalorder %s13, 1
      %s139 = scalar_select %p138, %s13, 1
      %s140 = smul.addr %s139, 8
      %s141 = scalar_lea.vmem %s2, %s140
      %p142 = scmp.lt.s32.totalorder %s13, 1
      %s143 = scalar_select %p142, %s13, 1
      %s144 = smul.addr %s143, 8
      %s145 = scalar_lea.vmem %s0, %s144
      %p146 = scmp.lt.s32.totalorder %s13, 1
      %s147 = scalar_select %p146, %s13, 1
      %s148 = scalar_lea.vmem %s1, %s147
      %p149 = scmp.lt.s32.totalorder %s13, 1
      %s150 = scalar_select %p149, %s13, 1
      %s151 = smul.addr %s150, 8
      %s152 = scalar_lea.vmem %s2, %s151
      %v154 = vld [vmem:[%s145] sm:$0xff]
      %v155 = vld [vmem:[%s148] sm:$0x1]
      %vm156 = vcmp.gt.s32.totalorder %v155, 0
      %v157 = vpack.c.bf16 %v154, %v154
      %v159 = vunpack.c.l.b16 %v157
      %v160 = vpack.c.b16 %v159, %v159
      %161 = vrot.lane.b32.xlu0 %v160, 96
      %v162 = vpop.permute.xlu0 %161
      %vm163 = vcmask 64512
      %v165 = vsel %vm163, %v157, 0
      %v168 = vsel %vm163, %v162, 0
      %170 = vmatpush.bf16.xpose.msra.mxu0 0
      %171 = vmatpush.bf16.xpose.msra.mxu0 0
      %172 = vmatpush.bf16.xpose.msra.mxu0 0
      %173 = vmatpush.bf16.xpose.msra.mxu0 0
      %174 = vmatpush.bf16.xpose.msra.mxu0 0
      %175 = vmatpush.bf16.xpose.msra.mxu0 0
      %176 = vmatpush.bf16.xpose.msra.mxu0 0
      %177 = vmatpush.bf16.xpose.msra.mxu0 %v168
      %178 = vmatmul.bf16.gmra.mxu0 %v165
      %v179 = vpop.f32.mrf.mxu0
      %v180 = vadd.f32 0.0, %v179
      %v181 = vpop.f32.mrf.mxu0
      %182 = vdwg.mxu0
      %v183 = vmul.f32 %v180, 0.35355338
      %v184 = vsel %vm156, 1, 0
      %v185 = vperm.slane %v184, 0
      %vm186 = vcmp.eq.s32.totalorder %v185, 1
      %v187 = vsel %vm186, %v183, -1e+09
      %v188 = vsel %vm163, %v187, -inf
      %189 = vmax.xlane.f32.xlu0 %v188
      %v190 = vpop.xlane.xlu0 %189
      %v191 = vsub.f32 %v187, %v190
      %v192 = vmul.f32 %v191, 1.442695
      %v193 = vpow.pop %v192
      %v194 = vsel %vm163, %v193, 0.0
      %195 = vadd.xlane.f32.xlu0 %v194
      %v196 = vpop.xlane.xlu0 %195
      %v197 = vrcp.pop %v196
      %v198 = vmul.f32 %v193, %v197
      %v199 = vpack.c.bf16 %v198, %v198
      %200 = vrot.lane.b32.xlu0 %v160, 64
      %v201 = vpop.permute.xlu0 %200
      %v203 = vsel %vm163, %v199, 0
      %vm205 = vcmask 1043456
      %v207 = vsel %vm205, %v201, 0
      %209 = vmatpush.bf16.msra.mxu0 0
      %210 = vmatpush.bf16.msra.mxu0 0
      %211 = vmatpush.bf16.msra.mxu0 0
      %212 = vmatpush.bf16.msra.mxu0 0
      %213 = vmatpush.bf16.msra.mxu0 0
      %214 = vmatpush.bf16.msra.mxu0 0
      %215 = vmatpush.bf16.msra.mxu0 0
      %216 = vmatpush.bf16.msra.mxu0 %v207
      %217 = vmatmul.bf16.gmra.mxu0 %v203
      %v218 = vpop.f32.mrf.mxu0
      %v219 = vadd.f32 0.0, %v218
      %v220 = vpop.f32.mrf.mxu0
      %221 = vdwg.mxu0
      %222 = vrot.lane.b32.xlu0 %v160, 120
      %v223 = vpop.permute.xlu0 %222
      %224 = vrot.lane.b32.xlu0 %v160, 88
      %v225 = vpop.permute.xlu0 %224
      %v227 = vsel %vm163, %v223, 0
      %v230 = vsel %vm163, %v225, 0
      %232 = vmatpush.bf16.xpose.msra.mxu0 0
      %233 = vmatpush.bf16.xpose.msra.mxu0 0
      %234 = vmatpush.bf16.xpose.msra.mxu0 0
      %235 = vmatpush.bf16.xpose.msra.mxu0 0
      %236 = vmatpush.bf16.xpose.msra.mxu0 0
      %237 = vmatpush.bf16.xpose.msra.mxu0 0
      %238 = vmatpush.bf16.xpose.msra.mxu0 0
      %239 = vmatpush.bf16.xpose.msra.mxu0 %v230
      %240 = vmatmul.bf16.gmra.mxu0 %v227
      %v241 = vpop.f32.mrf.mxu0
      %v242 = vadd.f32 0.0, %v241
      %v243 = vpop.f32.mrf.mxu0
      %244 = vdwg.mxu0
      %v245 = vmul.f32 %v242, 0.35355338
      %v246 = vsel %vm186, %v245, -1e+09
      %v247 = vsel %vm163, %v246, -inf
      %248 = vmax.xlane.f32.xlu0 %v247
      %v249 = vpop.xlane.xlu0 %248
      %v250 = vsub.f32 %v246, %v249
      %v251 = vmul.f32 %v250, 1.442695
      %v252 = vpow.pop %v251
      %v253 = vsel %vm163, %v252, 0.0
      %254 = vadd.xlane.f32.xlu0 %v253
      %v255 = vpop.xlane.xlu0 %254
      %v256 = vrcp.pop %v255
      %v257 = vmul.f32 %v252, %v256
      %v258 = vpack.c.bf16 %v257, %v257
      %259 = vrot.lane.b32.xlu0 %v160, 56
      %v260 = vpop.permute.xlu0 %259
      %v262 = vsel %vm163, %v258, 0
      %v265 = vsel %vm205, %v260, 0
      %267 = vmatpush.bf16.msra.mxu0 0
      %268 = vmatpush.bf16.msra.mxu0 0
      %269 = vmatpush.bf16.msra.mxu0 0
      %270 = vmatpush.bf16.msra.mxu0 0
      %271 = vmatpush.bf16.msra.mxu0 0
      %272 = vmatpush.bf16.msra.mxu0 0
      %273 = vmatpush.bf16.msra.mxu0 0
      %274 = vmatpush.bf16.msra.mxu0 %v265
      %275 = vmatmul.bf16.gmra.mxu0 %v262
      %v276 = vpop.f32.mrf.mxu0
      %v277 = vadd.f32 0.0, %v276
      %v278 = vpop.f32.mrf.mxu0
      %279 = vdwg.mxu0
      %280 = vrot.lane.b32.xlu0 %v160, 112
      %v281 = vpop.permute.xlu0 %280
      %282 = vrot.lane.b32.xlu0 %v160, 80
      %v283 = vpop.permute.xlu0 %282
      %v285 = vsel %vm163, %v281, 0
      %v288 = vsel %vm163, %v283, 0
      %290 = vmatpush.bf16.xpose.msra.mxu0 0
      %291 = vmatpush.bf16.xpose.msra.mxu0 0
      %292 = vmatpush.bf16.xpose.msra.mxu0 0
      %293 = vmatpush.bf16.xpose.msra.mxu0 0
      %294 = vmatpush.bf16.xpose.msra.mxu0 0
      %295 = vmatpush.bf16.xpose.msra.mxu0 0
      %296 = vmatpush.bf16.xpose.msra.mxu0 0
      %297 = vmatpush.bf16.xpose.msra.mxu0 %v288
      %298 = vmatmul.bf16.gmra.mxu0 %v285
      %v299 = vpop.f32.mrf.mxu0
      %v300 = vadd.f32 0.0, %v299
      %v301 = vpop.f32.mrf.mxu0
      %302 = vdwg.mxu0
      %v303 = vmul.f32 %v300, 0.35355338
      %v304 = vsel %vm186, %v303, -1e+09
      %v305 = vsel %vm163, %v304, -inf
      %306 = vmax.xlane.f32.xlu0 %v305
      %v307 = vpop.xlane.xlu0 %306
      %v308 = vsub.f32 %v304, %v307
      %v309 = vmul.f32 %v308, 1.442695
      %v310 = vpow.pop %v309
      %v311 = vsel %vm163, %v310, 0.0
      %312 = vadd.xlane.f32.xlu0 %v311
      %v313 = vpop.xlane.xlu0 %312
      %v314 = vrcp.pop %v313
      %v315 = vmul.f32 %v310, %v314
      %v316 = vpack.c.bf16 %v315, %v315
      %317 = vrot.lane.b32.xlu0 %v160, 48
      %v318 = vpop.permute.xlu0 %317
      %v320 = vsel %vm163, %v316, 0
      %v323 = vsel %vm205, %v318, 0
      %325 = vmatpush.bf16.msra.mxu0 0
      %326 = vmatpush.bf16.msra.mxu0 0
      %327 = vmatpush.bf16.msra.mxu0 0
      %328 = vmatpush.bf16.msra.mxu0 0
      %329 = vmatpush.bf16.msra.mxu0 0
      %330 = vmatpush.bf16.msra.mxu0 0
      %331 = vmatpush.bf16.msra.mxu0 0
      %332 = vmatpush.bf16.msra.mxu0 %v323
      %333 = vmatmul.bf16.gmra.mxu0 %v320
      %v334 = vpop.f32.mrf.mxu0
      %v335 = vadd.f32 0.0, %v334
      %v336 = vpop.f32.mrf.mxu0
      %337 = vdwg.mxu0
      %338 = vrot.lane.b32.xlu0 %v160, 104
      %v339 = vpop.permute.xlu0 %338
      %340 = vrot.lane.b32.xlu0 %v160, 72
      %v341 = vpop.permute.xlu0 %340
      %v343 = vsel %vm163, %v339, 0
      %v346 = vsel %vm163, %v341, 0
      %348 = vmatpush.bf16.xpose.msra.mxu0 0
      %349 = vmatpush.bf16.xpose.msra.mxu0 0
      %350 = vmatpush.bf16.xpose.msra.mxu0 0
      %351 = vmatpush.bf16.xpose.msra.mxu0 0
      %352 = vmatpush.bf16.xpose.msra.mxu0 0
      %353 = vmatpush.bf16.xpose.msra.mxu0 0
      %354 = vmatpush.bf16.xpose.msra.mxu0 0
      %355 = vmatpush.bf16.xpose.msra.mxu0 %v346
      %356 = vmatmul.bf16.gmra.mxu0 %v343
      %v357 = vpop.f32.mrf.mxu0
      %v358 = vadd.f32 0.0, %v357
      %v359 = vpop.f32.mrf.mxu0
      %360 = vdwg.mxu0
      %v361 = vmul.f32 %v358, 0.35355338
      %v362 = vsel %vm186, %v361, -1e+09
      %v363 = vsel %vm163, %v362, -inf
      %364 = vmax.xlane.f32.xlu0 %v363
      %v365 = vpop.xlane.xlu0 %364
      %v366 = vsub.f32 %v362, %v365
      %v367 = vmul.f32 %v366, 1.442695
      %v368 = vpow.pop %v367
      %v369 = vsel %vm163, %v368, 0.0
      %370 = vadd.xlane.f32.xlu0 %v369
      %v371 = vpop.xlane.xlu0 %370
      %v372 = vrcp.pop %v371
      %v373 = vmul.f32 %v368, %v372
      %v374 = vpack.c.bf16 %v373, %v373
      %375 = vrot.lane.b32.xlu0 %v160, 40
      %v376 = vpop.permute.xlu0 %375
      %v378 = vsel %vm163, %v374, 0
      %v381 = vsel %vm205, %v376, 0
      %383 = vmatpush.bf16.msra.mxu0 0
      %384 = vmatpush.bf16.msra.mxu0 0
      %385 = vmatpush.bf16.msra.mxu0 0
      %386 = vmatpush.bf16.msra.mxu0 0
      %387 = vmatpush.bf16.msra.mxu0 0
      %388 = vmatpush.bf16.msra.mxu0 0
      %389 = vmatpush.bf16.msra.mxu0 0
      %390 = vmatpush.bf16.msra.mxu0 %v381
      %391 = vmatmul.bf16.gmra.mxu0 %v378
      %v392 = vpop.f32.mrf.mxu0
      %v393 = vadd.f32 0.0, %v392
      %v394 = vpop.f32.mrf.mxu0
      %395 = vdwg.mxu0
      %397 = vrot.lane.b32.xlu0 %v277, 8
      %v398 = vpop.permute.xlu0 %397
      %401 = vrot.lane.b32.xlu0 %v335, 16
      %v402 = vpop.permute.xlu0 %401
      %405 = vrot.lane.b32.xlu0 %v393, 24
      %v406 = vpop.permute.xlu0 %405
      %v408 = vsel %vm163, %v219, %v398
      %vm409 = vcmask 130048
      %v410 = vsel %vm409, %v408, %v402
      %vm411 = vcmask 195584
      %v412 = vsel %vm411, %v410, %v406
      %vm413 = vcmask 261120
      %414 = vst.msk [vmem:[%s152] sm:$0xff] %vm413, %v412
      %p415 = scmp.lt.s32.totalorder %s13, 1
      %s416 = scalar_select %p415, %s13, 1
      %s417 = smul.addr %s416, 8
      %s418 = scalar_lea.vmem %s2, %s417
      // Predicated region
      $region29: #{_lambda_.43} parent=27 // pred_check
        %p419 = pneg %p83
      $region30: #{_lambda_.43} parent=27 // pred_check_branch
        %421 = sbr.rel (%p419) target = $region32
      $region31: #{_lambda_.43} parent=27 // pred_region
        _
      $region32: #{_lambda_.43} parent=27 // pred_fallthru
        _
    $region28: #{_lambda_.43} parent=5 // pred_fallthru
      _
    %p422 = scmp.le.s32.totalorder 2, %s8
    // Predicated region
    $region33: #{_lambda_.43} parent=5 // pred_check
      %p423 = pneg %p422
    $region34: #{_lambda_.43} parent=5 // pred_check_branch
      %425 = sbr.rel (%p423) target = $region36
    $region35: #{_lambda_.43} parent=5 // pred_region
      %s426 = ssub.s32 %s8, 2
      // Predicated region
      $region37: #{_lambda_.43} parent=35 // pred_check
        %p427 = pneg %p89
      $region38: #{_lambda_.43} parent=35 // pred_check_branch
        %429 = sbr.rel (%p427) target = $region40
      $region39: #{_lambda_.43} parent=35 // pred_region
        %p430 = scmp.lt.s32.totalorder %s14, 1
        %s431 = scalar_select %p430, %s14, 1
        %s432 = smul.addr %s431, 8
        %s433 = scalar_lea.vmem %s2, %s432
      $region40: #{_lambda_.43} parent=35 // pred_fallthru
        _
    $region36: #{_lambda_.43} parent=5 // pred_fallthru
      _
  $region6: #{_lambda_.43} parent=0 // loop_footer
    %s12 = sadd.s32 1, %s8
  $region7: #{_lambda_.43} parent=0 // loop_footer_branch
    %7 = sbr.rel target = $region3
  $region8: #{_lambda_.43} parent=0 // loop_exit
    _

// kernel: _lambda_.45
$region0: #{_lambda_.45}
  #allocation0 [shape = 'u32[]', space=smem, size = 0x4, offset = 0x4, fixed_abs, tag = 'smem constant byte address 0x4 - core index']
  #allocation1 [shape = 'u32[72,128]{1,0:T(1,128)}', space=vmem, size = 0x9000, scoped, tag = 'internal scratch']
  %s0 = inlined_call_operand.vmem [shape: f32[16,32], index: 0, kind: input, shape index: {}]
  %s1 = inlined_call_operand.vmem [shape: f32[16,32], index: 1, kind: input, shape index: {}]
  %s2 = inlined_call_operand.vmem [shape: f32[1,32], index: 2, kind: input, shape index: {}]
  %s3 = inlined_call_operand.vmem [shape: f32[1,32], index: 3, kind: input, shape index: {}]
  %s4 = inlined_call_operand.vmem [shape: f32[16,32], index: 4, kind: output, shape index: {}]
  %s5 = sld [smem:[#allocation0]]
  $region26: #{_lambda_.45} parent=0
    _
  %s7 = ssub.s32 1, %s5
  %s8 = scalar_select 0, %s7, %s5
  // Predicated region
  $region2: #{_lambda_.45} parent=0 // pred_check
    _
  $region3: #{_lambda_.45} parent=0 // pred_check_branch
    %10 = sbr.rel (0) target = $region5
  $region4: #{_lambda_.45} parent=0 // pred_region
    _
  $region5: #{_lambda_.45} parent=0 // pred_fallthru
    _
  // Predicated region
  $region6: #{_lambda_.45} parent=0 // pred_check
    _
  $region7: #{_lambda_.45} parent=0 // pred_check_branch
    %12 = sbr.rel (0) target = $region9
  $region8: #{_lambda_.45} parent=0 // pred_region
    _
  $region9: #{_lambda_.45} parent=0 // pred_fallthru
    _
  // Predicated region
  $region10: #{_lambda_.45} parent=0 // pred_check
    _
  $region11: #{_lambda_.45} parent=0 // pred_check_branch
    %14 = sbr.rel (0) target = $region13
  $region12: #{_lambda_.45} parent=0 // pred_region
    _
  $region13: #{_lambda_.45} parent=0 // pred_fallthru
    _
  // Predicated region
  $region14: #{_lambda_.45} parent=0 // pred_check
    _
  $region15: #{_lambda_.45} parent=0 // pred_check_branch
    %16 = sbr.rel (0) target = $region17
  $region16: #{_lambda_.45} parent=0 // pred_region
    _
  $region17: #{_lambda_.45} parent=0 // pred_fallthru
    _
  %v17 = vld [vmem:[%s0] sm:$0xff]
  %v18 = vld [vmem:[%s0 + $0x8] sm:$0xff]
  %v19 = vld [vmem:[%s1] sm:$0xff]
  %v20 = vld [vmem:[%s1 + $0x8] sm:$0xff]
  %v21 = vadd.f32 %v17, %v19
  %v22 = vadd.f32 %v18, %v20
  %vm23 = vcmask 261120
  %v24 = vsel %vm23, %v21, 0.0
  %25 = vadd.xlane.f32.xlu0 %v24
  %v26 = vpop.xlane.xlu0 %25
  %v27 = vsel %vm23, %v22, 0.0
  %28 = vadd.xlane.f32.xlu0 %v27
  %v29 = vpop.xlane.xlu0 %28
  %v30 = vrcp.pop 32.0
  %v31 = vmul.f32 32.0, %v30
  %v32 = vsub.f32 1.0, %v31
  %v33 = vmul.f32 %v30, %v32
  %v34 = vadd.f32 %v30, %v33
  %vm35 = vweird.f32 %v30
  %v36 = vsel %vm35, %v30, %v34
  %v37 = vmul.f32 %v26, %v36
  %v38 = vmul.f32 %v29, %v36
  %v39 = vsub.f32 %v21, %v37
  %v40 = vsub.f32 %v22, %v38
  %v41 = vmul.f32 %v39, %v39
  %v42 = vmul.f32 %v40, %v40
  %v43 = vsel %vm23, %v41, 0.0
  %44 = vadd.xlane.f32.xlu0 %v43
  %v45 = vpop.xlane.xlu0 %44
  %v46 = vsel %vm23, %v42, 0.0
  %47 = vadd.xlane.f32.xlu0 %v46
  %v48 = vpop.xlane.xlu0 %47
  %v49 = vmul.f32 %v45, %v36
  %v50 = vmul.f32 %v48, %v36
  %v51 = vadd.f32 %v49, 1e-06
  %v52 = vadd.f32 %v50, 1e-06
  %v53 = vrsqrt.pop %v51
  %v54 = vmul.f32 %v53, %v51
  %v55 = vmul.f32 %v54, %v53
  %v56 = vmul.f32 0.5, %v55
  %v57 = vsub.f32 1.5, %v56
  %v58 = vmul.f32 %v53, %v57
  %vm59 = vweird.f32 %v51
  %vm60 = vweird.f32 %v53
  %vm61 = vmor %vm59, %vm60
  %v62 = vsel %vm61, %v53, %v58
  %v63 = vrsqrt.pop %v52
  %v64 = vmul.f32 %v63, %v52
  %v65 = vmul.f32 %v64, %v63
  %v66 = vmul.f32 0.5, %v65
  %v67 = vsub.f32 1.5, %v66
  %v68 = vmul.f32 %v63, %v67
  %vm69 = vweird.f32 %v52
  %vm70 = vweird.f32 %v63
  %vm71 = vmor %vm69, %vm70
  %v72 = vsel %vm71, %v63, %v68
  %v73 = vmul.f32 %v39, %v62
  %v74 = vmul.f32 %v40, %v72
  %v75 = vld [vmem:[%s2] sm:$0x1]
  %v77 = vperm.slane %v75, 0
  %v79 = vmul.f32 %v73, %v77
  %v80 = vmul.f32 %v74, %v77
  %v81 = vld [vmem:[%s3] sm:$0x1]
  %v83 = vperm.slane %v81, 0
  %v85 = vadd.f32 %v79, %v83
  %v86 = vadd.f32 %v80, %v83
  %87 = vst.msk [vmem:[%s4] sm:$0xff] %vm23, %v85
  %88 = vst.msk [vmem:[%s4 + $0x8] sm:$0xff] %vm23, %v86
  // Predicated region
  $region18: #{_lambda_.45} parent=0 // pred_check
    _
  $region19: #{_lambda_.45} parent=0 // pred_check_branch
    %90 = sbr.rel (0) target = $region21
  $region20: #{_lambda_.45} parent=0 // pred_region
    _
  $region21: #{_lambda_.45} parent=0 // pred_fallthru
    _
  // Predicated region
  $region22: #{_lambda_.45} parent=0 // pred_check
    _
  $region23: #{_lambda_.45} parent=0 // pred_check_branch
    %92 = sbr.rel (0) target = $region25
  $region24: #{_lambda_.45} parent=0 // pred_region
    _
  $region25: #{_lambda_.45} parent=0 // pred_fallthru
    _

// kernel: _lambda_.46
$region0: #{_lambda_.46}
  #allocation0 [shape = 'u32[]', space=smem, size = 0x4, offset = 0x4, fixed_abs, tag = 'smem constant byte address 0x4 - core index']
  #allocation1 [shape = 'u32[72,128]{1,0:T(1,128)}', space=vmem, size = 0x9000, scoped, tag = 'internal scratch']
  #allocation2 [shape = 'f32[16,64]{1,0:T(8,128)}', space=vmem, size = 0x2000, scoped, tag = 'scratch operand']
  %s0 = inlined_call_operand.vmem [shape: f32[16,32], index: 0, kind: input, shape index: {}]
  %s1 = inlined_call_operand.vmem [shape: bf16[32,64], index: 1, kind: input, shape index: {}]
  %s2 = inlined_call_operand.vmem [shape: f32[1,64], index: 2, kind: input, shape index: {}]
  %s3 = inlined_call_operand.vmem [shape: f32[16,64], index: 3, kind: output, shape index: {}]
  %s4 = sld [smem:[#allocation0]]
  $region30: #{_lambda_.46} parent=0
    _
  %s6 = ssub.s32 1, %s4
  %s7 = scalar_select 0, %s6, %s4
  // Predicated region
  $region2: #{_lambda_.46} parent=0 // pred_check
    _
  $region3: #{_lambda_.46} parent=0 // pred_check_branch
    %9 = sbr.rel (0) target = $region5
  $region4: #{_lambda_.46} parent=0 // pred_region
    _
  $region5: #{_lambda_.46} parent=0 // pred_fallthru
    _
  // Predicated region
  $region6: #{_lambda_.46} parent=0 // pred_check
    _
  $region7: #{_lambda_.46} parent=0 // pred_check_branch
    %11 = sbr.rel (0) target = $region9
  $region8: #{_lambda_.46} parent=0 // pred_region
    _
  $region9: #{_lambda_.46} parent=0 // pred_fallthru
    _
  // Predicated region
  $region10: #{_lambda_.46} parent=0 // pred_check
    _
  $region11: #{_lambda_.46} parent=0 // pred_check_branch
    %13 = sbr.rel (0) target = $region13
  $region12: #{_lambda_.46} parent=0 // pred_region
    _
  $region13: #{_lambda_.46} parent=0 // pred_fallthru
    _
  %p15 = scmp.eq.s32.totalorder 0, 0
  // Predicated region
  $region14: #{_lambda_.46} parent=0 // pred_check
    %p16 = pneg %p15
  $region15: #{_lambda_.46} parent=0 // pred_check_branch
    %18 = sbr.rel (%p16) target = $region17
  $region16: #{_lambda_.46} parent=0 // pred_region
    %vm19 = vcmask 523264
    %20 = vst.msk [vmem:[#allocation2] sm:$0xff] %vm19, 0.0
    %21 = vst.msk [vmem:[#allocation2 + $0x8] sm:$0xff] %vm19, 0.0
  $region17: #{_lambda_.46} parent=0 // pred_fallthru
    _
  %v22 = vld [vmem:[#allocation2] sm:$0xff]
  %v23 = vld [vmem:[#allocation2 + $0x8] sm:$0xff]
  %v24 = vld [vmem:[%s0] sm:$0xff]
  %v25 = vld [vmem:[%s0 + $0x8] sm:$0xff]
  %v26 = vpack.c.bf16 %v25, %v24
  %v27 = vld [vmem:[%s1] sm:$0xf]
  %v28 = vld [vmem:[%s1 + $0x4] sm:$0xf]
  %v29 = vld [vmem:[%s1 + $0x8] sm:$0xf]
  %v30 = vld [vmem:[%s1 + $0xc] sm:$0xf]
  %v35 = vunpack.c.l.b16 %v27
  %v36 = vunpack.c.l.b16 %v28
  %v37 = vunpack.c.l.b16 %v29
  %v38 = vunpack.c.l.b16 %v30
  %v39 = vpack.c.b16 %v36, %v35
  %v40 = vpack.c.b16 %v38, %v37
  %vm43 = vcmask 261120
  %v45 = vsel %vm43, %v26, 0
  %47 = vmatpush.bf16.msra.mxu0 0
  %48 = vmatpush.bf16.msra.mxu0 0
  %49 = vmatpush.bf16.msra.mxu0 0
  %50 = vmatpush.bf16.msra.mxu0 0
  %51 = vmatpush.bf16.msra.mxu0 0
  %52 = vmatpush.bf16.msra.mxu0 0
  %53 = vmatpush.bf16.msra.mxu0 %v40
  %54 = vmatpush.bf16.msra.mxu0 %v39
  %55 = vmatmul.bf16.gmra.mxu0 %v45
  %v56 = vpop.f32.mrf.mxu0
  %v57 = vadd.f32 0.0, %v56
  %v58 = vpop.f32.mrf.mxu0
  %v59 = vadd.f32 0.0, %v58
  %60 = vdwg.mxu0
  %v61 = vadd.f32 %v22, %v57
  %v62 = vadd.f32 %v23, %v59
  %vm63 = vcmask 523264
  %64 = vst.msk [vmem:[#allocation2] sm:$0xff] %vm63, %v61
  %65 = vst.msk [vmem:[#allocation2 + $0x8] sm:$0xff] %vm63, %v62
  // Predicated region
  $region18: #{_lambda_.46} parent=0 // pred_check
    %p66 = pneg %p15
  $region19: #{_lambda_.46} parent=0 // pred_check_branch
    %68 = sbr.rel (%p66) target = $region21
  $region20: #{_lambda_.46} parent=0 // pred_region
    %v69 = vld [vmem:[#allocation2] sm:$0xff]
    %v70 = vld [vmem:[#allocation2 + $0x8] sm:$0xff]
    %v71 = vld [vmem:[%s2] sm:$0x1]
    %v73 = vperm.slane %v71, 0
    %v75 = vadd.f32 %v69, %v73
    %v76 = vadd.f32 %v70, %v73
    %v77 = vmax.f32 %v75, 0.0
    %v78 = vmax.f32 %v76, 0.0
    %79 = vst.msk [vmem:[%s3] sm:$0xff] %vm63, %v77
    %80 = vst.msk [vmem:[%s3 + $0x8] sm:$0xff] %vm63, %v78
  $region21: #{_lambda_.46} parent=0 // pred_fallthru
    _
  // Predicated region
  $region22: #{_lambda_.46} parent=0 // pred_check
    _
  $region23: #{_lambda_.46} parent=0 // pred_check_branch
    %82 = sbr.rel (0) target = $region25
  $region24: #{_lambda_.46} parent=0 // pred_region
    _
  $region25: #{_lambda_.46} parent=0 // pred_fallthru
    _
  // Predicated region
  $region26: #{_lambda_.46} parent=0 // pred_check
    _
  $region27: #{_lambda_.46} parent=0 // pred_check_branch
    %84 = sbr.rel (0) target = $region29
  $region28: #{_lambda_.46} parent=0 // pred_region
    _
  $region29: #{_lambda_.46} parent=0 // pred_fallthru
    _

// kernel: _lambda_.47
$region0: #{_lambda_.47}
  #allocation0 [shape = 'u32[]', space=smem, size = 0x4, offset = 0x4, fixed_abs, tag = 'smem constant byte address 0x4 - core index']
  #allocation1 [shape = 'u32[72,128]{1,0:T(1,128)}', space=vmem, size = 0x9000, scoped, tag = 'internal scratch']
  #allocation2 [shape = 'f32[16,32]{1,0:T(8,128)}', space=vmem, size = 0x2000, scoped, tag = 'scratch operand']
  %s0 = inlined_call_operand.vmem [shape: f32[16,64], index: 0, kind: input, shape index: {}]
  %s1 = inlined_call_operand.vmem [shape: bf16[64,32], index: 1, kind: input, shape index: {}]
  %s2 = inlined_call_operand.vmem [shape: f32[1,32], index: 2, kind: input, shape index: {}]
  %s3 = inlined_call_operand.vmem [shape: f32[16,32], index: 3, kind: output, shape index: {}]
  %s4 = sld [smem:[#allocation0]]
  $region30: #{_lambda_.47} parent=0
    _
  %s6 = ssub.s32 1, %s4
  %s7 = scalar_select 0, %s6, %s4
  // Predicated region
  $region2: #{_lambda_.47} parent=0 // pred_check
    _
  $region3: #{_lambda_.47} parent=0 // pred_check_branch
    %9 = sbr.rel (0) target = $region5
  $region4: #{_lambda_.47} parent=0 // pred_region
    _
  $region5: #{_lambda_.47} parent=0 // pred_fallthru
    _
  // Predicated region
  $region6: #{_lambda_.47} parent=0 // pred_check
    _
  $region7: #{_lambda_.47} parent=0 // pred_check_branch
    %11 = sbr.rel (0) target = $region9
  $region8: #{_lambda_.47} parent=0 // pred_region
    _
  $region9: #{_lambda_.47} parent=0 // pred_fallthru
    _
  // Predicated region
  $region10: #{_lambda_.47} parent=0 // pred_check
    _
  $region11: #{_lambda_.47} parent=0 // pred_check_branch
    %13 = sbr.rel (0) target = $region13
  $region12: #{_lambda_.47} parent=0 // pred_region
    _
  $region13: #{_lambda_.47} parent=0 // pred_fallthru
    _
  %p15 = scmp.eq.s32.totalorder 0, 0
  // Predicated region
  $region14: #{_lambda_.47} parent=0 // pred_check
    %p16 = pneg %p15
  $region15: #{_lambda_.47} parent=0 // pred_check_branch
    %18 = sbr.rel (%p16) target = $region17
  $region16: #{_lambda_.47} parent=0 // pred_region
    %vm19 = vcmask 261120
    %20 = vst.msk [vmem:[#allocation2] sm:$0xff] %vm19, 0.0
    %21 = vst.msk [vmem:[#allocation2 + $0x8] sm:$0xff] %vm19, 0.0
  $region17: #{_lambda_.47} parent=0 // pred_fallthru
    _
  %v22 = vld [vmem:[#allocation2] sm:$0xff]
  %v23 = vld [vmem:[#allocation2 + $0x8] sm:$0xff]
  %v24 = vld [vmem:[%s0] sm:$0xff]
  %v25 = vld [vmem:[%s0 + $0x8] sm:$0xff]
  %v26 = vpack.c.bf16 %v25, %v24
  %v27 = vld [vmem:[%s1] sm:$0xf]
  %v28 = vld [vmem:[%s1 + $0x4] sm:$0xf]
  %v29 = vld [vmem:[%s1 + $0x8] sm:$0xf]
  %v30 = vld [vmem:[%s1 + $0xc] sm:$0xf]
  %v31 = vld [vmem:[%s1 + $0x10] sm:$0xf]
  %v32 = vld [vmem:[%s1 + $0x14] sm:$0xf]
  %v33 = vld [vmem:[%s1 + $0x18] sm:$0xf]
  %v34 = vld [vmem:[%s1 + $0x1c] sm:$0xf]
  %v43 = vunpack.c.l.b16 %v27
  %v44 = vunpack.c.l.b16 %v28
  %v45 = vunpack.c.l.b16 %v29
  %v46 = vunpack.c.l.b16 %v30
  %v47 = vunpack.c.l.b16 %v31
  %v48 = vunpack.c.l.b16 %v32
  %v49 = vunpack.c.l.b16 %v33
  %v50 = vunpack.c.l.b16 %v34
  %v51 = vpack.c.b16 %v44, %v43
  %v52 = vpack.c.b16 %v46, %v45
  %v53 = vpack.c.b16 %v48, %v47
  %v54 = vpack.c.b16 %v50, %v49
  %vm59 = vcmask 523264
  %v61 = vsel %vm59, %v26, 0
  %63 = vmatpush.bf16.msra.mxu0 0
  %64 = vmatpush.bf16.msra.mxu0 0
  %65 = vmatpush.bf16.msra.mxu0 0
  %66 = vmatpush.bf16.msra.mxu0 0
  %67 = vmatpush.bf16.msra.mxu0 %v54
  %68 = vmatpush.bf16.msra.mxu0 %v53
  %69 = vmatpush.bf16.msra.mxu0 %v52
  %70 = vmatpush.bf16.msra.mxu0 %v51
  %71 = vmatmul.bf16.gmra.mxu0 %v61
  %v72 = vpop.f32.mrf.mxu0
  %v73 = vadd.f32 0.0, %v72
  %v74 = vpop.f32.mrf.mxu0
  %v75 = vadd.f32 0.0, %v74
  %76 = vdwg.mxu0
  %v77 = vadd.f32 %v22, %v73
  %v78 = vadd.f32 %v23, %v75
  %vm79 = vcmask 261120
  %80 = vst.msk [vmem:[#allocation2] sm:$0xff] %vm79, %v77
  %81 = vst.msk [vmem:[#allocation2 + $0x8] sm:$0xff] %vm79, %v78
  // Predicated region
  $region18: #{_lambda_.47} parent=0 // pred_check
    %p82 = pneg %p15
  $region19: #{_lambda_.47} parent=0 // pred_check_branch
    %84 = sbr.rel (%p82) target = $region21
  $region20: #{_lambda_.47} parent=0 // pred_region
    %v85 = vld [vmem:[#allocation2] sm:$0xff]
    %v86 = vld [vmem:[#allocation2 + $0x8] sm:$0xff]
    %v87 = vld [vmem:[%s2] sm:$0x1]
    %v89 = vperm.slane %v87, 0
    %v91 = vadd.f32 %v85, %v89
    %v92 = vadd.f32 %v86, %v89
    %93 = vst.msk [vmem:[%s3] sm:$0xff] %vm79, %v91
    %94 = vst.msk [vmem:[%s3 + $0x8] sm:$0xff] %vm79, %v92
  $region21: #{_lambda_.47} parent=0 // pred_fallthru
    _
  // Predicated region
  $region22: #{_lambda_.47} parent=0 // pred_check
    _
  $region23: #{_lambda_.47} parent=0 // pred_check_branch
    %96 = sbr.rel (0) target = $region25
  $region24: #{_lambda_.47} parent=0 // pred_region
    _
  $region25: #{_lambda_.47} parent=0 // pred_fallthru
    _
  // Predicated region
  $region26: #{_lambda_.47} parent=0 // pred_check
    _
  $region27: #{_lambda_.47} parent=0 // pred_check_branch
    %98 = sbr.rel (0) target = $region29
  $region28: #{_lambda_.47} parent=0 // pred_region
    _
  $region29: #{_lambda_.47} parent=0 // pred_fallthru
    _

// kernel: _lambda_.62
$region0: #{_lambda_.62}
  #allocation0 [shape = 'u32[]', space=smem, size = 0x4, offset = 0x4, fixed_abs, tag = 'smem constant byte address 0x4 - core index']
  #allocation1 [shape = 'u32[72,128]{1,0:T(1,128)}', space=vmem, size = 0x9000, scoped, tag = 'internal scratch']
  #allocation2 [shape = 'f32[16,64]{1,0:T(8,128)}', space=vmem, size = 0x2000, scoped, tag = 'scratch operand']
  %s0 = inlined_call_operand.vmem [shape: f32[16,32], index: 0, kind: input, shape index: {}]
  %s1 = inlined_call_operand.vmem [shape: bf16[32,64], index: 1, kind: input, shape index: {}]
  %s2 = inlined_call_operand.vmem [shape: f32[1,64], index: 2, kind: input, shape index: {}]
  %s3 = inlined_call_operand.vmem [shape: f32[16,64], index: 3, kind: output, shape index: {}]
  %s4 = sld [smem:[#allocation0]]
  $region30: #{_lambda_.62} parent=0
    _
  %s6 = ssub.s32 1, %s4
  %s7 = scalar_select 0, %s6, %s4
  // Predicated region
  $region2: #{_lambda_.62} parent=0 // pred_check
    _
  $region3: #{_lambda_.62} parent=0 // pred_check_branch
    %9 = sbr.rel (0) target = $region5
  $region4: #{_lambda_.62} parent=0 // pred_region
    _
  $region5: #{_lambda_.62} parent=0 // pred_fallthru
    _
  // Predicated region
  $region6: #{_lambda_.62} parent=0 // pred_check
    _
  $region7: #{_lambda_.62} parent=0 // pred_check_branch
    %11 = sbr.rel (0) target = $region9
  $region8: #{_lambda_.62} parent=0 // pred_region
    _
  $region9: #{_lambda_.62} parent=0 // pred_fallthru
    _
  // Predicated region
  $region10: #{_lambda_.62} parent=0 // pred_check
    _
  $region11: #{_lambda_.62} parent=0 // pred_check_branch
    %13 = sbr.rel (0) target = $region13
  $region12: #{_lambda_.62} parent=0 // pred_region
    _
  $region13: #{_lambda_.62} parent=0 // pred_fallthru
    _
  %p15 = scmp.eq.s32.totalorder 0, 0
  // Predicated region
  $region14: #{_lambda_.62} parent=0 // pred_check
    %p16 = pneg %p15
  $region15: #{_lambda_.62} parent=0 // pred_check_branch
    %18 = sbr.rel (%p16) target = $region17
  $region16: #{_lambda_.62} parent=0 // pred_region
    %vm19 = vcmask 523264
    %20 = vst.msk [vmem:[#allocation2] sm:$0xff] %vm19, 0.0
    %21 = vst.msk [vmem:[#allocation2 + $0x8] sm:$0xff] %vm19, 0.0
  $region17: #{_lambda_.62} parent=0 // pred_fallthru
    _
  %v22 = vld [vmem:[#allocation2] sm:$0xff]
  %v23 = vld [vmem:[#allocation2 + $0x8] sm:$0xff]
  %v24 = vld [vmem:[%s0] sm:$0xff]
  %v25 = vld [vmem:[%s0 + $0x8] sm:$0xff]
  %v26 = vpack.c.bf16 %v25, %v24
  %v27 = vld [vmem:[%s1] sm:$0xf]
  %v28 = vld [vmem:[%s1 + $0x4] sm:$0xf]
  %v29 = vld [vmem:[%s1 + $0x8] sm:$0xf]
  %v30 = vld [vmem:[%s1 + $0xc] sm:$0xf]
  %v35 = vunpack.c.l.b16 %v27
  %v36 = vunpack.c.l.b16 %v28
  %v37 = vunpack.c.l.b16 %v29
  %v38 = vunpack.c.l.b16 %v30
  %v39 = vpack.c.b16 %v36, %v35
  %v40 = vpack.c.b16 %v38, %v37
  %vm43 = vcmask 261120
  %v45 = vsel %vm43, %v26, 0
  %47 = vmatpush.bf16.msra.mxu0 0
  %48 = vmatpush.bf16.msra.mxu0 0
  %49 = vmatpush.bf16.msra.mxu0 0
  %50 = vmatpush.bf16.msra.mxu0 0
  %51 = vmatpush.bf16.msra.mxu0 0
  %52 = vmatpush.bf16.msra.mxu0 0
  %53 = vmatpush.bf16.msra.mxu0 %v40
  %54 = vmatpush.bf16.msra.mxu0 %v39
  %55 = vmatmul.bf16.gmra.mxu0 %v45
  %v56 = vpop.f32.mrf.mxu0
  %v57 = vadd.f32 0.0, %v56
  %v58 = vpop.f32.mrf.mxu0
  %v59 = vadd.f32 0.0, %v58
  %60 = vdwg.mxu0
  %v61 = vadd.f32 %v22, %v57
  %v62 = vadd.f32 %v23, %v59
  %vm63 = vcmask 523264
  %64 = vst.msk [vmem:[#allocation2] sm:$0xff] %vm63, %v61
  %65 = vst.msk [vmem:[#allocation2 + $0x8] sm:$0xff] %vm63, %v62
  // Predicated region
  $region18: #{_lambda_.62} parent=0 // pred_check
    %p66 = pneg %p15
  $region19: #{_lambda_.62} parent=0 // pred_check_branch
    %68 = sbr.rel (%p66) target = $region21
  $region20: #{_lambda_.62} parent=0 // pred_region
    %v69 = vld [vmem:[#allocation2] sm:$0xff]
    %v70 = vld [vmem:[#allocation2 + $0x8] sm:$0xff]
    %v71 = vld [vmem:[%s2] sm:$0x1]
    %v73 = vperm.slane %v71, 0
    %v75 = vadd.f32 %v69, %v73
    %v76 = vadd.f32 %v70, %v73
    %77 = vst.msk [vmem:[%s3] sm:$0xff] %vm63, %v75
    %78 = vst.msk [vmem:[%s3 + $0x8] sm:$0xff] %vm63, %v76
  $region21: #{_lambda_.62} parent=0 // pred_fallthru
    _
  // Predicated region
  $region22: #{_lambda_.62} parent=0 // pred_check
    _
  $region23: #{_lambda_.62} parent=0 // pred_check_branch
    %80 = sbr.rel (0) target = $region25
  $region24: #{_lambda_.62} parent=0 // pred_region
    _
  $region25: #{_lambda_.62} parent=0 // pred_fallthru
    _
  // Predicated region
  $region26: #{_lambda_.62} parent=0 // pred_check
    _
  $region27: #{_lambda_.62} parent=0 // pred_check_branch
    %82 = sbr.rel (0) target = $region29
  $region28: #{_lambda_.62} parent=0 // pred_region
    _
  $region29: #{_lambda_.62} parent=0 // pred_fallthru
    _

// kernel: _lambda_.81
$region0: #{_lambda_.81}
  #allocation0 [shape = 'u32[]', space=smem, size = 0x4, offset = 0x4, fixed_abs, tag = 'smem constant byte address 0x4 - core index']
  #allocation1 [shape = 'u32[72,128]{1,0:T(1,128)}', space=vmem, size = 0x9000, scoped, tag = 'internal scratch']
  #allocation2 [shape = 'f32[16,32]{1,0:T(8,128)}', space=vmem, size = 0x2000, scoped, tag = 'scratch operand']
  %s0 = inlined_call_operand.vmem [shape: f32[16,32], index: 0, kind: input, shape index: {}]
  %s1 = inlined_call_operand.vmem [shape: bf16[32,32], index: 1, kind: input, shape index: {}]
  %s2 = inlined_call_operand.vmem [shape: f32[1,32], index: 2, kind: input, shape index: {}]
  %s3 = inlined_call_operand.hbm [shape: f32[16,32], index: 3, kind: output, shape index: {}]
  %s4 = sld [smem:[#allocation0]]
  $region30: #{_lambda_.81} parent=0
    _
  %s6 = ssub.s32 1, %s4
  %s7 = scalar_select 0, %s6, %s4
  $region1: #{_lambda_.81} parent=0
    #allocation3 [shape = 'u8[8192]{0}', space=vmem, size = 0x2000, scoped, tag = 'output window, operand 0, single buffered']
    #allocation4 [shape = 's32[1]{0}', space=sflag, size = 0x4, scoped, tag = 'scoped memory for _lambda_.81']
    %8 = vsyncpa [#allocation4], 0
    // Predicated region
    $region2: #{_lambda_.81} parent=1 // pred_check
      _
    $region3: #{_lambda_.81} parent=1 // pred_check_branch
      %10 = sbr.rel (0) target = $region5
    $region4: #{_lambda_.81} parent=1 // pred_region
      _
    $region5: #{_lambda_.81} parent=1 // pred_fallthru
      _
    // Predicated region
    $region6: #{_lambda_.81} parent=1 // pred_check
      _
    $region7: #{_lambda_.81} parent=1 // pred_check_branch
      %12 = sbr.rel (0) target = $region9
    $region8: #{_lambda_.81} parent=1 // pred_region
      _
    $region9: #{_lambda_.81} parent=1 // pred_fallthru
      _
    // Predicated region
    $region10: #{_lambda_.81} parent=1 // pred_check
      _
    $region11: #{_lambda_.81} parent=1 // pred_check_branch
      %14 = sbr.rel (0) target = $region13
    $region12: #{_lambda_.81} parent=1 // pred_region
      _
    $region13: #{_lambda_.81} parent=1 // pred_fallthru
      _
    %p16 = scmp.eq.s32.totalorder 0, 0
    // Predicated region
    $region14: #{_lambda_.81} parent=1 // pred_check
      %p17 = pneg %p16
    $region15: #{_lambda_.81} parent=1 // pred_check_branch
      %19 = sbr.rel (%p17) target = $region17
    $region16: #{_lambda_.81} parent=1 // pred_region
      %vm20 = vcmask 261120
      %21 = vst.msk [vmem:[#allocation2] sm:$0xff] %vm20, 0.0
      %22 = vst.msk [vmem:[#allocation2 + $0x8] sm:$0xff] %vm20, 0.0
    $region17: #{_lambda_.81} parent=1 // pred_fallthru
      _
    %v23 = vld [vmem:[#allocation2] sm:$0xff]
    %v24 = vld [vmem:[#allocation2 + $0x8] sm:$0xff]
    %v25 = vld [vmem:[%s0] sm:$0xff]
    %v26 = vld [vmem:[%s0 + $0x8] sm:$0xff]
    %v27 = vpack.c.bf16 %v26, %v25
    %v28 = vld [vmem:[%s1] sm:$0xf]
    %v29 = vld [vmem:[%s1 + $0x4] sm:$0xf]
    %v30 = vld [vmem:[%s1 + $0x8] sm:$0xf]
    %v31 = vld [vmem:[%s1 + $0xc] sm:$0xf]
    %v36 = vunpack.c.l.b16 %v28
    %v37 = vunpack.c.l.b16 %v29
    %v38 = vunpack.c.l.b16 %v30
    %v39 = vunpack.c.l.b16 %v31
    %v40 = vpack.c.b16 %v37, %v36
    %v41 = vpack.c.b16 %v39, %v38
    %vm44 = vcmask 261120
    %v46 = vsel %vm44, %v27, 0
    %48 = vmatpush.bf16.msra.mxu0 0
    %49 = vmatpush.bf16.msra.mxu0 0
    %50 = vmatpush.bf16.msra.mxu0 0
    %51 = vmatpush.bf16.msra.mxu0 0
    %52 = vmatpush.bf16.msra.mxu0 0
    %53 = vmatpush.bf16.msra.mxu0 0
    %54 = vmatpush.bf16.msra.mxu0 %v41
    %55 = vmatpush.bf16.msra.mxu0 %v40
    %56 = vmatmul.bf16.gmra.mxu0 %v46
    %v57 = vpop.f32.mrf.mxu0
    %v58 = vadd.f32 0.0, %v57
    %v59 = vpop.f32.mrf.mxu0
    %v60 = vadd.f32 0.0, %v59
    %61 = vdwg.mxu0
    %v62 = vadd.f32 %v23, %v58
    %v63 = vadd.f32 %v24, %v60
    %64 = vst.msk [vmem:[#allocation2] sm:$0xff] %vm44, %v62
    %65 = vst.msk [vmem:[#allocation2 + $0x8] sm:$0xff] %vm44, %v63
    // Predicated region
    $region18: #{_lambda_.81} parent=1 // pred_check
      %p66 = pneg %p16
    $region19: #{_lambda_.81} parent=1 // pred_check_branch
      %68 = sbr.rel (%p66) target = $region21
    $region20: #{_lambda_.81} parent=1 // pred_region
      %v69 = vld [vmem:[#allocation2] sm:$0xff]
      %v70 = vld [vmem:[#allocation2 + $0x8] sm:$0xff]
      %v71 = vld [vmem:[%s2] sm:$0x1]
      %v73 = vperm.slane %v71, 0
      %v75 = vadd.f32 %v69, %v73
      %v76 = vadd.f32 %v70, %v73
      %77 = vst.msk [vmem:[#allocation3] sm:$0xff] %vm44, %v75
      %78 = vst.msk [vmem:[#allocation3 + $0x8] sm:$0xff] %vm44, %v76
    $region21: #{_lambda_.81} parent=1 // pred_fallthru
      _
    // Predicated region
    $region22: #{_lambda_.81} parent=1 // pred_check
      _
    $region23: #{_lambda_.81} parent=1 // pred_check_branch
      %80 = sbr.rel (0) target = $region25
    $region24: #{_lambda_.81} parent=1 // pred_region
      %82 = vsyncadd [#allocation4], 0
      %s83 = sshll.u32 [#allocation3], 4
      %s84 = int_to_ptr.vmem [resolvable:$true] %s83
      %s85 = sshll.u32 %s3, 4
      %s86 = int_to_ptr.hbm [resolvable:$true] %s85
      %91 = dma.vmem_to_hbm [thread:$0]  %s84, 256, %s86, [#allocation4], 128, 128, 8
    $region25: #{_lambda_.81} parent=1 // pred_fallthru
      _
    // Predicated region
    $region26: #{_lambda_.81} parent=1 // pred_check
      _
    $region27: #{_lambda_.81} parent=1 // pred_check_branch
      %93 = sbr.rel (0) target = $region29
    $region28: #{_lambda_.81} parent=1 // pred_region
      %95 = dma.done [#allocation4], 256
    $region29: #{_lambda_.81} parent=1 // pred_fallthru
      _
    %96 = vsyncpa [#allocation4], 1

// kernel: _lambda_.58
$region0: #{_lambda_.58}
  #allocation0 [shape = 'u32[]', space=smem, size = 0x4, offset = 0x4, fixed_abs, tag = 'smem constant byte address 0x4 - core index']
  #allocation1 [shape = 'u32[72,128]{1,0:T(1,128)}', space=vmem, size = 0x9000, scoped, tag = 'internal scratch']
  %s0 = inlined_call_operand.vmem [shape: f32[2,8,96], index: 0, kind: input, shape index: {}]
  %s1 = inlined_call_operand.vmem [shape: s32[2,1,8], index: 1, kind: input, shape index: {}]
  %s2 = inlined_call_operand.vmem [shape: f32[2,8,32], index: 2, kind: output, shape index: {}]
  %s3 = sld [smem:[#allocation0]]
  $region41: #{_lambda_.58} parent=0
    _
  %s5 = ssub.s32 1, %s3
  %s6 = scalar_select 0, %s5, %s3
  loop: start=0, step=1, limit=4
  $region2: #{_lambda_.58} parent=0 // loop_pre_header
    _
  $region3: #{_lambda_.58} parent=0 // loop_header
    %s8 = sphi 0, %s12
    %p9 = scmp.ge.s32.totalorder %s8, 4
    %s18 = sphi 0, %s20
    %s21 = sphi 0, %s18
    %s22 = sphi 0, %s21
    %s38 = sphi 0, %s22
    %s44 = sphi 0, %s46
    %s47 = sphi 0, %s44
    %s48 = sphi 0, %s47
    %s64 = sphi 0, %s48
    %s70 = sphi 0, %s72
    %s73 = sphi 0, %s70
    %s74 = sphi 0, %s73
    %s90 = sphi 0, %s74
  $region4: #{_lambda_.58} parent=0 // loop_header_branch
    %11 = sbr.rel (%p9) target = $region8
  $region5: #{_lambda_.58} parent=0 // loop_body
    %s13 = ssub.s32 %s8, 1
    %s14 = ssub.s32 %s8, 2
    %s15 = sadd.s32 %s8, 1
    %s16 = ssub.s32 %s8, %s15
    %p17 = scmp.eq.s32.totalorder %s16, 0
    %s19 = sadd.s32 %s18, 1
    %s20 = scalar_select %p17, %s18, %s19
    %p23 = pneg %p17
    %p24 = scmp.eq.s32.totalorder %s8, 1
    %p25 = por %p23, %p24
    %p26 = scmp.ne.s32.totalorder %s18, %s21
    %p27 = scmp.eq.s32.totalorder %s8, 0
    %p28 = por %p26, %p27
    %p29 = scmp.ne.s32.totalorder %s18, %s21
    %p30 = scmp.eq.s32.totalorder %s13, 1
    %p31 = por %p29, %p30
    %p32 = scmp.ne.s32.totalorder %s21, %s22
    %p33 = scmp.eq.s32.totalorder %s13, 0
    %p34 = por %p32, %p33
    %p35 = scmp.ne.s32.totalorder %s21, %s22
    %p36 = scmp.eq.s32.totalorder %s14, 1
    %p37 = por %p35, %p36
    %p39 = scmp.ne.s32.totalorder %s22, %s38
    %p40 = scmp.eq.s32.totalorder %s14, 0
    %p41 = por %p39, %p40
    %s42 = ssub.s32 %s8, %s15
    %p43 = scmp.eq.s32.totalorder %s42, 0
    %s45 = sadd.s32 %s44, 1
    %s46 = scalar_select %p43, %s44, %s45
    %p49 = pneg %p43
    %p50 = scmp.eq.s32.totalorder %s8, 1
    %p51 = por %p49, %p50
    %p52 = scmp.ne.s32.totalorder %s44, %s47
    %p53 = scmp.eq.s32.totalorder %s8, 0
    %p54 = por %p52, %p53
    %p55 = scmp.ne.s32.totalorder %s44, %s47
    %p56 = scmp.eq.s32.totalorder %s13, 1
    %p57 = por %p55, %p56
    %p58 = scmp.ne.s32.totalorder %s47, %s48
    %p59 = scmp.eq.s32.totalorder %s13, 0
    %p60 = por %p58, %p59
    %p61 = scmp.ne.s32.totalorder %s47, %s48
    %p62 = scmp.eq.s32.totalorder %s14, 1
    %p63 = por %p61, %p62
    %p65 = scmp.ne.s32.totalorder %s48, %s64
    %p66 = scmp.eq.s32.totalorder %s14, 0
    %p67 = por %p65, %p66
    %s68 = ssub.s32 %s8, %s15
    %p69 = scmp.eq.s32.totalorder %s68, 0
    %s71 = sadd.s32 %s70, 1
    %s72 = scalar_select %p69, %s70, %s71
    %p75 = pneg %p69
    %p76 = scmp.eq.s32.totalorder %s8, 1
    %p77 = por %p75, %p76
    %p78 = scmp.ne.s32.totalorder %s70, %s73
    %p79 = scmp.eq.s32.totalorder %s8, 0
    %p80 = por %p78, %p79
    %p81 = scmp.ne.s32.totalorder %s70, %s73
    %p82 = scmp.eq.s32.totalorder %s13, 1
    %p83 = por %p81, %p82
    %p84 = scmp.ne.s32.totalorder %s73, %s74
    %p85 = scmp.eq.s32.totalorder %s13, 0
    %p86 = por %p84, %p85
    %p87 = scmp.ne.s32.totalorder %s73, %s74
    %p88 = scmp.eq.s32.totalorder %s14, 1
    %p89 = por %p87, %p88
    %p91 = scmp.ne.s32.totalorder %s74, %s90
    %p92 = scmp.eq.s32.totalorder %s14, 0
    %p93 = por %p91, %p92
    %p94 = scmp.le.s32.totalorder 1, %s8
    %p95 = scmp.lt.s32.totalorder %s8, 3
    %p96 = pnand %p94, %p95
    %p97 = pneg %p96
    // Predicated region
    $region9: #{_lambda_.58} parent=5 // pred_check
      _
    $region10: #{_lambda_.58} parent=5 // pred_check_branch
      %99 = sbr.rel (%p96) target = $region12
    $region11: #{_lambda_.58} parent=5 // pred_region
      %s100 = ssub.s32 %s8, 1
    $region12: #{_lambda_.58} parent=5 // pred_fallthru
      _
    %p101 = scmp.lt.s32.totalorder %s8, 2
    // Predicated region
    $region13: #{_lambda_.58} parent=5 // pred_check
      %p102 = pneg %p101
    $region14: #{_lambda_.58} parent=5 // pred_check_branch
      %104 = sbr.rel (%p102) target = $region16
    $region15: #{_lambda_.58} parent=5 // pred_region
      // Predicated region
      $region17: #{_lambda_.58} parent=15 // pred_check
        %p105 = pneg %p28
      $region18: #{_lambda_.58} parent=15 // pred_check_branch
        %107 = sbr.rel (%p105) target = $region20
      $region19: #{_lambda_.58} parent=15 // pred_region
        %p108 = scmp.lt.s32.totalorder %s8, 1
        %s109 = scalar_select %p108, %s8, 1
        %s110 = smul.addr %s109, 8
        %s111 = scalar_lea.vmem %s0, %s110
      $region20: #{_lambda_.58} parent=15 // pred_fallthru
        _
      // Predicated region
      $region21: #{_lambda_.58} parent=15 // pred_check
        %p112 = pneg %p54
      $region22: #{_lambda_.58} parent=15 // pred_check_branch
        %114 = sbr.rel (%p112) target = $region24
      $region23: #{_lambda_.58} parent=15 // pred_region
        %p115 = scmp.lt.s32.totalorder %s8, 1
        %s116 = scalar_select %p115, %s8, 1
        %s117 = scalar_lea.vmem %s1, %s116
      $region24: #{_lambda_.58} parent=15 // pred_fallthru
        _
    $region16: #{_lambda_.58} parent=5 // pred_fallthru
      _
    %p118 = scmp.le.s32.totalorder 1, %s8
    %p119 = scmp.lt.s32.totalorder %s8, 3
    %p120 = pnand %p118, %p119
    %p121 = pneg %p120
    // Predicated region
    $region25: #{_lambda_.58} parent=5 // pred_check
      _
    $region26: #{_lambda_.58} parent=5 // pred_check_branch
      %123 = sbr.rel (%p120) target = $region28
    $region27: #{_lambda_.58} parent=5 // pred_region
      %s124 = ssub.s32 %s8, 1
      %p125 = scmp.lt.s32.totalorder %s13, 1
      %s126 = scalar_select %p125, %s13, 1
      %s127 = smul.addr %s126, 8
      %s128 = scalar_lea.vmem %s0, %s127
      %p129 = pneg %p34
      %p130 = pneg %p31
      %p131 = scmp.lt.s32.totalorder %s13, 1
      %s132 = scalar_select %p131, %s13, 1
      %s133 = scalar_lea.vmem %s1, %s132
      %p134 = pneg %p60
      %p135 = pneg %p57
      %p136 = pneg %p86
      %p137 = pneg %p83
      %p138 = scmp.lt.s32.totalorder %s13, 1
      %s139 = scalar_select %p138, %s13, 1
      %s140 = smul.addr %s139, 8
      %s141 = scalar_lea.vmem %s2, %s140
      %p142 = scmp.lt.s32.totalorder %s13, 1
      %s143 = scalar_select %p142, %s13, 1
      %s144 = smul.addr %s143, 8
      %s145 = scalar_lea.vmem %s0, %s144
      %p146 = scmp.lt.s32.totalorder %s13, 1
      %s147 = scalar_select %p146, %s13, 1
      %s148 = scalar_lea.vmem %s1, %s147
      %p149 = scmp.lt.s32.totalorder %s13, 1
      %s150 = scalar_select %p149, %s13, 1
      %s151 = smul.addr %s150, 8
      %s152 = scalar_lea.vmem %s2, %s151
      %v154 = vld [vmem:[%s145] sm:$0xff]
      %v155 = vld [vmem:[%s148] sm:$0x1]
      %vm156 = vcmp.gt.s32.totalorder %v155, 0
      %v157 = vlaneseq
      %v158 = vshrl.u32 %v157, 7
      %v159 = vlaneseq
      %v160 = vand.u32 %v159, 127
      %vm161 = vcmp.le.s32.totalorder %v160, %v158
      %v162 = vsel %vm156, 1, 0
      %v163 = vperm.slane %v162, 0
      %vm164 = vcmp.eq.s32.totalorder %v163, 1
      %vm165 = vmand %vm164, %vm161
      %v166 = vpack.c.bf16 %v154, %v154
      %v168 = vunpack.c.l.b16 %v166
      %v169 = vpack.c.b16 %v168, %v168
      %170 = vrot.lane.b32.xlu0 %v169, 96
      %v171 = vpop.permute.xlu0 %170
      %vm172 = vcmask 64512
      %v174 = vsel %vm172, %v166, 0
      %v177 = vsel %vm172, %v171, 0
      %179 = vmatpush.bf16.xpose.msra.mxu0 0
      %180 = vmatpush.bf16.xpose.msra.mxu0 0
      %181 = vmatpush.bf16.xpose.msra.mxu0 0
      %182 = vmatpush.bf16.xpose.msra.mxu0 0
      %183 = vmatpush.bf16.xpose.msra.mxu0 0
      %184 = vmatpush.bf16.xpose.msra.mxu0 0
      %185 = vmatpush.bf16.xpose.msra.mxu0 0
      %186 = vmatpush.bf16.xpose.msra.mxu0 %v177
      %187 = vmatmul.bf16.gmra.mxu0 %v174
      %v188 = vpop.f32.mrf.mxu0
      %v189 = vadd.f32 0.0, %v188
      %v190 = vpop.f32.mrf.mxu0
      %191 = vdwg.mxu0
      %v192 = vmul.f32 %v189, 0.35355338
      %v193 = vsel %vm165, %v192, -1e+09
      %v194 = vsel %vm172, %v193, -inf
      %195 = vmax.xlane.f32.xlu0 %v194
      %v196 = vpop.xlane.xlu0 %195
      %v197 = vsub.f32 %v193, %v196
      %v198 = vmul.f32 %v197, 1.442695
      %v199 = vpow.pop %v198
      %v200 = vsel %vm172, %v199, 0.0
      %201 = vadd.xlane.f32.xlu0 %v200
      %v202 = vpop.xlane.xlu0 %201
      %v203 = vrcp.pop %v202
      %v204 = vmul.f32 %v199, %v203
      %v205 = vpack.c.bf16 %v204, %v204
      %206 = vrot.lane.b32.xlu0 %v169, 64
      %v207 = vpop.permute.xlu0 %206
      %v209 = vsel %vm172, %v205, 0
      %vm211 = vcmask 1043456
      %v213 = vsel %vm211, %v207, 0
      %215 = vmatpush.bf16.msra.mxu0 0
      %216 = vmatpush.bf16.msra.mxu0 0
      %217 = vmatpush.bf16.msra.mxu0 0
      %218 = vmatpush.bf16.msra.mxu0 0
      %219 = vmatpush.bf16.msra.mxu0 0
      %220 = vmatpush.bf16.msra.mxu0 0
      %221 = vmatpush.bf16.msra.mxu0 0
      %222 = vmatpush.bf16.msra.mxu0 %v213
      %223 = vmatmul.bf16.gmra.mxu0 %v209
      %v224 = vpop.f32.mrf.mxu0
      %v225 = vadd.f32 0.0, %v224
      %v226 = vpop.f32.mrf.mxu0
      %227 = vdwg.mxu0
      %228 = vrot.lane.b32.xlu0 %v169, 120
      %v229 = vpop.permute.xlu0 %228
      %230 = vrot.lane.b32.xlu0 %v169, 88
      %v231 = vpop.permute.xlu0 %230
      %v233 = vsel %vm172, %v229, 0
      %v236 = vsel %vm172, %v231, 0
      %238 = vmatpush.bf16.xpose.msra.mxu0 0
      %239 = vmatpush.bf16.xpose.msra.mxu0 0
      %240 = vmatpush.bf16.xpose.msra.mxu0 0
      %241 = vmatpush.bf16.xpose.msra.mxu0 0
      %242 = vmatpush.bf16.xpose.msra.mxu0 0
      %243 = vmatpush.bf16.xpose.msra.mxu0 0
      %244 = vmatpush.bf16.xpose.msra.mxu0 0
      %245 = vmatpush.bf16.xpose.msra.mxu0 %v236
      %246 = vmatmul.bf16.gmra.mxu0 %v233
      %v247 = vpop.f32.mrf.mxu0
      %v248 = vadd.f32 0.0, %v247
      %v249 = vpop.f32.mrf.mxu0
      %250 = vdwg.mxu0
      %v251 = vmul.f32 %v248, 0.35355338
      %v252 = vsel %vm165, %v251, -1e+09
      %v253 = vsel %vm172, %v252, -inf
      %254 = vmax.xlane.f32.xlu0 %v253
      %v255 = vpop.xlane.xlu0 %254
      %v256 = vsub.f32 %v252, %v255
      %v257 = vmul.f32 %v256, 1.442695
      %v258 = vpow.pop %v257
      %v259 = vsel %vm172, %v258, 0.0
      %260 = vadd.xlane.f32.xlu0 %v259
      %v261 = vpop.xlane.xlu0 %260
      %v262 = vrcp.pop %v261
      %v263 = vmul.f32 %v258, %v262
      %v264 = vpack.c.bf16 %v263, %v263
      %265 = vrot.lane.b32.xlu0 %v169, 56
      %v266 = vpop.permute.xlu0 %265
      %v268 = vsel %vm172, %v264, 0
      %v271 = vsel %vm211, %v266, 0
      %273 = vmatpush.bf16.msra.mxu0 0
      %274 = vmatpush.bf16.msra.mxu0 0
      %275 = vmatpush.bf16.msra.mxu0 0
      %276 = vmatpush.bf16.msra.mxu0 0
      %277 = vmatpush.bf16.msra.mxu0 0
      %278 = vmatpush.bf16.msra.mxu0 0
      %279 = vmatpush.bf16.msra.mxu0 0
      %280 = vmatpush.bf16.msra.mxu0 %v271
      %281 = vmatmul.bf16.gmra.mxu0 %v268
      %v282 = vpop.f32.mrf.mxu0
      %v283 = vadd.f32 0.0, %v282
      %v284 = vpop.f32.mrf.mxu0
      %285 = vdwg.mxu0
      %286 = vrot.lane.b32.xlu0 %v169, 112
      %v287 = vpop.permute.xlu0 %286
      %288 = vrot.lane.b32.xlu0 %v169, 80
      %v289 = vpop.permute.xlu0 %288
      %v291 = vsel %vm172, %v287, 0
      %v294 = vsel %vm172, %v289, 0
      %296 = vmatpush.bf16.xpose.msra.mxu0 0
      %297 = vmatpush.bf16.xpose.msra.mxu0 0
      %298 = vmatpush.bf16.xpose.msra.mxu0 0
      %299 = vmatpush.bf16.xpose.msra.mxu0 0
      %300 = vmatpush.bf16.xpose.msra.mxu0 0
      %301 = vmatpush.bf16.xpose.msra.mxu0 0
      %302 = vmatpush.bf16.xpose.msra.mxu0 0
      %303 = vmatpush.bf16.xpose.msra.mxu0 %v294
      %304 = vmatmul.bf16.gmra.mxu0 %v291
      %v305 = vpop.f32.mrf.mxu0
      %v306 = vadd.f32 0.0, %v305
      %v307 = vpop.f32.mrf.mxu0
      %308 = vdwg.mxu0
      %v309 = vmul.f32 %v306, 0.35355338
      %v310 = vsel %vm165, %v309, -1e+09
      %v311 = vsel %vm172, %v310, -inf
      %312 = vmax.xlane.f32.xlu0 %v311
      %v313 = vpop.xlane.xlu0 %312
      %v314 = vsub.f32 %v310, %v313
      %v315 = vmul.f32 %v314, 1.442695
      %v316 = vpow.pop %v315
      %v317 = vsel %vm172, %v316, 0.0
      %318 = vadd.xlane.f32.xlu0 %v317
      %v319 = vpop.xlane.xlu0 %318
      %v320 = vrcp.pop %v319
      %v321 = vmul.f32 %v316, %v320
      %v322 = vpack.c.bf16 %v321, %v321
      %323 = vrot.lane.b32.xlu0 %v169, 48
      %v324 = vpop.permute.xlu0 %323
      %v326 = vsel %vm172, %v322, 0
      %v329 = vsel %vm211, %v324, 0
      %331 = vmatpush.bf16.msra.mxu0 0
      %332 = vmatpush.bf16.msra.mxu0 0
      %333 = vmatpush.bf16.msra.mxu0 0
      %334 = vmatpush.bf16.msra.mxu0 0
      %335 = vmatpush.bf16.msra.mxu0 0
      %336 = vmatpush.bf16.msra.mxu0 0
      %337 = vmatpush.bf16.msra.mxu0 0
      %338 = vmatpush.bf16.msra.mxu0 %v329
      %339 = vmatmul.bf16.gmra.mxu0 %v326
      %v340 = vpop.f32.mrf.mxu0
      %v341 = vadd.f32 0.0, %v340
      %v342 = vpop.f32.mrf.mxu0
      %343 = vdwg.mxu0
      %344 = vrot.lane.b32.xlu0 %v169, 104
      %v345 = vpop.permute.xlu0 %344
      %346 = vrot.lane.b32.xlu0 %v169, 72
      %v347 = vpop.permute.xlu0 %346
      %v349 = vsel %vm172, %v345, 0
      %v352 = vsel %vm172, %v347, 0
      %354 = vmatpush.bf16.xpose.msra.mxu0 0
      %355 = vmatpush.bf16.xpose.msra.mxu0 0
      %356 = vmatpush.bf16.xpose.msra.mxu0 0
      %357 = vmatpush.bf16.xpose.msra.mxu0 0
      %358 = vmatpush.bf16.xpose.msra.mxu0 0
      %359 = vmatpush.bf16.xpose.msra.mxu0 0
      %360 = vmatpush.bf16.xpose.msra.mxu0 0
      %361 = vmatpush.bf16.xpose.msra.mxu0 %v352
      %362 = vmatmul.bf16.gmra.mxu0 %v349
      %v363 = vpop.f32.mrf.mxu0
      %v364 = vadd.f32 0.0, %v363
      %v365 = vpop.f32.mrf.mxu0
      %366 = vdwg.mxu0
      %v367 = vmul.f32 %v364, 0.35355338
      %v368 = vsel %vm165, %v367, -1e+09
      %v369 = vsel %vm172, %v368, -inf
      %370 = vmax.xlane.f32.xlu0 %v369
      %v371 = vpop.xlane.xlu0 %370
      %v372 = vsub.f32 %v368, %v371
      %v373 = vmul.f32 %v372, 1.442695
      %v374 = vpow.pop %v373
      %v375 = vsel %vm172, %v374, 0.0
      %376 = vadd.xlane.f32.xlu0 %v375
      %v377 = vpop.xlane.xlu0 %376
      %v378 = vrcp.pop %v377
      %v379 = vmul.f32 %v374, %v378
      %v380 = vpack.c.bf16 %v379, %v379
      %381 = vrot.lane.b32.xlu0 %v169, 40
      %v382 = vpop.permute.xlu0 %381
      %v384 = vsel %vm172, %v380, 0
      %v387 = vsel %vm211, %v382, 0
      %389 = vmatpush.bf16.msra.mxu0 0
      %390 = vmatpush.bf16.msra.mxu0 0
      %391 = vmatpush.bf16.msra.mxu0 0
      %392 = vmatpush.bf16.msra.mxu0 0
      %393 = vmatpush.bf16.msra.mxu0 0
      %394 = vmatpush.bf16.msra.mxu0 0
      %395 = vmatpush.bf16.msra.mxu0 0
      %396 = vmatpush.bf16.msra.mxu0 %v387
      %397 = vmatmul.bf16.gmra.mxu0 %v384
      %v398 = vpop.f32.mrf.mxu0
      %v399 = vadd.f32 0.0, %v398
      %v400 = vpop.f32.mrf.mxu0
      %401 = vdwg.mxu0
      %403 = vrot.lane.b32.xlu0 %v283, 8
      %v404 = vpop.permute.xlu0 %403
      %407 = vrot.lane.b32.xlu0 %v341, 16
      %v408 = vpop.permute.xlu0 %407
      %411 = vrot.lane.b32.xlu0 %v399, 24
      %v412 = vpop.permute.xlu0 %411
      %v414 = vsel %vm172, %v225, %v404
      %vm415 = vcmask 130048
      %v416 = vsel %vm415, %v414, %v408
      %vm417 = vcmask 195584
      %v418 = vsel %vm417, %v416, %v412
      %vm419 = vcmask 261120
      %420 = vst.msk [vmem:[%s152] sm:$0xff] %vm419, %v418
      %p421 = scmp.lt.s32.totalorder %s13, 1
      %s422 = scalar_select %p421, %s13, 1
      %s423 = smul.addr %s422, 8
      %s424 = scalar_lea.vmem %s2, %s423
      // Predicated region
      $region29: #{_lambda_.58} parent=27 // pred_check
        %p425 = pneg %p83
      $region30: #{_lambda_.58} parent=27 // pred_check_branch
        %427 = sbr.rel (%p425) target = $region32
      $region31: #{_lambda_.58} parent=27 // pred_region
        _
      $region32: #{_lambda_.58} parent=27 // pred_fallthru
        _
    $region28: #{_lambda_.58} parent=5 // pred_fallthru
      _
    %p428 = scmp.le.s32.totalorder 2, %s8
    // Predicated region
    $region33: #{_lambda_.58} parent=5 // pred_check
      %p429 = pneg %p428
    $region34: #{_lambda_.58} parent=5 // pred_check_branch
      %431 = sbr.rel (%p429) target = $region36
    $region35: #{_lambda_.58} parent=5 // pred_region
      %s432 = ssub.s32 %s8, 2
      // Predicated region
      $region37: #{_lambda_.58} parent=35 // pred_check
        %p433 = pneg %p89
      $region38: #{_lambda_.58} parent=35 // pred_check_branch
        %435 = sbr.rel (%p433) target = $region40
      $region39: #{_lambda_.58} parent=35 // pred_region
        %p436 = scmp.lt.s32.totalorder %s14, 1
        %s437 = scalar_select %p436, %s14, 1
        %s438 = smul.addr %s437, 8
        %s439 = scalar_lea.vmem %s2, %s438
      $region40: #{_lambda_.58} parent=35 // pred_fallthru
        _
    $region36: #{_lambda_.58} parent=5 // pred_fallthru
      _
  $region6: #{_lambda_.58} parent=0 // loop_footer
    %s12 = sadd.s32 1, %s8
  $region7: #{_lambda_.58} parent=0 // loop_footer_branch
    %7 = sbr.rel target = $region3
  $region8: #{_lambda_.58} parent=0 // loop_exit
    _

// kernel: _lambda_.63
$region0: #{_lambda_.63}
  #allocation0 [shape = 'u32[]', space=smem, size = 0x4, offset = 0x4, fixed_abs, tag = 'smem constant byte address 0x4 - core index']
  #allocation1 [shape = 'u32[72,128]{1,0:T(1,128)}', space=vmem, size = 0x9000, scoped, tag = 'internal scratch']
  %s0 = inlined_call_operand.vmem [shape: f32[2,8,32], index: 0, kind: input, shape index: {}]
  %s1 = inlined_call_operand.vmem [shape: f32[2,8,64], index: 1, kind: input, shape index: {}]
  %s2 = inlined_call_operand.vmem [shape: s32[2,1,8], index: 2, kind: input, shape index: {}]
  %s3 = inlined_call_operand.vmem [shape: f32[2,8,32], index: 3, kind: output, shape index: {}]
  %s4 = sld [smem:[#allocation0]]
  $region45: #{_lambda_.63} parent=0
    _
  %s6 = ssub.s32 1, %s4
  %s7 = scalar_select 0, %s6, %s4
  loop: start=0, step=1, limit=4
  $region2: #{_lambda_.63} parent=0 // loop_pre_header
    _
  $region3: #{_lambda_.63} parent=0 // loop_header
    %s9 = sphi 0, %s13
    %p10 = scmp.ge.s32.totalorder %s9, 4
    %s19 = sphi 0, %s21
    %s22 = sphi 0, %s19
    %s23 = sphi 0, %s22
    %s39 = sphi 0, %s23
    %s45 = sphi 0, %s47
    %s48 = sphi 0, %s45
    %s49 = sphi 0, %s48
    %s65 = sphi 0, %s49
    %s71 = sphi 0, %s73
    %s74 = sphi 0, %s71
    %s75 = sphi 0, %s74
    %s91 = sphi 0, %s75
    %s97 = sphi 0, %s99
    %s100 = sphi 0, %s97
    %s101 = sphi 0, %s100
    %s117 = sphi 0, %s101
  $region4: #{_lambda_.63} parent=0 // loop_header_branch
    %12 = sbr.rel (%p10) target = $region8
  $region5: #{_lambda_.63} parent=0 // loop_body
    %s14 = ssub.s32 %s9, 1
    %s15 = ssub.s32 %s9, 2
    %s16 = sadd.s32 %s9, 1
    %s17 = ssub.s32 %s9, %s16
    %p18 = scmp.eq.s32.totalorder %s17, 0
    %s20 = sadd.s32 %s19, 1
    %s21 = scalar_select %p18, %s19, %s20
    %p24 = pneg %p18
    %p25 = scmp.eq.s32.totalorder %s9, 1
    %p26 = por %p24, %p25
    %p27 = scmp.ne.s32.totalorder %s19, %s22
    %p28 = scmp.eq.s32.totalorder %s9, 0
    %p29 = por %p27, %p28
    %p30 = scmp.ne.s32.totalorder %s19, %s22
    %p31 = scmp.eq.s32.totalorder %s14, 1
    %p32 = por %p30, %p31
    %p33 = scmp.ne.s32.totalorder %s22, %s23
    %p34 = scmp.eq.s32.totalorder %s14, 0
    %p35 = por %p33, %p34
    %p36 = scmp.ne.s32.totalorder %s22, %s23
    %p37 = scmp.eq.s32.totalorder %s15, 1
    %p38 = por %p36, %p37
    %p40 = scmp.ne.s32.totalorder %s23, %s39
    %p41 = scmp.eq.s32.totalorder %s15, 0
    %p42 = por %p40, %p41
    %s43 = ssub.s32 %s9, %s16
    %p44 = scmp.eq.s32.totalorder %s43, 0
    %s46 = sadd.s32 %s45, 1
    %s47 = scalar_select %p44, %s45, %s46
    %p50 = pneg %p44
    %p51 = scmp.eq.s32.totalorder %s9, 1
    %p52 = por %p50, %p51
    %p53 = scmp.ne.s32.totalorder %s45, %s48
    %p54 = scmp.eq.s32.totalorder %s9, 0
    %p55 = por %p53, %p54
    %p56 = scmp.ne.s32.totalorder %s45, %s48
    %p57 = scmp.eq.s32.totalorder %s14, 1
    %p58 = por %p56, %p57
    %p59 = scmp.ne.s32.totalorder %s48, %s49
    %p60 = scmp.eq.s32.totalorder %s14, 0
    %p61 = por %p59, %p60
    %p62 = scmp.ne.s32.totalorder %s48, %s49
    %p63 = scmp.eq.s32.totalorder %s15, 1
    %p64 = por %p62, %p63
    %p66 = scmp.ne.s32.totalorder %s49, %s65
    %p67 = scmp.eq.s32.totalorder %s15, 0
    %p68 = por %p66, %p67
    %s69 = ssub.s32 %s9, %s16
    %p70 = scmp.eq.s32.totalorder %s69, 0
    %s72 = sadd.s32 %s71, 1
    %s73 = scalar_select %p70, %s71, %s72
    %p76 = pneg %p70
    %p77 = scmp.eq.s32.totalorder %s9, 1
    %p78 = por %p76, %p77
    %p79 = scmp.ne.s32.totalorder %s71, %s74
    %p80 = scmp.eq.s32.totalorder %s9, 0
    %p81 = por %p79, %p80
    %p82 = scmp.ne.s32.totalorder %s71, %s74
    %p83 = scmp.eq.s32.totalorder %s14, 1
    %p84 = por %p82, %p83
    %p85 = scmp.ne.s32.totalorder %s74, %s75
    %p86 = scmp.eq.s32.totalorder %s14, 0
    %p87 = por %p85, %p86
    %p88 = scmp.ne.s32.totalorder %s74, %s75
    %p89 = scmp.eq.s32.totalorder %s15, 1
    %p90 = por %p88, %p89
    %p92 = scmp.ne.s32.totalorder %s75, %s91
    %p93 = scmp.eq.s32.totalorder %s15, 0
    %p94 = por %p92, %p93
    %s95 = ssub.s32 %s9, %s16
    %p96 = scmp.eq.s32.totalorder %s95, 0
    %s98 = sadd.s32 %s97, 1
    %s99 = scalar_select %p96, %s97, %s98
    %p102 = pneg %p96
    %p103 = scmp.eq.s32.totalorder %s9, 1
    %p104 = por %p102, %p103
    %p105 = scmp.ne.s32.totalorder %s97, %s100
    %p106 = scmp.eq.s32.totalorder %s9, 0
    %p107 = por %p105, %p106
    %p108 = scmp.ne.s32.totalorder %s97, %s100
    %p109 = scmp.eq.s32.totalorder %s14, 1
    %p110 = por %p108, %p109
    %p111 = scmp.ne.s32.totalorder %s100, %s101
    %p112 = scmp.eq.s32.totalorder %s14, 0
    %p113 = por %p111, %p112
    %p114 = scmp.ne.s32.totalorder %s100, %s101
    %p115 = scmp.eq.s32.totalorder %s15, 1
    %p116 = por %p114, %p115
    %p118 = scmp.ne.s32.totalorder %s101, %s117
    %p119 = scmp.eq.s32.totalorder %s15, 0
    %p120 = por %p118, %p119
    %p121 = scmp.le.s32.totalorder 1, %s9
    %p122 = scmp.lt.s32.totalorder %s9, 3
    %p123 = pnand %p121, %p122
    %p124 = pneg %p123
    // Predicated region
    $region9: #{_lambda_.63} parent=5 // pred_check
      _
    $region10: #{_lambda_.63} parent=5 // pred_check_branch
      %126 = sbr.rel (%p123) target = $region12
    $region11: #{_lambda_.63} parent=5 // pred_region
      %s127 = ssub.s32 %s9, 1
    $region12: #{_lambda_.63} parent=5 // pred_fallthru
      _
    %p128 = scmp.lt.s32.totalorder %s9, 2
    // Predicated region
    $region13: #{_lambda_.63} parent=5 // pred_check
      %p129 = pneg %p128
    $region14: #{_lambda_.63} parent=5 // pred_check_branch
      %131 = sbr.rel (%p129) target = $region16
    $region15: #{_lambda_.63} parent=5 // pred_region
      // Predicated region
      $region17: #{_lambda_.63} parent=15 // pred_check
        %p132 = pneg %p29
      $region18: #{_lambda_.63} parent=15 // pred_check_branch
        %134 = sbr.rel (%p132) target = $region20
      $region19: #{_lambda_.63} parent=15 // pred_region
        %p135 = scmp.lt.s32.totalorder %s9, 1
        %s136 = scalar_select %p135, %s9, 1
        %s137 = smul.addr %s136, 8
        %s138 = scalar_lea.vmem %s0, %s137
      $region20: #{_lambda_.63} parent=15 // pred_fallthru
        _
      // Predicated region
      $region21: #{_lambda_.63} parent=15 // pred_check
        %p139 = pneg %p55
      $region22: #{_lambda_.63} parent=15 // pred_check_branch
        %141 = sbr.rel (%p139) target = $region24
      $region23: #{_lambda_.63} parent=15 // pred_region
        %p142 = scmp.lt.s32.totalorder %s9, 1
        %s143 = scalar_select %p142, %s9, 1
        %s144 = smul.addr %s143, 8
        %s145 = scalar_lea.vmem %s1, %s144
      $region24: #{_lambda_.63} parent=15 // pred_fallthru
        _
      // Predicated region
      $region25: #{_lambda_.63} parent=15 // pred_check
        %p146 = pneg %p81
      $region26: #{_lambda_.63} parent=15 // pred_check_branch
        %148 = sbr.rel (%p146) target = $region28
      $region27: #{_lambda_.63} parent=15 // pred_region
        %p149 = scmp.lt.s32.totalorder %s9, 1
        %s150 = scalar_select %p149, %s9, 1
        %s151 = scalar_lea.vmem %s2, %s150
      $region28: #{_lambda_.63} parent=15 // pred_fallthru
        _
    $region16: #{_lambda_.63} parent=5 // pred_fallthru
      _
    %p152 = scmp.le.s32.totalorder 1, %s9
    %p153 = scmp.lt.s32.totalorder %s9, 3
    %p154 = pnand %p152, %p153
    %p155 = pneg %p154
    // Predicated region
    $region29: #{_lambda_.63} parent=5 // pred_check
      _
    $region30: #{_lambda_.63} parent=5 // pred_check_branch
      %157 = sbr.rel (%p154) target = $region32
    $region31: #{_lambda_.63} parent=5 // pred_region
      %s158 = ssub.s32 %s9, 1
      %p159 = scmp.lt.s32.totalorder %s14, 1
      %s160 = scalar_select %p159, %s14, 1
      %s161 = smul.addr %s160, 8
      %s162 = scalar_lea.vmem %s0, %s161
      %p163 = pneg %p35
      %p164 = pneg %p32
      %p165 = scmp.lt.s32.totalorder %s14, 1
      %s166 = scalar_select %p165, %s14, 1
      %s167 = smul.addr %s166, 8
      %s168 = scalar_lea.vmem %s1, %s167
      %p169 = pneg %p61
      %p170 = pneg %p58
      %p171 = scmp.lt.s32.totalorder %s14, 1
      %s172 = scalar_select %p171, %s14, 1
      %s173 = scalar_lea.vmem %s2, %s172
      %p174 = pneg %p87
      %p175 = pneg %p84
      %p176 = pneg %p113
      %p177 = pneg %p110
      %p178 = scmp.lt.s32.totalorder %s14, 1
      %s179 = scalar_select %p178, %s14, 1
      %s180 = smul.addr %s179, 8
      %s181 = scalar_lea.vmem %s3, %s180
      %p182 = scmp.lt.s32.totalorder %s14, 1
      %s183 = scalar_select %p182, %s14, 1
      %s184 = smul.addr %s183, 8
      %s185 = scalar_lea.vmem %s0, %s184
      %p186 = scmp.lt.s32.totalorder %s14, 1
      %s187 = scalar_select %p186, %s14, 1
      %s188 = smul.addr %s187, 8
      %s189 = scalar_lea.vmem %s1, %s188
      %p190 = scmp.lt.s32.totalorder %s14, 1
      %s191 = scalar_select %p190, %s14, 1
      %s192 = scalar_lea.vmem %s2, %s191
      %p193 = scmp.lt.s32.totalorder %s14, 1
      %s194 = scalar_select %p193, %s14, 1
      %s195 = smul.addr %s194, 8
      %s196 = scalar_lea.vmem %s3, %s195
      %v198 = vld [vmem:[%s185] sm:$0xff]
      %v199 = vld [vmem:[%s189] sm:$0xff]
      %v200 = vld [vmem:[%s192] sm:$0x1]
      %vm201 = vcmp.gt.s32.totalorder %v200, 0
      %v202 = vpack.c.bf16 %v198, %v198
      %v203 = vpack.c.bf16 %v199, %v199
      %vm204 = vcmask 64512
      %v206 = vsel %vm204, %v202, 0
      %v209 = vsel %vm204, %v203, 0
      %211 = vmatpush.bf16.xpose.msra.mxu0 0
      %212 = vmatpush.bf16.xpose.msra.mxu0 0
      %213 = vmatpush.bf16.xpose.msra.mxu0 0
      %214 = vmatpush.bf16.xpose.msra.mxu0 0
      %215 = vmatpush.bf16.xpose.msra.mxu0 0
      %216 = vmatpush.bf16.xpose.msra.mxu0 0
      %217 = vmatpush.bf16.xpose.msra.mxu0 0
      %218 = vmatpush.bf16.xpose.msra.mxu0 %v209
      %219 = vmatmul.bf16.gmra.mxu0 %v206
      %v220 = vpop.f32.mrf.mxu0
      %v221 = vadd.f32 0.0, %v220
      %v222 = vpop.f32.mrf.mxu0
      %223 = vdwg.mxu0
      %v224 = vmul.f32 %v221, 0.35355338
      %v225 = vsel %vm201, 1, 0
      %v226 = vperm.slane %v225, 0
      %vm227 = vcmp.eq.s32.totalorder %v226, 1
      %v228 = vsel %vm227, %v224, -1e+09
      %v229 = vsel %vm204, %v228, -inf
      %230 = vmax.xlane.f32.xlu0 %v229
      %v231 = vpop.xlane.xlu0 %230
      %v232 = vsub.f32 %v228, %v231
      %v233 = vmul.f32 %v232, 1.442695
      %v234 = vpow.pop %v233
      %v235 = vsel %vm204, %v234, 0.0
      %236 = vadd.xlane.f32.xlu0 %v235
      %v237 = vpop.xlane.xlu0 %236
      %v238 = vrcp.pop %v237
      %v239 = vmul.f32 %v234, %v238
      %v240 = vpack.c.bf16 %v239, %v239
      %v242 = vunpack.c.l.b16 %v203
      %v243 = vpack.c.b16 %v242, %v242
      %244 = vrot.lane.b32.xlu0 %v243, 96
      %v245 = vpop.permute.xlu0 %244
      %v247 = vsel %vm204, %v240, 0
      %vm249 = vcmask 1043456
      %v251 = vsel %vm249, %v245, 0
      %253 = vmatpush.bf16.msra.mxu0 0
      %254 = vmatpush.bf16.msra.mxu0 0
      %255 = vmatpush.bf16.msra.mxu0 0
      %256 = vmatpush.bf16.msra.mxu0 0
      %257 = vmatpush.bf16.msra.mxu0 0
      %258 = vmatpush.bf16.msra.mxu0 0
      %259 = vmatpush.bf16.msra.mxu0 0
      %260 = vmatpush.bf16.msra.mxu0 %v251
      %261 = vmatmul.bf16.gmra.mxu0 %v247
      %v262 = vpop.f32.mrf.mxu0
      %v263 = vadd.f32 0.0, %v262
      %v264 = vpop.f32.mrf.mxu0
      %265 = vdwg.mxu0
      %v267 = vunpack.c.l.b16 %v202
      %v268 = vpack.c.b16 %v267, %v267
      %269 = vrot.lane.b32.xlu0 %v268, 120
      %v270 = vpop.permute.xlu0 %269
      %271 = vrot.lane.b32.xlu0 %v243, 120
      %v272 = vpop.permute.xlu0 %271
      %v274 = vsel %vm204, %v270, 0
      %v277 = vsel %vm204, %v272, 0
      %279 = vmatpush.bf16.xpose.msra.mxu0 0
      %280 = vmatpush.bf16.xpose.msra.mxu0 0
      %281 = vmatpush.bf16.xpose.msra.mxu0 0
      %282 = vmatpush.bf16.xpose.msra.mxu0 0
      %283 = vmatpush.bf16.xpose.msra.mxu0 0
      %284 = vmatpush.bf16.xpose.msra.mxu0 0
      %285 = vmatpush.bf16.xpose.msra.mxu0 0
      %286 = vmatpush.bf16.xpose.msra.mxu0 %v277
      %287 = vmatmul.bf16.gmra.mxu0 %v274
      %v288 = vpop.f32.mrf.mxu0
      %v289 = vadd.f32 0.0, %v288
      %v290 = vpop.f32.mrf.mxu0
      %291 = vdwg.mxu0
      %v292 = vmul.f32 %v289, 0.35355338
      %v293 = vsel %vm227, %v292, -1e+09
      %v294 = vsel %vm204, %v293, -inf
      %295 = vmax.xlane.f32.xlu0 %v294
      %v296 = vpop.xlane.xlu0 %295
      %v297 = vsub.f32 %v293, %v296
      %v298 = vmul.f32 %v297, 1.442695
      %v299 = vpow.pop %v298
      %v300 = vsel %vm204, %v299, 0.0
      %301 = vadd.xlane.f32.xlu0 %v300
      %v302 = vpop.xlane.xlu0 %301
      %v303 = vrcp.pop %v302
      %v304 = vmul.f32 %v299, %v303
      %v305 = vpack.c.bf16 %v304, %v304
      %306 = vrot.lane.b32.xlu0 %v243, 88
      %v307 = vpop.permute.xlu0 %306
      %v309 = vsel %vm204, %v305, 0
      %v312 = vsel %vm249, %v307, 0
      %314 = vmatpush.bf16.msra.mxu0 0
      %315 = vmatpush.bf16.msra.mxu0 0
      %316 = vmatpush.bf16.msra.mxu0 0
      %317 = vmatpush.bf16.msra.mxu0 0
      %318 = vmatpush.bf16.msra.mxu0 0
      %319 = vmatpush.bf16.msra.mxu0 0
      %320 = vmatpush.bf16.msra.mxu0 0
      %321 = vmatpush.bf16.msra.mxu0 %v312
      %322 = vmatmul.bf16.gmra.mxu0 %v309
      %v323 = vpop.f32.mrf.mxu0
      %v324 = vadd.f32 0.0, %v323
      %v325 = vpop.f32.mrf.mxu0
      %326 = vdwg.mxu0
      %327 = vrot.lane.b32.xlu0 %v268, 112
      %v328 = vpop.permute.xlu0 %327
      %329 = vrot.lane.b32.xlu0 %v243, 112
      %v330 = vpop.permute.xlu0 %329
      %v332 = vsel %vm204, %v328, 0
      %v335 = vsel %vm204, %v330, 0
      %337 = vmatpush.bf16.xpose.msra.mxu0 0
      %338 = vmatpush.bf16.xpose.msra.mxu0 0
      %339 = vmatpush.bf16.xpose.msra.mxu0 0
      %340 = vmatpush.bf16.xpose.msra.mxu0 0
      %341 = vmatpush.bf16.xpose.msra.mxu0 0
      %342 = vmatpush.bf16.xpose.msra.mxu0 0
      %343 = vmatpush.bf16.xpose.msra.mxu0 0
      %344 = vmatpush.bf16.xpose.msra.mxu0 %v335
      %345 = vmatmul.bf16.gmra.mxu0 %v332
      %v346 = vpop.f32.mrf.mxu0
      %v347 = vadd.f32 0.0, %v346
      %v348 = vpop.f32.mrf.mxu0
      %349 = vdwg.mxu0
      %v350 = vmul.f32 %v347, 0.35355338
      %v351 = vsel %vm227, %v350, -1e+09
      %v352 = vsel %vm204, %v351, -inf
      %353 = vmax.xlane.f32.xlu0 %v352
      %v354 = vpop.xlane.xlu0 %353
      %v355 = vsub.f32 %v351, %v354
      %v356 = vmul.f32 %v355, 1.442695
      %v357 = vpow.pop %v356
      %v358 = vsel %vm204, %v357, 0.0
      %359 = vadd.xlane.f32.xlu0 %v358
      %v360 = vpop.xlane.xlu0 %359
      %v361 = vrcp.pop %v360
      %v362 = vmul.f32 %v357, %v361
      %v363 = vpack.c.bf16 %v362, %v362
      %364 = vrot.lane.b32.xlu0 %v243, 80
      %v365 = vpop.permute.xlu0 %364
      %v367 = vsel %vm204, %v363, 0
      %v370 = vsel %vm249, %v365, 0
      %372 = vmatpush.bf16.msra.mxu0 0
      %373 = vmatpush.bf16.msra.mxu0 0
      %374 = vmatpush.bf16.msra.mxu0 0
      %375 = vmatpush.bf16.msra.mxu0 0
      %376 = vmatpush.bf16.msra.mxu0 0
      %377 = vmatpush.bf16.msra.mxu0 0
      %378 = vmatpush.bf16.msra.mxu0 0
      %379 = vmatpush.bf16.msra.mxu0 %v370
      %380 = vmatmul.bf16.gmra.mxu0 %v367
      %v381 = vpop.f32.mrf.mxu0
      %v382 = vadd.f32 0.0, %v381
      %v383 = vpop.f32.mrf.mxu0
      %384 = vdwg.mxu0
      %385 = vrot.lane.b32.xlu0 %v268, 104
      %v386 = vpop.permute.xlu0 %385
      %387 = vrot.lane.b32.xlu0 %v243, 104
      %v388 = vpop.permute.xlu0 %387
      %v390 = vsel %vm204, %v386, 0
      %v393 = vsel %vm204, %v388, 0
      %395 = vmatpush.bf16.xpose.msra.mxu0 0
      %396 = vmatpush.bf16.xpose.msra.mxu0 0
      %397 = vmatpush.bf16.xpose.msra.mxu0 0
      %398 = vmatpush.bf16.xpose.msra.mxu0 0
      %399 = vmatpush.bf16.xpose.msra.mxu0 0
      %400 = vmatpush.bf16.xpose.msra.mxu0 0
      %401 = vmatpush.bf16.xpose.msra.mxu0 0
      %402 = vmatpush.bf16.xpose.msra.mxu0 %v393
      %403 = vmatmul.bf16.gmra.mxu0 %v390
      %v404 = vpop.f32.mrf.mxu0
      %v405 = vadd.f32 0.0, %v404
      %v406 = vpop.f32.mrf.mxu0
      %407 = vdwg.mxu0
      %v408 = vmul.f32 %v405, 0.35355338
      %v409 = vsel %vm227, %v408, -1e+09
      %v410 = vsel %vm204, %v409, -inf
      %411 = vmax.xlane.f32.xlu0 %v410
      %v412 = vpop.xlane.xlu0 %411
      %v413 = vsub.f32 %v409, %v412
      %v414 = vmul.f32 %v413, 1.442695
      %v415 = vpow.pop %v414
      %v416 = vsel %vm204, %v415, 0.0
      %417 = vadd.xlane.f32.xlu0 %v416
      %v418 = vpop.xlane.xlu0 %417
      %v419 = vrcp.pop %v418
      %v420 = vmul.f32 %v415, %v419
      %v421 = vpack.c.bf16 %v420, %v420
      %422 = vrot.lane.b32.xlu0 %v243, 72
      %v423 = vpop.permute.xlu0 %422
      %v425 = vsel %vm204, %v421, 0
      %v428 = vsel %vm249, %v423, 0
      %430 = vmatpush.bf16.msra.mxu0 0
      %431 = vmatpush.bf16.msra.mxu0 0
      %432 = vmatpush.bf16.msra.mxu0 0
      %433 = vmatpush.bf16.msra.mxu0 0
      %434 = vmatpush.bf16.msra.mxu0 0
      %435 = vmatpush.bf16.msra.mxu0 0
      %436 = vmatpush.bf16.msra.mxu0 0
      %437 = vmatpush.bf16.msra.mxu0 %v428
      %438 = vmatmul.bf16.gmra.mxu0 %v425
      %v439 = vpop.f32.mrf.mxu0
      %v440 = vadd.f32 0.0, %v439
      %v441 = vpop.f32.mrf.mxu0
      %442 = vdwg.mxu0
      %444 = vrot.lane.b32.xlu0 %v324, 8
      %v445 = vpop.permute.xlu0 %444
      %448 = vrot.lane.b32.xlu0 %v382, 16
      %v449 = vpop.permute.xlu0 %448
      %452 = vrot.lane.b32.xlu0 %v440, 24
      %v453 = vpop.permute.xlu0 %452
      %v455 = vsel %vm204, %v263, %v445
      %vm456 = vcmask 130048
      %v457 = vsel %vm456, %v455, %v449
      %vm458 = vcmask 195584
      %v459 = vsel %vm458, %v457, %v453
      %vm460 = vcmask 261120
      %461 = vst.msk [vmem:[%s196] sm:$0xff] %vm460, %v459
      %p462 = scmp.lt.s32.totalorder %s14, 1
      %s463 = scalar_select %p462, %s14, 1
      %s464 = smul.addr %s463, 8
      %s465 = scalar_lea.vmem %s3, %s464
      // Predicated region
      $region33: #{_lambda_.63} parent=31 // pred_check
        %p466 = pneg %p110
      $region34: #{_lambda_.63} parent=31 // pred_check_branch
        %468 = sbr.rel (%p466) target = $region36
      $region35: #{_lambda_.63} parent=31 // pred_region
        _
      $region36: #{_lambda_.63} parent=31 // pred_fallthru
        _
    $region32: #{_lambda_.63} parent=5 // pred_fallthru
      _
    %p469 = scmp.le.s32.totalorder 2, %s9
    // Predicated region
    $region37: #{_lambda_.63} parent=5 // pred_check
      %p470 = pneg %p469
    $region38: #{_lambda_.63} parent=5 // pred_check_branch
      %472 = sbr.rel (%p470) target = $region40
    $region39: #{_lambda_.63} parent=5 // pred_region
      %s473 = ssub.s32 %s9, 2
      // Predicated region
      $region41: #{_lambda_.63} parent=39 // pred_check
        %p474 = pneg %p116
      $region42: #{_lambda_.63} parent=39 // pred_check_branch
        %476 = sbr.rel (%p474) target = $region44
      $region43: #{_lambda_.63} parent=39 // pred_region
        %p477 = scmp.lt.s32.totalorder %s15, 1
        %s478 = scalar_select %p477, %s15, 1
        %s479 = smul.addr %s478, 8
        %s480 = scalar_lea.vmem %s3, %s479
      $region44: #{_lambda_.63} parent=39 // pred_fallthru
        _
    $region40: #{_lambda_.63} parent=5 // pred_fallthru
      _
  $region6: #{_lambda_.63} parent=0 // loop_footer
    %s13 = sadd.s32 1, %s9
  $region7: #{_lambda_.63} parent=0 // loop_footer_branch
    %8 = sbr.rel target = $region3
  $region8: #{_lambda_.63} parent=0 // loop_exit
    _

</llo_original>
